<compile_context>
chip_gen: v6e
topology: v6e:2x2x1
jax: 0.10.0
libtpu: 0.0.40
codegen_flags: <defaults>
</compile_context>

<pallas_src>
import functools

import jax
import jax.numpy as jnp
import numpy as np
from jax import lax
from jax.experimental import pallas as pl
from jax.experimental.pallas import tpu as pltpu

LEAKY_SLOPE = 0.01   # torch.nn.LeakyReLU default
BN_EPS = 1e-5        # torch.nn.BatchNorm2d default


def _leaky(v):
    # For 0 < slope < 1, leaky_relu(v) == max(v, slope*v): mul+max (2 VALU ops)
    # instead of cmp+mul+select.
    return jnp.maximum(v, LEAKY_SLOPE * v)


def _round_up(x, m):
    return ((x + m - 1) // m) * m


def _pick_tile_h(H, tile_h):
    """Largest divisor of H that is <= tile_h."""
    th = max(1, min(tile_h, H))
    while H % th:
        th -= 1
    return th


def _make_resblock_kernel(H, W, C, Cr, Wp, TH):
    """Kernel factory (all sizes static).

    Refs:
      x_ref  : (H, W, C)      bf16 input (batch dim squeezed by BlockSpec)
      w1_ref : (C, Cr)        bf16 1x1 weight, BN1 scale folded in
      b1_ref : (1, Cr)        f32  BN1 bias
      w2r_ref: (3, 3*Cr, C)   bf16 3x3 weight, [ky, kx*Cr+ci, co], BN2 folded
      b2_ref : (1, C)         f32  BN2 bias
      o_ref  : (H, W, C)      bf16 output
      pad_ref: (H+2, Wp, Cr)  f32 scratch; h lives at rows [1,H+1), cols [0,W)
    """
    nstrips = H // TH

    def kernel(x_ref, w1_ref, b1_ref, w2r_ref, b2_ref, o_ref, pad_ref):
        f32 = jnp.float32
        bf16 = jnp.bfloat16

        # Zero only the halo of the scratch (top/bottom rows + spare columns);
        # the interior is fully rewritten below.  Done every step -> safe under
        # megacore partitioning of the N axis.  Invariant: Wp >= W+1 so the
        # roll wrap-around always lands in these zeroed spare columns.
        pad_ref[0:1, :, :] = jnp.zeros((1, Wp, Cr), f32)
        pad_ref[H + 1:H + 2, :, :] = jnp.zeros((1, Wp, Cr), f32)
        pad_ref[1:H + 1, W:Wp, :] = jnp.zeros((H, Wp - W, Cr), f32)

        w1 = w1_ref[...]
        b1 = b1_ref[...]

        # ---- layer1: 1x1 conv (BN1 scale folded into w1) in row strips ----
        def strip1(s, carry):
            r0 = pl.multiple_of(s * TH, TH)
            xs = x_ref[pl.ds(r0, TH), :, :].reshape(TH * W, C)        # bf16
            h = jnp.dot(xs, w1, preferred_element_type=f32)           # MXU
            h = _leaky(h + b1)
            pad_ref[pl.ds(r0 + 1, TH), 0:W, :] = h.reshape(TH, W, Cr)
            return carry

        lax.fori_loop(0, nstrips, strip1, 0, unroll=True)

        b2 = b2_ref[...]

        # ---- layer2: 3x3 conv as 3 K=3*Cr matmuls + residual, row strips ----
        def strip2(s, carry):
            r0 = pl.multiple_of(s * TH, TH)
            ps = pad_ref[pl.ds(r0, TH + 2), :, :]                     # (TH+2,Wp,Cr) f32
            # W-shifted taps via XLU roll; wrap-around lands in the zeroed
            # spare columns, so boundaries are handled without masking.
            p_l = pltpu.roll(ps, 1, axis=1)         # [..,x] = ps[..,x-1] (kx=0)
            p_r = pltpu.roll(ps, Wp - 1, axis=1)    # [..,x] = ps[..,x+1] (kx=2)

            acc = None
            for ky in range(3):
                # Cast each tap to bf16 BEFORE the lane-axis concatenate: half
                # the concat/relayout bytes, and the MXU consumes bf16 anyway.
                patch = jnp.concatenate(
                    [p_l[ky:ky + TH, 0:W, :].astype(bf16),
                     ps[ky:ky + TH, 0:W, :].astype(bf16),
                     p_r[ky:ky + TH, 0:W, :].astype(bf16)],
                    axis=-1).reshape(TH * W, 3 * Cr)                  # (TH*W,3Cr)
                d = jnp.dot(patch, w2r_ref[ky],
                            preferred_element_type=f32)               # MXU
                acc = d if acc is None else acc + d                   # init-from-dot
            y = _leaky(acc + b2).reshape(TH, W, C)

            xs = x_ref[pl.ds(r0, TH), :, :].astype(f32)
            o_ref[pl.ds(r0, TH), :, :] = (y + xs).astype(o_ref.dtype)  # bf16 store
            return carry

        lax.fori_loop(0, nstrips, strip2, 0, unroll=True)

    return kernel


def _fold_bn(gamma, beta, mean, var):
    s = gamma / jnp.sqrt(var + BN_EPS)
    return s, beta - mean * s


def pack_params(w1_oihw, g1, be1, m1, v1, w2_oihw, g2, be2, m2, v2):
    """Fold BN scales into the conv weights and lay weights out for the kernel."""
    Cr, C = w1_oihw.shape[0], w1_oihw.shape[1]
    s1, b1 = _fold_bn(g1, be1, m1, v1)
    s2, b2 = _fold_bn(g2, be2, m2, v2)
    # 1x1: (Cin, Cout) with BN1 scale folded per output column.
    w1 = jnp.transpose(w1_oihw.reshape(Cr, C), (1, 0)) * s1[None, :]
    # 3x3: OIHW -> (ky, kx, ci, co), BN2 scale folded, then (ky, kx*Cr+ci, co).
    w2 = jnp.transpose(w2_oihw, (2, 3, 1, 0)) * s2[None, None, None, :]
    w2r = w2.reshape(3, 3 * Cr, C)
    return (w1.astype(jnp.bfloat16),
            b1.reshape(1, Cr).astype(jnp.float32),
            w2r.astype(jnp.bfloat16),
            b2.reshape(1, C).astype(jnp.float32))


def resblock_forward_nhwc(x_nhwc, w1, b1, w2r, b2, *, tile_h=8,
                          single_buffer_weights=True):
    """NHWC residual block: x (N, H, W, C) -> (N, H, W, C) bf16."""
    N, H, W, C = x_nhwc.shape
    Cr = w1.shape[1]
    TH = _pick_tile_h(H, tile_h)
    Wp = _round_up(W + 1, 8)    # >= W+1 spare zero columns for the W halo
    assert Wp >= W + 1, "roll wrap-around must land in zeroed spare columns"

    x_bf = x_nhwc.astype(jnp.bfloat16)   # bf16 activations: half the DMA bytes

    if single_buffer_weights:
        # Weights are grid-invariant (constant index_map) -> single buffer.
        def const_spec(shape, index_map):
            return pl.BlockSpec(shape, index_map, pipeline_mode=pl.Buffered(1))
    else:
        def const_spec(shape, index_map):
            return pl.BlockSpec(shape, index_map)

    kernel = _make_resblock_kernel(H, W, C, Cr, Wp, TH)
    return pl.pallas_call(
        kernel,
        out_shape=jax.ShapeDtypeStruct((N, H, W, C), jnp.bfloat16),
        grid_spec=pltpu.PrefetchScalarGridSpec(
            num_scalar_prefetch=0,
            grid=(N,),
            in_specs=[
                pl.BlockSpec((None, H, W, C), lambda n: (n, 0, 0, 0)),
                const_spec((C, Cr), lambda n: (0, 0)),
                const_spec((1, Cr), lambda n: (0, 0)),
                const_spec((3, 3 * Cr, C), lambda n: (0, 0, 0)),
                const_spec((1, C), lambda n: (0, 0)),
            ],
            out_specs=pl.BlockSpec((None, H, W, C), lambda n: (n, 0, 0, 0)),
            scratch_shapes=[pltpu.VMEM((H + 2, Wp, Cr), jnp.float32)],
        ),
        compiler_params=pltpu.CompilerParams(
            dimension_semantics=("parallel",),
            # 48 MiB: below v7x's 64 MiB per-TC VMEM (headroom for compiler
            # scratch/semaphores), comfortably above the default on v5e/v6e.
            vmem_limit_bytes=48 * 1024 * 1024,
        ),
    )(x_bf, w1, b1, w2r, b2)


@functools.partial(jax.jit, static_argnames=("tile_h", "single_buffer_weights"))
def resblock_forward(x_nchw, w1, b1, w2r, b2, *, tile_h=8,
                     single_buffer_weights=True):
    """NCHW boundary shim for the PyTorch-layout test.

    In a full backbone, keep activations NHWC/bf16 end-to-end (use
    resblock_forward_nhwc) instead of transposing/casting around every block.
    """
    x_nhwc = jnp.transpose(x_nchw, (0, 2, 3, 1))
    out = resblock_forward_nhwc(x_nhwc, w1, b1, w2r, b2, tile_h=tile_h,
                                single_buffer_weights=single_buffer_weights)
    return jnp.transpose(out, (0, 3, 1, 2)).astype(jnp.float32)


# ------------------------------ reference --------------------------------
def ref_forward(x, w1_oihw, g1, be1, m1, v1, w2_oihw, g2, be2, m2, v2):
    """Pure-JAX f32 NCHW reference (BN eval mode)."""
    def bn(y, g, b, m, v):
        inv = g / jnp.sqrt(v + BN_EPS)
        return y * inv[None, :, None, None] + (b - m * inv)[None, :, None, None]

    dn = ('NCHW', 'OIHW', 'NCHW')
    y = lax.conv_general_dilated(x, w1_oihw, (1, 1), 'VALID',
                                 dimension_numbers=dn)
    y = _leaky(bn(y, g1, be1, m1, v1))
    y = lax.conv_general_dilated(y, w2_oihw, (1, 1), ((1, 1), (1, 1)),
                                 dimension_numbers=dn)
    y = _leaky(bn(y, g2, be2, m2, v2))
    return y + x


if __name__ == "__main__":
    # Small but lane-dense shapes (C = 128 keeps the channel/lane dim full).
    N, C, H, W = 2, 128, 16, 16
    Cr = C // 2

    key = jax.random.PRNGKey(0)
    ks = jax.random.split(key, 11)

    x = jax.random.normal(ks[0], (N, C, H, W), jnp.float32)

    # Conv weights in PyTorch OIHW layout (deterministic synthetic init).
    w1_oihw = 0.1 * jax.random.normal(ks[1], (Cr, C, 1, 1), jnp.float32)
    w2_oihw = 0.05 * jax.random.normal(ks[2], (C, Cr, 3, 3), jnp.float32)

    # BatchNorm params (eval mode).
    g1 = 1.0 + 0.1 * jax.random.normal(ks[3], (Cr,), jnp.float32)
    be1 = 0.1 * jax.random.normal(ks[4], (Cr,), jnp.float32)
    m1 = 0.1 * jax.random.normal(ks[5], (Cr,), jnp.float32)
    v1 = 0.5 + jnp.abs(jax.random.normal(ks[6], (Cr,), jnp.float32))
    g2 = 1.0 + 0.1 * jax.random.normal(ks[7], (C,), jnp.float32)
    be2 = 0.1 * jax.random.normal(ks[8], (C,), jnp.float32)
    m2 = 0.1 * jax.random.normal(ks[9], (C,), jnp.float32)
    v2 = 0.5 + jnp.abs(jax.random.normal(ks[10], (C,), jnp.float32))

    params = pack_params(w1_oihw, g1, be1, m1, v1, w2_oihw, g2, be2, m2, v2)

    try:
        out = jax.block_until_ready(
            resblock_forward(x, *params, tile_h=8, single_buffer_weights=True))
    except Exception:
        # Fallback for jax builds without BlockSpec.pipeline_mode support:
        # identical kernel, default (double) buffering for the weight inputs.
        out = jax.block_until_ready(
            resblock_forward(x, *params, tile_h=8, single_buffer_weights=False))

    ref = jax.block_until_ready(
        ref_forward(x, w1_oihw, g1, be1, m1, v1, w2_oihw, g2, be2, m2, v2))

    # Kernel uses bf16 activations / MXU path and a bf16 output store ->
    # compare against the f32 reference with bf16-appropriate tolerances.
    np.testing.assert_allclose(np.asarray(out), np.asarray(ref),
                               rtol=5e-2, atol=1.5e-1)
    print("KERNEL_OK")
</pallas_src>

<mosaic_0001>
module attributes {stable_mosaic.version = 11 : i64} {
  func.func @kernel(%arg0: i32, %arg1: memref<1x16x16x128xbf16, #tpu.memory_space<vmem>>, %arg2: memref<128x64xbf16, #tpu.memory_space<vmem>>, %arg3: memref<1x64xf32, #tpu.memory_space<vmem>>, %arg4: memref<3x192x128xbf16, #tpu.memory_space<vmem>>, %arg5: memref<1x128xf32, #tpu.memory_space<vmem>>, %arg6: memref<1x16x16x128xbf16, #tpu.memory_space<vmem>>, %arg7: memref<18x24x64xf32, #tpu.memory_space<vmem>>) attributes {dimension_semantics = [#tpu.dimension_semantics<parallel>], iteration_bounds = array<i64: 2>, scalar_prefetch = 0 : i64, scratch_operands = 1 : i64, tpu.core_type = #tpu.core_type<tc>, window_params = [{transform_indices = @transform_0, window_bounds = array<i64: 1, 16, 16, 128>}, {pipeline_mode = #tpu.pipeline_mode<synchronous>, transform_indices = @transform_1, window_bounds = array<i64: 128, 64>}, {pipeline_mode = #tpu.pipeline_mode<synchronous>, transform_indices = @transform_2, window_bounds = array<i64: 1, 64>}, {pipeline_mode = #tpu.pipeline_mode<synchronous>, transform_indices = @transform_3, window_bounds = array<i64: 3, 192, 128>}, {pipeline_mode = #tpu.pipeline_mode<synchronous>, transform_indices = @transform_4, window_bounds = array<i64: 1, 128>}, {transform_indices = @transform_5, window_bounds = array<i64: 1, 16, 16, 128>}]} {
    %cst = arith.constant 0.000000e+00 : f32
    %0 = vector.broadcast %cst : f32 to vector<1x24x64xf32>
    %c0 = arith.constant 0 : index
    %c0_0 = arith.constant 0 : index
    %c0_1 = arith.constant 0 : index
    %1 = vector.load %arg7[%c0, %c0_0, %c0_1] : memref<18x24x64xf32, #tpu.memory_space<vmem>>, vector<1x24x64xf32>
    tpu.vector_store %arg7[%c0, %c0_0, %c0_1], %0 {strides = array<i32>} : memref<18x24x64xf32, #tpu.memory_space<vmem>>, vector<1x24x64xf32>,
    %cst_2 = arith.constant 0.000000e+00 : f32
    %2 = vector.broadcast %cst_2 : f32 to vector<1x24x64xf32>
    %c17 = arith.constant 17 : index
    %c0_3 = arith.constant 0 : index
    %c0_4 = arith.constant 0 : index
    %3 = vector.load %arg7[%c17, %c0_3, %c0_4] : memref<18x24x64xf32, #tpu.memory_space<vmem>>, vector<1x24x64xf32>
    tpu.vector_store %arg7[%c17, %c0_3, %c0_4], %2 {strides = array<i32>} : memref<18x24x64xf32, #tpu.memory_space<vmem>>, vector<1x24x64xf32>,
    %cst_5 = arith.constant 0.000000e+00 : f32
    %4 = vector.broadcast %cst_5 : f32 to vector<16x8x64xf32>
    %c1 = arith.constant 1 : index
    %c16 = arith.constant 16 : index
    %c0_6 = arith.constant 0 : index
    %5 = vector.load %arg7[%c1, %c16, %c0_6] : memref<18x24x64xf32, #tpu.memory_space<vmem>>, vector<16x8x64xf32>
    tpu.vector_store %arg7[%c1, %c16, %c0_6], %4 {strides = array<i32>} : memref<18x24x64xf32, #tpu.memory_space<vmem>>, vector<16x8x64xf32>,
    %c0_7 = arith.constant 0 : index
    %c0_8 = arith.constant 0 : index
    %6 = vector.load %arg2[%c0_7, %c0_8] : memref<128x64xbf16, #tpu.memory_space<vmem>>, vector<128x64xbf16>
    %c0_9 = arith.constant 0 : index
    %c0_10 = arith.constant 0 : index
    %7 = vector.load %arg3[%c0_9, %c0_10] : memref<1x64xf32, #tpu.memory_space<vmem>>, vector<1x64xf32>
    %c0_i32 = arith.constant 0 : i32
    %c8_i32 = arith.constant 8 : i32
    %8 = arith.muli %c0_i32, %c8_i32 : i32
    %9 = tpu.assume_multiple %8, 8 : i32
    %c0_11 = arith.constant 0 : index
    %10 = arith.index_cast %9 : i32 to index
    %c0_12 = arith.constant 0 : index
    %c0_13 = arith.constant 0 : index
    %11 = vector.load %arg1[%c0_11, %10, %c0_12, %c0_13] : memref<1x16x16x128xbf16, #tpu.memory_space<vmem>>, vector<1x8x16x128xbf16>
    %12 = vector.shape_cast %11 : vector<1x8x16x128xbf16> to vector<8x16x128xbf16>
    %13 = vector.shape_cast %12 : vector<8x16x128xbf16> to vector<128x128xbf16>
    %cst_14 = arith.constant dense<0.000000e+00> : vector<128x64xf32>
    %14 = tpu.matmul %13, %6, %cst_14 {dimension_numbers = #tpu.dot_dimension_numbers<[1], [0], [0], [1], [0, 0, 1, 1], [], []>} : vector<128x128xbf16>, vector<128x64xbf16>, vector<128x64xf32> -> vector<128x64xf32>
    %15 = vector.broadcast %7 : vector<1x64xf32> to vector<128x64xf32>
    %16 = arith.addf %14, %15 : vector<128x64xf32>
    %cst_15 = arith.constant 0.00999999977 : f32
    %17 = vector.broadcast %cst_15 : f32 to vector<128x64xf32>
    %18 = arith.mulf %17, %16 : vector<128x64xf32>
    %19 = arith.maximumf %16, %18 : vector<128x64xf32>
    %20 = vector.shape_cast %19 : vector<128x64xf32> to vector<8x16x64xf32>
    %c1_i32 = arith.constant 1 : i32
    %21 = arith.addi %9, %c1_i32 : i32
    %22 = arith.index_cast %21 : i32 to index
    %c0_16 = arith.constant 0 : index
    %c0_17 = arith.constant 0 : index
    %23 = vector.load %arg7[%22, %c0_16, %c0_17] : memref<18x24x64xf32, #tpu.memory_space<vmem>>, vector<8x16x64xf32>
    tpu.vector_store %arg7[%22, %c0_16, %c0_17], %20 {strides = array<i32>} : memref<18x24x64xf32, #tpu.memory_space<vmem>>, vector<8x16x64xf32>,
    %c1_i32_18 = arith.constant 1 : i32
    %c8_i32_19 = arith.constant 8 : i32
    %24 = arith.muli %c1_i32_18, %c8_i32_19 : i32
    %25 = tpu.assume_multiple %24, 8 : i32
    %c0_20 = arith.constant 0 : index
    %26 = arith.index_cast %25 : i32 to index
    %c0_21 = arith.constant 0 : index
    %c0_22 = arith.constant 0 : index
    %27 = vector.load %arg1[%c0_20, %26, %c0_21, %c0_22] : memref<1x16x16x128xbf16, #tpu.memory_space<vmem>>, vector<1x8x16x128xbf16>
    %28 = vector.shape_cast %27 : vector<1x8x16x128xbf16> to vector<8x16x128xbf16>
    %29 = vector.shape_cast %28 : vector<8x16x128xbf16> to vector<128x128xbf16>
    %cst_23 = arith.constant dense<0.000000e+00> : vector<128x64xf32>
    %30 = tpu.matmul %29, %6, %cst_23 {dimension_numbers = #tpu.dot_dimension_numbers<[1], [0], [0], [1], [0, 0, 1, 1], [], []>} : vector<128x128xbf16>, vector<128x64xbf16>, vector<128x64xf32> -> vector<128x64xf32>
    %31 = vector.broadcast %7 : vector<1x64xf32> to vector<128x64xf32>
    %32 = arith.addf %30, %31 : vector<128x64xf32>
    %cst_24 = arith.constant 0.00999999977 : f32
    %33 = vector.broadcast %cst_24 : f32 to vector<128x64xf32>
    %34 = arith.mulf %33, %32 : vector<128x64xf32>
    %35 = arith.maximumf %32, %34 : vector<128x64xf32>
    %36 = vector.shape_cast %35 : vector<128x64xf32> to vector<8x16x64xf32>
    %c1_i32_25 = arith.constant 1 : i32
    %37 = arith.addi %25, %c1_i32_25 : i32
    %38 = arith.index_cast %37 : i32 to index
    %c0_26 = arith.constant 0 : index
    %c0_27 = arith.constant 0 : index
    %39 = vector.load %arg7[%38, %c0_26, %c0_27] : memref<18x24x64xf32, #tpu.memory_space<vmem>>, vector<8x16x64xf32>
    tpu.vector_store %arg7[%38, %c0_26, %c0_27], %36 {strides = array<i32>} : memref<18x24x64xf32, #tpu.memory_space<vmem>>, vector<8x16x64xf32>,
    %c2_i32 = arith.constant 2 : i32
    %c0_28 = arith.constant 0 : index
    %c0_29 = arith.constant 0 : index
    %40 = vector.load %arg5[%c0_28, %c0_29] : memref<1x128xf32, #tpu.memory_space<vmem>>, vector<1x128xf32>
    %c0_i32_30 = arith.constant 0 : i32
    %c8_i32_31 = arith.constant 8 : i32
    %41 = arith.muli %c0_i32_30, %c8_i32_31 : i32
    %42 = tpu.assume_multiple %41, 8 : i32
    %43 = arith.index_cast %42 : i32 to index
    %c0_32 = arith.constant 0 : index
    %c0_33 = arith.constant 0 : index
    %44 = vector.load %arg7[%43, %c0_32, %c0_33] : memref<18x24x64xf32, #tpu.memory_space<vmem>>, vector<10x24x64xf32>
    %c1_i32_34 = arith.constant 1 : i32
    %45 = tpu.dynamic_rotate %44 by %c1_i32_34 dim 1 : vector<10x24x64xf32>, i32 -> vector<10x24x64xf32>
    %c23_i32 = arith.constant 23 : i32
    %46 = tpu.dynamic_rotate %44 by %c23_i32 dim 1 : vector<10x24x64xf32>, i32 -> vector<10x24x64xf32>
    %47 = vector.extract_strided_slice %45 {offsets = [0, 0, 0], sizes = [8, 16, 64], strides = [1, 1, 1]} : vector<10x24x64xf32> to vector<8x16x64xf32>
    %48 = arith.truncf %47 : vector<8x16x64xf32> to vector<8x16x64xbf16>
    %49 = vector.extract_strided_slice %44 {offsets = [0, 0, 0], sizes = [8, 16, 64], strides = [1, 1, 1]} : vector<10x24x64xf32> to vector<8x16x64xf32>
    %50 = arith.truncf %49 : vector<8x16x64xf32> to vector<8x16x64xbf16>
    %51 = vector.extract_strided_slice %46 {offsets = [0, 0, 0], sizes = [8, 16, 64], strides = [1, 1, 1]} : vector<10x24x64xf32> to vector<8x16x64xf32>
    %52 = arith.truncf %51 : vector<8x16x64xf32> to vector<8x16x64xbf16>
    %53 = tpu.concatenate %48, %50, %52 in 2 : vector<8x16x64xbf16>, vector<8x16x64xbf16>, vector<8x16x64xbf16> -> vector<8x16x192xbf16>
    %54 = vector.shape_cast %53 : vector<8x16x192xbf16> to vector<128x192xbf16>
    %c0_35 = arith.constant 0 : index
    %c0_36 = arith.constant 0 : index
    %c0_37 = arith.constant 0 : index
    %55 = vector.load %arg4[%c0_35, %c0_36, %c0_37] : memref<3x192x128xbf16, #tpu.memory_space<vmem>>, vector<1x192x128xbf16>
    %56 = vector.shape_cast %55 : vector<1x192x128xbf16> to vector<192x128xbf16>
    %cst_38 = arith.constant dense<0.000000e+00> : vector<128x128xf32>
    %57 = tpu.matmul %54, %56, %cst_38 {dimension_numbers = #tpu.dot_dimension_numbers<[1], [0], [0], [1], [0, 0, 1, 1], [], []>} : vector<128x192xbf16>, vector<192x128xbf16>, vector<128x128xf32> -> vector<128x128xf32>
    %58 = vector.extract_strided_slice %45 {offsets = [1, 0, 0], sizes = [8, 16, 64], strides = [1, 1, 1]} : vector<10x24x64xf32> to vector<8x16x64xf32>
    %59 = arith.truncf %58 : vector<8x16x64xf32> to vector<8x16x64xbf16>
    %60 = vector.extract_strided_slice %44 {offsets = [1, 0, 0], sizes = [8, 16, 64], strides = [1, 1, 1]} : vector<10x24x64xf32> to vector<8x16x64xf32>
    %61 = arith.truncf %60 : vector<8x16x64xf32> to vector<8x16x64xbf16>
    %62 = vector.extract_strided_slice %46 {offsets = [1, 0, 0], sizes = [8, 16, 64], strides = [1, 1, 1]} : vector<10x24x64xf32> to vector<8x16x64xf32>
    %63 = arith.truncf %62 : vector<8x16x64xf32> to vector<8x16x64xbf16>
    %64 = tpu.concatenate %59, %61, %63 in 2 : vector<8x16x64xbf16>, vector<8x16x64xbf16>, vector<8x16x64xbf16> -> vector<8x16x192xbf16>
    %65 = vector.shape_cast %64 : vector<8x16x192xbf16> to vector<128x192xbf16>
    %c1_39 = arith.constant 1 : index
    %c0_40 = arith.constant 0 : index
    %c0_41 = arith.constant 0 : index
    %66 = vector.load %arg4[%c1_39, %c0_40, %c0_41] : memref<3x192x128xbf16, #tpu.memory_space<vmem>>, vector<1x192x128xbf16>
    %67 = vector.shape_cast %66 : vector<1x192x128xbf16> to vector<192x128xbf16>
    %cst_42 = arith.constant dense<0.000000e+00> : vector<128x128xf32>
    %68 = tpu.matmul %65, %67, %cst_42 {dimension_numbers = #tpu.dot_dimension_numbers<[1], [0], [0], [1], [0, 0, 1, 1], [], []>} : vector<128x192xbf16>, vector<192x128xbf16>, vector<128x128xf32> -> vector<128x128xf32>
    %69 = arith.addf %57, %68 : vector<128x128xf32>
    %70 = vector.extract_strided_slice %45 {offsets = [2, 0, 0], sizes = [8, 16, 64], strides = [1, 1, 1]} : vector<10x24x64xf32> to vector<8x16x64xf32>
    %71 = arith.truncf %70 : vector<8x16x64xf32> to vector<8x16x64xbf16>
    %72 = vector.extract_strided_slice %44 {offsets = [2, 0, 0], sizes = [8, 16, 64], strides = [1, 1, 1]} : vector<10x24x64xf32> to vector<8x16x64xf32>
    %73 = arith.truncf %72 : vector<8x16x64xf32> to vector<8x16x64xbf16>
    %74 = vector.extract_strided_slice %46 {offsets = [2, 0, 0], sizes = [8, 16, 64], strides = [1, 1, 1]} : vector<10x24x64xf32> to vector<8x16x64xf32>
    %75 = arith.truncf %74 : vector<8x16x64xf32> to vector<8x16x64xbf16>
    %76 = tpu.concatenate %71, %73, %75 in 2 : vector<8x16x64xbf16>, vector<8x16x64xbf16>, vector<8x16x64xbf16> -> vector<8x16x192xbf16>
    %77 = vector.shape_cast %76 : vector<8x16x192xbf16> to vector<128x192xbf16>
    %c2 = arith.constant 2 : index
    %c0_43 = arith.constant 0 : index
    %c0_44 = arith.constant 0 : index
    %78 = vector.load %arg4[%c2, %c0_43, %c0_44] : memref<3x192x128xbf16, #tpu.memory_space<vmem>>, vector<1x192x128xbf16>
    %79 = vector.shape_cast %78 : vector<1x192x128xbf16> to vector<192x128xbf16>
    %cst_45 = arith.constant dense<0.000000e+00> : vector<128x128xf32>
    %80 = tpu.matmul %77, %79, %cst_45 {dimension_numbers = #tpu.dot_dimension_numbers<[1], [0], [0], [1], [0, 0, 1, 1], [], []>} : vector<128x192xbf16>, vector<192x128xbf16>, vector<128x128xf32> -> vector<128x128xf32>
    %81 = arith.addf %69, %80 : vector<128x128xf32>
    %82 = vector.broadcast %40 : vector<1x128xf32> to vector<128x128xf32>
    %83 = arith.addf %81, %82 : vector<128x128xf32>
    %cst_46 = arith.constant 0.00999999977 : f32
    %84 = vector.broadcast %cst_46 : f32 to vector<128x128xf32>
    %85 = arith.mulf %84, %83 : vector<128x128xf32>
    %86 = arith.maximumf %83, %85 : vector<128x128xf32>
    %87 = vector.shape_cast %86 : vector<128x128xf32> to vector<8x16x128xf32>
    %c0_47 = arith.constant 0 : index
    %88 = arith.index_cast %42 : i32 to index
    %c0_48 = arith.constant 0 : index
    %c0_49 = arith.constant 0 : index
    %89 = vector.load %arg1[%c0_47, %88, %c0_48, %c0_49] : memref<1x16x16x128xbf16, #tpu.memory_space<vmem>>, vector<1x8x16x128xbf16>
    %90 = vector.shape_cast %89 : vector<1x8x16x128xbf16> to vector<8x16x128xbf16>
    %91 = arith.extf %90 : vector<8x16x128xbf16> to vector<8x16x128xf32>
    %92 = arith.addf %87, %91 : vector<8x16x128xf32>
    %93 = arith.truncf %92 : vector<8x16x128xf32> to vector<8x16x128xbf16>
    %c0_50 = arith.constant 0 : index
    %94 = arith.index_cast %42 : i32 to index
    %c0_51 = arith.constant 0 : index
    %c0_52 = arith.constant 0 : index
    %95 = vector.load %arg6[%c0_50, %94, %c0_51, %c0_52] : memref<1x16x16x128xbf16, #tpu.memory_space<vmem>>, vector<1x8x16x128xbf16>
    %96 = vector.shape_cast %95 : vector<1x8x16x128xbf16> to vector<8x16x128xbf16>
    %97 = vector.shape_cast %93 : vector<8x16x128xbf16> to vector<1x8x16x128xbf16>
    tpu.vector_store %arg6[%c0_50, %94, %c0_51, %c0_52], %97 {strides = array<i32>} : memref<1x16x16x128xbf16, #tpu.memory_space<vmem>>, vector<1x8x16x128xbf16>,
    %c1_i32_53 = arith.constant 1 : i32
    %c8_i32_54 = arith.constant 8 : i32
    %98 = arith.muli %c1_i32_53, %c8_i32_54 : i32
    %99 = tpu.assume_multiple %98, 8 : i32
    %100 = arith.index_cast %99 : i32 to index
    %c0_55 = arith.constant 0 : index
    %c0_56 = arith.constant 0 : index
    %101 = vector.load %arg7[%100, %c0_55, %c0_56] : memref<18x24x64xf32, #tpu.memory_space<vmem>>, vector<10x24x64xf32>
    %c1_i32_57 = arith.constant 1 : i32
    %102 = tpu.dynamic_rotate %101 by %c1_i32_57 dim 1 : vector<10x24x64xf32>, i32 -> vector<10x24x64xf32>
    %c23_i32_58 = arith.constant 23 : i32
    %103 = tpu.dynamic_rotate %101 by %c23_i32_58 dim 1 : vector<10x24x64xf32>, i32 -> vector<10x24x64xf32>
    %104 = vector.extract_strided_slice %102 {offsets = [0, 0, 0], sizes = [8, 16, 64], strides = [1, 1, 1]} : vector<10x24x64xf32> to vector<8x16x64xf32>
    %105 = arith.truncf %104 : vector<8x16x64xf32> to vector<8x16x64xbf16>
    %106 = vector.extract_strided_slice %101 {offsets = [0, 0, 0], sizes = [8, 16, 64], strides = [1, 1, 1]} : vector<10x24x64xf32> to vector<8x16x64xf32>
    %107 = arith.truncf %106 : vector<8x16x64xf32> to vector<8x16x64xbf16>
    %108 = vector.extract_strided_slice %103 {offsets = [0, 0, 0], sizes = [8, 16, 64], strides = [1, 1, 1]} : vector<10x24x64xf32> to vector<8x16x64xf32>
    %109 = arith.truncf %108 : vector<8x16x64xf32> to vector<8x16x64xbf16>
    %110 = tpu.concatenate %105, %107, %109 in 2 : vector<8x16x64xbf16>, vector<8x16x64xbf16>, vector<8x16x64xbf16> -> vector<8x16x192xbf16>
    %111 = vector.shape_cast %110 : vector<8x16x192xbf16> to vector<128x192xbf16>
    %c0_59 = arith.constant 0 : index
    %c0_60 = arith.constant 0 : index
    %c0_61 = arith.constant 0 : index
    %112 = vector.load %arg4[%c0_59, %c0_60, %c0_61] : memref<3x192x128xbf16, #tpu.memory_space<vmem>>, vector<1x192x128xbf16>
    %113 = vector.shape_cast %112 : vector<1x192x128xbf16> to vector<192x128xbf16>
    %cst_62 = arith.constant dense<0.000000e+00> : vector<128x128xf32>
    %114 = tpu.matmul %111, %113, %cst_62 {dimension_numbers = #tpu.dot_dimension_numbers<[1], [0], [0], [1], [0, 0, 1, 1], [], []>} : vector<128x192xbf16>, vector<192x128xbf16>, vector<128x128xf32> -> vector<128x128xf32>
    %115 = vector.extract_strided_slice %102 {offsets = [1, 0, 0], sizes = [8, 16, 64], strides = [1, 1, 1]} : vector<10x24x64xf32> to vector<8x16x64xf32>
    %116 = arith.truncf %115 : vector<8x16x64xf32> to vector<8x16x64xbf16>
    %117 = vector.extract_strided_slice %101 {offsets = [1, 0, 0], sizes = [8, 16, 64], strides = [1, 1, 1]} : vector<10x24x64xf32> to vector<8x16x64xf32>
    %118 = arith.truncf %117 : vector<8x16x64xf32> to vector<8x16x64xbf16>
    %119 = vector.extract_strided_slice %103 {offsets = [1, 0, 0], sizes = [8, 16, 64], strides = [1, 1, 1]} : vector<10x24x64xf32> to vector<8x16x64xf32>
    %120 = arith.truncf %119 : vector<8x16x64xf32> to vector<8x16x64xbf16>
    %121 = tpu.concatenate %116, %118, %120 in 2 : vector<8x16x64xbf16>, vector<8x16x64xbf16>, vector<8x16x64xbf16> -> vector<8x16x192xbf16>
    %122 = vector.shape_cast %121 : vector<8x16x192xbf16> to vector<128x192xbf16>
    %c1_63 = arith.constant 1 : index
    %c0_64 = arith.constant 0 : index
    %c0_65 = arith.constant 0 : index
    %123 = vector.load %arg4[%c1_63, %c0_64, %c0_65] : memref<3x192x128xbf16, #tpu.memory_space<vmem>>, vector<1x192x128xbf16>
    %124 = vector.shape_cast %123 : vector<1x192x128xbf16> to vector<192x128xbf16>
    %cst_66 = arith.constant dense<0.000000e+00> : vector<128x128xf32>
    %125 = tpu.matmul %122, %124, %cst_66 {dimension_numbers = #tpu.dot_dimension_numbers<[1], [0], [0], [1], [0, 0, 1, 1], [], []>} : vector<128x192xbf16>, vector<192x128xbf16>, vector<128x128xf32> -> vector<128x128xf32>
    %126 = arith.addf %114, %125 : vector<128x128xf32>
    %127 = vector.extract_strided_slice %102 {offsets = [2, 0, 0], sizes = [8, 16, 64], strides = [1, 1, 1]} : vector<10x24x64xf32> to vector<8x16x64xf32>
    %128 = arith.truncf %127 : vector<8x16x64xf32> to vector<8x16x64xbf16>
    %129 = vector.extract_strided_slice %101 {offsets = [2, 0, 0], sizes = [8, 16, 64], strides = [1, 1, 1]} : vector<10x24x64xf32> to vector<8x16x64xf32>
    %130 = arith.truncf %129 : vector<8x16x64xf32> to vector<8x16x64xbf16>
    %131 = vector.extract_strided_slice %103 {offsets = [2, 0, 0], sizes = [8, 16, 64], strides = [1, 1, 1]} : vector<10x24x64xf32> to vector<8x16x64xf32>
    %132 = arith.truncf %131 : vector<8x16x64xf32> to vector<8x16x64xbf16>
    %133 = tpu.concatenate %128, %130, %132 in 2 : vector<8x16x64xbf16>, vector<8x16x64xbf16>, vector<8x16x64xbf16> -> vector<8x16x192xbf16>
    %134 = vector.shape_cast %133 : vector<8x16x192xbf16> to vector<128x192xbf16>
    %c2_67 = arith.constant 2 : index
    %c0_68 = arith.constant 0 : index
    %c0_69 = arith.constant 0 : index
    %135 = vector.load %arg4[%c2_67, %c0_68, %c0_69] : memref<3x192x128xbf16, #tpu.memory_space<vmem>>, vector<1x192x128xbf16>
    %136 = vector.shape_cast %135 : vector<1x192x128xbf16> to vector<192x128xbf16>
    %cst_70 = arith.constant dense<0.000000e+00> : vector<128x128xf32>
    %137 = tpu.matmul %134, %136, %cst_70 {dimension_numbers = #tpu.dot_dimension_numbers<[1], [0], [0], [1], [0, 0, 1, 1], [], []>} : vector<128x192xbf16>, vector<192x128xbf16>, vector<128x128xf32> -> vector<128x128xf32>
    %138 = arith.addf %126, %137 : vector<128x128xf32>
    %139 = vector.broadcast %40 : vector<1x128xf32> to vector<128x128xf32>
    %140 = arith.addf %138, %139 : vector<128x128xf32>
    %cst_71 = arith.constant 0.00999999977 : f32
    %141 = vector.broadcast %cst_71 : f32 to vector<128x128xf32>
    %142 = arith.mulf %141, %140 : vector<128x128xf32>
    %143 = arith.maximumf %140, %142 : vector<128x128xf32>
    %144 = vector.shape_cast %143 : vector<128x128xf32> to vector<8x16x128xf32>
    %c0_72 = arith.constant 0 : index
    %145 = arith.index_cast %99 : i32 to index
    %c0_73 = arith.constant 0 : index
    %c0_74 = arith.constant 0 : index
    %146 = vector.load %arg1[%c0_72, %145, %c0_73, %c0_74] : memref<1x16x16x128xbf16, #tpu.memory_space<vmem>>, vector<1x8x16x128xbf16>
    %147 = vector.shape_cast %146 : vector<1x8x16x128xbf16> to vector<8x16x128xbf16>
    %148 = arith.extf %147 : vector<8x16x128xbf16> to vector<8x16x128xf32>
    %149 = arith.addf %144, %148 : vector<8x16x128xf32>
    %150 = arith.truncf %149 : vector<8x16x128xf32> to vector<8x16x128xbf16>
    %c0_75 = arith.constant 0 : index
    %151 = arith.index_cast %99 : i32 to index
    %c0_76 = arith.constant 0 : index
    %c0_77 = arith.constant 0 : index
    %152 = vector.load %arg6[%c0_75, %151, %c0_76, %c0_77] : memref<1x16x16x128xbf16, #tpu.memory_space<vmem>>, vector<1x8x16x128xbf16>
    %153 = vector.shape_cast %152 : vector<1x8x16x128xbf16> to vector<8x16x128xbf16>
    %154 = vector.shape_cast %150 : vector<8x16x128xbf16> to vector<1x8x16x128xbf16>
    tpu.vector_store %arg6[%c0_75, %151, %c0_76, %c0_77], %154 {strides = array<i32>} : memref<1x16x16x128xbf16, #tpu.memory_space<vmem>>, vector<1x8x16x128xbf16>,
    %c2_i32_78 = arith.constant 2 : i32
    return
  }
  func.func @transform_0(%arg0: i32) -> (i32, i32, i32, i32) {
    %c0_i32 = arith.constant 0 : i32
    %c0_i32_0 = arith.constant 0 : i32
    %c0_i32_1 = arith.constant 0 : i32
    %c0_i32_2 = arith.constant 0 : i32
    return %arg0, %c0_i32, %c0_i32_0, %c0_i32_1 : i32, i32, i32, i32
  }
  func.func @transform_1(%arg0: i32) -> (i32, i32) {
    %c0_i32 = arith.constant 0 : i32
    %c0_i32_0 = arith.constant 0 : i32
    %c0_i32_1 = arith.constant 0 : i32
    return %c0_i32, %c0_i32_0 : i32, i32
  }
  func.func @transform_2(%arg0: i32) -> (i32, i32) {
    %c0_i32 = arith.constant 0 : i32
    %c0_i32_0 = arith.constant 0 : i32
    %c0_i32_1 = arith.constant 0 : i32
    return %c0_i32, %c0_i32_0 : i32, i32
  }
  func.func @transform_3(%arg0: i32) -> (i32, i32, i32) {
    %c0_i32 = arith.constant 0 : i32
    %c0_i32_0 = arith.constant 0 : i32
    %c0_i32_1 = arith.constant 0 : i32
    %c0_i32_2 = arith.constant 0 : i32
    return %c0_i32, %c0_i32_0, %c0_i32_1 : i32, i32, i32
  }
  func.func @transform_4(%arg0: i32) -> (i32, i32) {
    %c0_i32 = arith.constant 0 : i32
    %c0_i32_0 = arith.constant 0 : i32
    %c0_i32_1 = arith.constant 0 : i32
    return %c0_i32, %c0_i32_0 : i32, i32
  }
  func.func @transform_5(%arg0: i32) -> (i32, i32, i32, i32) {
    %c0_i32 = arith.constant 0 : i32
    %c0_i32_0 = arith.constant 0 : i32
    %c0_i32_1 = arith.constant 0 : i32
    %c0_i32_2 = arith.constant 0 : i32
    return %arg0, %c0_i32, %c0_i32_0, %c0_i32_1 : i32, i32, i32, i32
  }
}

module attributes {stable_mosaic.version = 11 : i64} {
  func.func @kernel(%arg0: i32, %arg1: memref<1x16x16x128xbf16, #tpu.memory_space<vmem>>, %arg2: memref<128x64xbf16, #tpu.memory_space<vmem>>, %arg3: memref<1x64xf32, #tpu.memory_space<vmem>>, %arg4: memref<3x192x128xbf16, #tpu.memory_space<vmem>>, %arg5: memref<1x128xf32, #tpu.memory_space<vmem>>, %arg6: memref<1x16x16x128xbf16, #tpu.memory_space<vmem>>, %arg7: memref<18x24x64xf32, #tpu.memory_space<vmem>>) attributes {dimension_semantics = [#tpu.dimension_semantics<parallel>], iteration_bounds = array<i64: 2>, scalar_prefetch = 0 : i64, scratch_operands = 1 : i64, tpu.core_type = #tpu.core_type<tc>, window_params = [{transform_indices = @transform_0, window_bounds = array<i64: 1, 16, 16, 128>}, {pipeline_mode = #tpu.pipeline_mode<synchronous>, transform_indices = @transform_1, window_bounds = array<i64: 128, 64>}, {pipeline_mode = #tpu.pipeline_mode<synchronous>, transform_indices = @transform_2, window_bounds = array<i64: 1, 64>}, {pipeline_mode = #tpu.pipeline_mode<synchronous>, transform_indices = @transform_3, window_bounds = array<i64: 3, 192, 128>}, {pipeline_mode = #tpu.pipeline_mode<synchronous>, transform_indices = @transform_4, window_bounds = array<i64: 1, 128>}, {transform_indices = @transform_5, window_bounds = array<i64: 1, 16, 16, 128>}]} {
    %cst = arith.constant 0.000000e+00 : f32
    %0 = vector.broadcast %cst : f32 to vector<1x24x64xf32>
    %c0 = arith.constant 0 : index
    %c0_0 = arith.constant 0 : index
    %c0_1 = arith.constant 0 : index
    %1 = vector.load %arg7[%c0, %c0_0, %c0_1] : memref<18x24x64xf32, #tpu.memory_space<vmem>>, vector<1x24x64xf32>
    tpu.vector_store %arg7[%c0, %c0_0, %c0_1], %0 {strides = array<i32>} : memref<18x24x64xf32, #tpu.memory_space<vmem>>, vector<1x24x64xf32>,
    %cst_2 = arith.constant 0.000000e+00 : f32
    %2 = vector.broadcast %cst_2 : f32 to vector<1x24x64xf32>
    %c17 = arith.constant 17 : index
    %c0_3 = arith.constant 0 : index
    %c0_4 = arith.constant 0 : index
    %3 = vector.load %arg7[%c17, %c0_3, %c0_4] : memref<18x24x64xf32, #tpu.memory_space<vmem>>, vector<1x24x64xf32>
    tpu.vector_store %arg7[%c17, %c0_3, %c0_4], %2 {strides = array<i32>} : memref<18x24x64xf32, #tpu.memory_space<vmem>>, vector<1x24x64xf32>,
    %cst_5 = arith.constant 0.000000e+00 : f32
    %4 = vector.broadcast %cst_5 : f32 to vector<16x8x64xf32>
    %c1 = arith.constant 1 : index
    %c16 = arith.constant 16 : index
    %c0_6 = arith.constant 0 : index
    %5 = vector.load %arg7[%c1, %c16, %c0_6] : memref<18x24x64xf32, #tpu.memory_space<vmem>>, vector<16x8x64xf32>
    tpu.vector_store %arg7[%c1, %c16, %c0_6], %4 {strides = array<i32>} : memref<18x24x64xf32, #tpu.memory_space<vmem>>, vector<16x8x64xf32>,
    %c0_7 = arith.constant 0 : index
    %c0_8 = arith.constant 0 : index
    %6 = vector.load %arg2[%c0_7, %c0_8] : memref<128x64xbf16, #tpu.memory_space<vmem>>, vector<128x64xbf16>
    %c0_9 = arith.constant 0 : index
    %c0_10 = arith.constant 0 : index
    %7 = vector.load %arg3[%c0_9, %c0_10] : memref<1x64xf32, #tpu.memory_space<vmem>>, vector<1x64xf32>
    %c0_i32 = arith.constant 0 : i32
    %c8_i32 = arith.constant 8 : i32
    %8 = arith.muli %c0_i32, %c8_i32 : i32
    %9 = tpu.assume_multiple %8, 8 : i32
    %c0_11 = arith.constant 0 : index
    %10 = arith.index_cast %9 : i32 to index
    %c0_12 = arith.constant 0 : index
    %c0_13 = arith.constant 0 : index
    %11 = vector.load %arg1[%c0_11, %10, %c0_12, %c0_13] : memref<1x16x16x128xbf16, #tpu.memory_space<vmem>>, vector<1x8x16x128xbf16>
    %12 = vector.shape_cast %11 : vector<1x8x16x128xbf16> to vector<8x16x128xbf16>
    %13 = vector.shape_cast %12 : vector<8x16x128xbf16> to vector<128x128xbf16>
    %cst_14 = arith.constant dense<0.000000e+00> : vector<128x64xf32>
    %14 = tpu.matmul %13, %6, %cst_14 {dimension_numbers = #tpu.dot_dimension_numbers<[1], [0], [0], [1], [0, 0, 1, 1], [], []>} : vector<128x128xbf16>, vector<128x64xbf16>, vector<128x64xf32> -> vector<128x64xf32>
    %15 = vector.broadcast %7 : vector<1x64xf32> to vector<128x64xf32>
    %16 = arith.addf %14, %15 : vector<128x64xf32>
    %cst_15 = arith.constant 0.00999999977 : f32
    %17 = vector.broadcast %cst_15 : f32 to vector<128x64xf32>
    %18 = arith.mulf %17, %16 : vector<128x64xf32>
    %19 = arith.maximumf %16, %18 : vector<128x64xf32>
    %20 = vector.shape_cast %19 : vector<128x64xf32> to vector<8x16x64xf32>
    %c1_i32 = arith.constant 1 : i32
    %21 = arith.addi %9, %c1_i32 : i32
    %22 = arith.index_cast %21 : i32 to index
    %c0_16 = arith.constant 0 : index
    %c0_17 = arith.constant 0 : index
    %23 = vector.load %arg7[%22, %c0_16, %c0_17] : memref<18x24x64xf32, #tpu.memory_space<vmem>>, vector<8x16x64xf32>
    tpu.vector_store %arg7[%22, %c0_16, %c0_17], %20 {strides = array<i32>} : memref<18x24x64xf32, #tpu.memory_space<vmem>>, vector<8x16x64xf32>,
    %c1_i32_18 = arith.constant 1 : i32
    %c8_i32_19 = arith.constant 8 : i32
    %24 = arith.muli %c1_i32_18, %c8_i32_19 : i32
    %25 = tpu.assume_multiple %24, 8 : i32
    %c0_20 = arith.constant 0 : index
    %26 = arith.index_cast %25 : i32 to index
    %c0_21 = arith.constant 0 : index
    %c0_22 = arith.constant 0 : index
    %27 = vector.load %arg1[%c0_20, %26, %c0_21, %c0_22] : memref<1x16x16x128xbf16, #tpu.memory_space<vmem>>, vector<1x8x16x128xbf16>
    %28 = vector.shape_cast %27 : vector<1x8x16x128xbf16> to vector<8x16x128xbf16>
    %29 = vector.shape_cast %28 : vector<8x16x128xbf16> to vector<128x128xbf16>
    %cst_23 = arith.constant dense<0.000000e+00> : vector<128x64xf32>
    %30 = tpu.matmul %29, %6, %cst_23 {dimension_numbers = #tpu.dot_dimension_numbers<[1], [0], [0], [1], [0, 0, 1, 1], [], []>} : vector<128x128xbf16>, vector<128x64xbf16>, vector<128x64xf32> -> vector<128x64xf32>
    %31 = vector.broadcast %7 : vector<1x64xf32> to vector<128x64xf32>
    %32 = arith.addf %30, %31 : vector<128x64xf32>
    %cst_24 = arith.constant 0.00999999977 : f32
    %33 = vector.broadcast %cst_24 : f32 to vector<128x64xf32>
    %34 = arith.mulf %33, %32 : vector<128x64xf32>
    %35 = arith.maximumf %32, %34 : vector<128x64xf32>
    %36 = vector.shape_cast %35 : vector<128x64xf32> to vector<8x16x64xf32>
    %c1_i32_25 = arith.constant 1 : i32
    %37 = arith.addi %25, %c1_i32_25 : i32
    %38 = arith.index_cast %37 : i32 to index
    %c0_26 = arith.constant 0 : index
    %c0_27 = arith.constant 0 : index
    %39 = vector.load %arg7[%38, %c0_26, %c0_27] : memref<18x24x64xf32, #tpu.memory_space<vmem>>, vector<8x16x64xf32>
    tpu.vector_store %arg7[%38, %c0_26, %c0_27], %36 {strides = array<i32>} : memref<18x24x64xf32, #tpu.memory_space<vmem>>, vector<8x16x64xf32>,
    %c2_i32 = arith.constant 2 : i32
    %c0_28 = arith.constant 0 : index
    %c0_29 = arith.constant 0 : index
    %40 = vector.load %arg5[%c0_28, %c0_29] : memref<1x128xf32, #tpu.memory_space<vmem>>, vector<1x128xf32>
    %c0_i32_30 = arith.constant 0 : i32
    %c8_i32_31 = arith.constant 8 : i32
    %41 = arith.muli %c0_i32_30, %c8_i32_31 : i32
    %42 = tpu.assume_multiple %41, 8 : i32
    %43 = arith.index_cast %42 : i32 to index
    %c0_32 = arith.constant 0 : index
    %c0_33 = arith.constant 0 : index
    %44 = vector.load %arg7[%43, %c0_32, %c0_33] : memref<18x24x64xf32, #tpu.memory_space<vmem>>, vector<10x24x64xf32>
    %c1_i32_34 = arith.constant 1 : i32
    %45 = tpu.dynamic_rotate %44 by %c1_i32_34 dim 1 : vector<10x24x64xf32>, i32 -> vector<10x24x64xf32>
    %c23_i32 = arith.constant 23 : i32
    %46 = tpu.dynamic_rotate %44 by %c23_i32 dim 1 : vector<10x24x64xf32>, i32 -> vector<10x24x64xf32>
    %47 = vector.extract_strided_slice %45 {offsets = [0, 0, 0], sizes = [8, 16, 64], strides = [1, 1, 1]} : vector<10x24x64xf32> to vector<8x16x64xf32>
    %48 = arith.truncf %47 : vector<8x16x64xf32> to vector<8x16x64xbf16>
    %49 = vector.extract_strided_slice %44 {offsets = [0, 0, 0], sizes = [8, 16, 64], strides = [1, 1, 1]} : vector<10x24x64xf32> to vector<8x16x64xf32>
    %50 = arith.truncf %49 : vector<8x16x64xf32> to vector<8x16x64xbf16>
    %51 = vector.extract_strided_slice %46 {offsets = [0, 0, 0], sizes = [8, 16, 64], strides = [1, 1, 1]} : vector<10x24x64xf32> to vector<8x16x64xf32>
    %52 = arith.truncf %51 : vector<8x16x64xf32> to vector<8x16x64xbf16>
    %53 = tpu.concatenate %48, %50, %52 in 2 : vector<8x16x64xbf16>, vector<8x16x64xbf16>, vector<8x16x64xbf16> -> vector<8x16x192xbf16>
    %54 = vector.shape_cast %53 : vector<8x16x192xbf16> to vector<128x192xbf16>
    %c0_35 = arith.constant 0 : index
    %c0_36 = arith.constant 0 : index
    %c0_37 = arith.constant 0 : index
    %55 = vector.load %arg4[%c0_35, %c0_36, %c0_37] : memref<3x192x128xbf16, #tpu.memory_space<vmem>>, vector<1x192x128xbf16>
    %56 = vector.shape_cast %55 : vector<1x192x128xbf16> to vector<192x128xbf16>
    %cst_38 = arith.constant dense<0.000000e+00> : vector<128x128xf32>
    %57 = tpu.matmul %54, %56, %cst_38 {dimension_numbers = #tpu.dot_dimension_numbers<[1], [0], [0], [1], [0, 0, 1, 1], [], []>} : vector<128x192xbf16>, vector<192x128xbf16>, vector<128x128xf32> -> vector<128x128xf32>
    %58 = vector.extract_strided_slice %45 {offsets = [1, 0, 0], sizes = [8, 16, 64], strides = [1, 1, 1]} : vector<10x24x64xf32> to vector<8x16x64xf32>
    %59 = arith.truncf %58 : vector<8x16x64xf32> to vector<8x16x64xbf16>
    %60 = vector.extract_strided_slice %44 {offsets = [1, 0, 0], sizes = [8, 16, 64], strides = [1, 1, 1]} : vector<10x24x64xf32> to vector<8x16x64xf32>
    %61 = arith.truncf %60 : vector<8x16x64xf32> to vector<8x16x64xbf16>
    %62 = vector.extract_strided_slice %46 {offsets = [1, 0, 0], sizes = [8, 16, 64], strides = [1, 1, 1]} : vector<10x24x64xf32> to vector<8x16x64xf32>
    %63 = arith.truncf %62 : vector<8x16x64xf32> to vector<8x16x64xbf16>
    %64 = tpu.concatenate %59, %61, %63 in 2 : vector<8x16x64xbf16>, vector<8x16x64xbf16>, vector<8x16x64xbf16> -> vector<8x16x192xbf16>
    %65 = vector.shape_cast %64 : vector<8x16x192xbf16> to vector<128x192xbf16>
    %c1_39 = arith.constant 1 : index
    %c0_40 = arith.constant 0 : index
    %c0_41 = arith.constant 0 : index
    %66 = vector.load %arg4[%c1_39, %c0_40, %c0_41] : memref<3x192x128xbf16, #tpu.memory_space<vmem>>, vector<1x192x128xbf16>
    %67 = vector.shape_cast %66 : vector<1x192x128xbf16> to vector<192x128xbf16>
    %cst_42 = arith.constant dense<0.000000e+00> : vector<128x128xf32>
    %68 = tpu.matmul %65, %67, %cst_42 {dimension_numbers = #tpu.dot_dimension_numbers<[1], [0], [0], [1], [0, 0, 1, 1], [], []>} : vector<128x192xbf16>, vector<192x128xbf16>, vector<128x128xf32> -> vector<128x128xf32>
    %69 = arith.addf %57, %68 : vector<128x128xf32>
    %70 = vector.extract_strided_slice %45 {offsets = [2, 0, 0], sizes = [8, 16, 64], strides = [1, 1, 1]} : vector<10x24x64xf32> to vector<8x16x64xf32>
    %71 = arith.truncf %70 : vector<8x16x64xf32> to vector<8x16x64xbf16>
    %72 = vector.extract_strided_slice %44 {offsets = [2, 0, 0], sizes = [8, 16, 64], strides = [1, 1, 1]} : vector<10x24x64xf32> to vector<8x16x64xf32>
    %73 = arith.truncf %72 : vector<8x16x64xf32> to vector<8x16x64xbf16>
    %74 = vector.extract_strided_slice %46 {offsets = [2, 0, 0], sizes = [8, 16, 64], strides = [1, 1, 1]} : vector<10x24x64xf32> to vector<8x16x64xf32>
    %75 = arith.truncf %74 : vector<8x16x64xf32> to vector<8x16x64xbf16>
    %76 = tpu.concatenate %71, %73, %75 in 2 : vector<8x16x64xbf16>, vector<8x16x64xbf16>, vector<8x16x64xbf16> -> vector<8x16x192xbf16>
    %77 = vector.shape_cast %76 : vector<8x16x192xbf16> to vector<128x192xbf16>
    %c2 = arith.constant 2 : index
    %c0_43 = arith.constant 0 : index
    %c0_44 = arith.constant 0 : index
    %78 = vector.load %arg4[%c2, %c0_43, %c0_44] : memref<3x192x128xbf16, #tpu.memory_space<vmem>>, vector<1x192x128xbf16>
    %79 = vector.shape_cast %78 : vector<1x192x128xbf16> to vector<192x128xbf16>
    %cst_45 = arith.constant dense<0.000000e+00> : vector<128x128xf32>
    %80 = tpu.matmul %77, %79, %cst_45 {dimension_numbers = #tpu.dot_dimension_numbers<[1], [0], [0], [1], [0, 0, 1, 1], [], []>} : vector<128x192xbf16>, vector<192x128xbf16>, vector<128x128xf32> -> vector<128x128xf32>
    %81 = arith.addf %69, %80 : vector<128x128xf32>
    %82 = vector.broadcast %40 : vector<1x128xf32> to vector<128x128xf32>
    %83 = arith.addf %81, %82 : vector<128x128xf32>
    %cst_46 = arith.constant 0.00999999977 : f32
    %84 = vector.broadcast %cst_46 : f32 to vector<128x128xf32>
    %85 = arith.mulf %84, %83 : vector<128x128xf32>
    %86 = arith.maximumf %83, %85 : vector<128x128xf32>
    %87 = vector.shape_cast %86 : vector<128x128xf32> to vector<8x16x128xf32>
    %c0_47 = arith.constant 0 : index
    %88 = arith.index_cast %42 : i32 to index
    %c0_48 = arith.constant 0 : index
    %c0_49 = arith.constant 0 : index
    %89 = vector.load %arg1[%c0_47, %88, %c0_48, %c0_49] : memref<1x16x16x128xbf16, #tpu.memory_space<vmem>>, vector<1x8x16x128xbf16>
    %90 = vector.shape_cast %89 : vector<1x8x16x128xbf16> to vector<8x16x128xbf16>
    %91 = arith.extf %90 : vector<8x16x128xbf16> to vector<8x16x128xf32>
    %92 = arith.addf %87, %91 : vector<8x16x128xf32>
    %93 = arith.truncf %92 : vector<8x16x128xf32> to vector<8x16x128xbf16>
    %c0_50 = arith.constant 0 : index
    %94 = arith.index_cast %42 : i32 to index
    %c0_51 = arith.constant 0 : index
    %c0_52 = arith.constant 0 : index
    %95 = vector.load %arg6[%c0_50, %94, %c0_51, %c0_52] : memref<1x16x16x128xbf16, #tpu.memory_space<vmem>>, vector<1x8x16x128xbf16>
    %96 = vector.shape_cast %95 : vector<1x8x16x128xbf16> to vector<8x16x128xbf16>
    %97 = vector.shape_cast %93 : vector<8x16x128xbf16> to vector<1x8x16x128xbf16>
    tpu.vector_store %arg6[%c0_50, %94, %c0_51, %c0_52], %97 {strides = array<i32>} : memref<1x16x16x128xbf16, #tpu.memory_space<vmem>>, vector<1x8x16x128xbf16>,
    %c1_i32_53 = arith.constant 1 : i32
    %c8_i32_54 = arith.constant 8 : i32
    %98 = arith.muli %c1_i32_53, %c8_i32_54 : i32
    %99 = tpu.assume_multiple %98, 8 : i32
    %100 = arith.index_cast %99 : i32 to index
    %c0_55 = arith.constant 0 : index
    %c0_56 = arith.constant 0 : index
    %101 = vector.load %arg7[%100, %c0_55, %c0_56] : memref<18x24x64xf32, #tpu.memory_space<vmem>>, vector<10x24x64xf32>
    %c1_i32_57 = arith.constant 1 : i32
    %102 = tpu.dynamic_rotate %101 by %c1_i32_57 dim 1 : vector<10x24x64xf32>, i32 -> vector<10x24x64xf32>
    %c23_i32_58 = arith.constant 23 : i32
    %103 = tpu.dynamic_rotate %101 by %c23_i32_58 dim 1 : vector<10x24x64xf32>, i32 -> vector<10x24x64xf32>
    %104 = vector.extract_strided_slice %102 {offsets = [0, 0, 0], sizes = [8, 16, 64], strides = [1, 1, 1]} : vector<10x24x64xf32> to vector<8x16x64xf32>
    %105 = arith.truncf %104 : vector<8x16x64xf32> to vector<8x16x64xbf16>
    %106 = vector.extract_strided_slice %101 {offsets = [0, 0, 0], sizes = [8, 16, 64], strides = [1, 1, 1]} : vector<10x24x64xf32> to vector<8x16x64xf32>
    %107 = arith.truncf %106 : vector<8x16x64xf32> to vector<8x16x64xbf16>
    %108 = vector.extract_strided_slice %103 {offsets = [0, 0, 0], sizes = [8, 16, 64], strides = [1, 1, 1]} : vector<10x24x64xf32> to vector<8x16x64xf32>
    %109 = arith.truncf %108 : vector<8x16x64xf32> to vector<8x16x64xbf16>
    %110 = tpu.concatenate %105, %107, %109 in 2 : vector<8x16x64xbf16>, vector<8x16x64xbf16>, vector<8x16x64xbf16> -> vector<8x16x192xbf16>
    %111 = vector.shape_cast %110 : vector<8x16x192xbf16> to vector<128x192xbf16>
    %c0_59 = arith.constant 0 : index
    %c0_60 = arith.constant 0 : index
    %c0_61 = arith.constant 0 : index
    %112 = vector.load %arg4[%c0_59, %c0_60, %c0_61] : memref<3x192x128xbf16, #tpu.memory_space<vmem>>, vector<1x192x128xbf16>
    %113 = vector.shape_cast %112 : vector<1x192x128xbf16> to vector<192x128xbf16>
    %cst_62 = arith.constant dense<0.000000e+00> : vector<128x128xf32>
    %114 = tpu.matmul %111, %113, %cst_62 {dimension_numbers = #tpu.dot_dimension_numbers<[1], [0], [0], [1], [0, 0, 1, 1], [], []>} : vector<128x192xbf16>, vector<192x128xbf16>, vector<128x128xf32> -> vector<128x128xf32>
    %115 = vector.extract_strided_slice %102 {offsets = [1, 0, 0], sizes = [8, 16, 64], strides = [1, 1, 1]} : vector<10x24x64xf32> to vector<8x16x64xf32>
    %116 = arith.truncf %115 : vector<8x16x64xf32> to vector<8x16x64xbf16>
    %117 = vector.extract_strided_slice %101 {offsets = [1, 0, 0], sizes = [8, 16, 64], strides = [1, 1, 1]} : vector<10x24x64xf32> to vector<8x16x64xf32>
    %118 = arith.truncf %117 : vector<8x16x64xf32> to vector<8x16x64xbf16>
    %119 = vector.extract_strided_slice %103 {offsets = [1, 0, 0], sizes = [8, 16, 64], strides = [1, 1, 1]} : vector<10x24x64xf32> to vector<8x16x64xf32>
    %120 = arith.truncf %119 : vector<8x16x64xf32> to vector<8x16x64xbf16>
    %121 = tpu.concatenate %116, %118, %120 in 2 : vector<8x16x64xbf16>, vector<8x16x64xbf16>, vector<8x16x64xbf16> -> vector<8x16x192xbf16>
    %122 = vector.shape_cast %121 : vector<8x16x192xbf16> to vector<128x192xbf16>
    %c1_63 = arith.constant 1 : index
    %c0_64 = arith.constant 0 : index
    %c0_65 = arith.constant 0 : index
    %123 = vector.load %arg4[%c1_63, %c0_64, %c0_65] : memref<3x192x128xbf16, #tpu.memory_space<vmem>>, vector<1x192x128xbf16>
    %124 = vector.shape_cast %123 : vector<1x192x128xbf16> to vector<192x128xbf16>
    %cst_66 = arith.constant dense<0.000000e+00> : vector<128x128xf32>
    %125 = tpu.matmul %122, %124, %cst_66 {dimension_numbers = #tpu.dot_dimension_numbers<[1], [0], [0], [1], [0, 0, 1, 1], [], []>} : vector<128x192xbf16>, vector<192x128xbf16>, vector<128x128xf32> -> vector<128x128xf32>
    %126 = arith.addf %114, %125 : vector<128x128xf32>
    %127 = vector.extract_strided_slice %102 {offsets = [2, 0, 0], sizes = [8, 16, 64], strides = [1, 1, 1]} : vector<10x24x64xf32> to vector<8x16x64xf32>
    %128 = arith.truncf %127 : vector<8x16x64xf32> to vector<8x16x64xbf16>
    %129 = vector.extract_strided_slice %101 {offsets = [2, 0, 0], sizes = [8, 16, 64], strides = [1, 1, 1]} : vector<10x24x64xf32> to vector<8x16x64xf32>
    %130 = arith.truncf %129 : vector<8x16x64xf32> to vector<8x16x64xbf16>
    %131 = vector.extract_strided_slice %103 {offsets = [2, 0, 0], sizes = [8, 16, 64], strides = [1, 1, 1]} : vector<10x24x64xf32> to vector<8x16x64xf32>
    %132 = arith.truncf %131 : vector<8x16x64xf32> to vector<8x16x64xbf16>
    %133 = tpu.concatenate %128, %130, %132 in 2 : vector<8x16x64xbf16>, vector<8x16x64xbf16>, vector<8x16x64xbf16> -> vector<8x16x192xbf16>
    %134 = vector.shape_cast %133 : vector<8x16x192xbf16> to vector<128x192xbf16>
    %c2_67 = arith.constant 2 : index
    %c0_68 = arith.constant 0 : index
    %c0_69 = arith.constant 0 : index
    %135 = vector.load %arg4[%c2_67, %c0_68, %c0_69] : memref<3x192x128xbf16, #tpu.memory_space<vmem>>, vector<1x192x128xbf16>
    %136 = vector.shape_cast %135 : vector<1x192x128xbf16> to vector<192x128xbf16>
    %cst_70 = arith.constant dense<0.000000e+00> : vector<128x128xf32>
    %137 = tpu.matmul %134, %136, %cst_70 {dimension_numbers = #tpu.dot_dimension_numbers<[1], [0], [0], [1], [0, 0, 1, 1], [], []>} : vector<128x192xbf16>, vector<192x128xbf16>, vector<128x128xf32> -> vector<128x128xf32>
    %138 = arith.addf %126, %137 : vector<128x128xf32>
    %139 = vector.broadcast %40 : vector<1x128xf32> to vector<128x128xf32>
    %140 = arith.addf %138, %139 : vector<128x128xf32>
    %cst_71 = arith.constant 0.00999999977 : f32
    %141 = vector.broadcast %cst_71 : f32 to vector<128x128xf32>
    %142 = arith.mulf %141, %140 : vector<128x128xf32>
    %143 = arith.maximumf %140, %142 : vector<128x128xf32>
    %144 = vector.shape_cast %143 : vector<128x128xf32> to vector<8x16x128xf32>
    %c0_72 = arith.constant 0 : index
    %145 = arith.index_cast %99 : i32 to index
    %c0_73 = arith.constant 0 : index
    %c0_74 = arith.constant 0 : index
    %146 = vector.load %arg1[%c0_72, %145, %c0_73, %c0_74] : memref<1x16x16x128xbf16, #tpu.memory_space<vmem>>, vector<1x8x16x128xbf16>
    %147 = vector.shape_cast %146 : vector<1x8x16x128xbf16> to vector<8x16x128xbf16>
    %148 = arith.extf %147 : vector<8x16x128xbf16> to vector<8x16x128xf32>
    %149 = arith.addf %144, %148 : vector<8x16x128xf32>
    %150 = arith.truncf %149 : vector<8x16x128xf32> to vector<8x16x128xbf16>
    %c0_75 = arith.constant 0 : index
    %151 = arith.index_cast %99 : i32 to index
    %c0_76 = arith.constant 0 : index
    %c0_77 = arith.constant 0 : index
    %152 = vector.load %arg6[%c0_75, %151, %c0_76, %c0_77] : memref<1x16x16x128xbf16, #tpu.memory_space<vmem>>, vector<1x8x16x128xbf16>
    %153 = vector.shape_cast %152 : vector<1x8x16x128xbf16> to vector<8x16x128xbf16>
    %154 = vector.shape_cast %150 : vector<8x16x128xbf16> to vector<1x8x16x128xbf16>
    tpu.vector_store %arg6[%c0_75, %151, %c0_76, %c0_77], %154 {strides = array<i32>} : memref<1x16x16x128xbf16, #tpu.memory_space<vmem>>, vector<1x8x16x128xbf16>,
    %c2_i32_78 = arith.constant 2 : i32
    return
  }
  func.func @transform_0(%arg0: i32) -> (i32, i32, i32, i32) {
    %c0_i32 = arith.constant 0 : i32
    %c0_i32_0 = arith.constant 0 : i32
    %c0_i32_1 = arith.constant 0 : i32
    %c0_i32_2 = arith.constant 0 : i32
    return %arg0, %c0_i32, %c0_i32_0, %c0_i32_1 : i32, i32, i32, i32
  }
  func.func @transform_1(%arg0: i32) -> (i32, i32) {
    %c0_i32 = arith.constant 0 : i32
    %c0_i32_0 = arith.constant 0 : i32
    %c0_i32_1 = arith.constant 0 : i32
    return %c0_i32, %c0_i32_0 : i32, i32
  }
  func.func @transform_2(%arg0: i32) -> (i32, i32) {
    %c0_i32 = arith.constant 0 : i32
    %c0_i32_0 = arith.constant 0 : i32
    %c0_i32_1 = arith.constant 0 : i32
    return %c0_i32, %c0_i32_0 : i32, i32
  }
  func.func @transform_3(%arg0: i32) -> (i32, i32, i32) {
    %c0_i32 = arith.constant 0 : i32
    %c0_i32_0 = arith.constant 0 : i32
    %c0_i32_1 = arith.constant 0 : i32
    %c0_i32_2 = arith.constant 0 : i32
    return %c0_i32, %c0_i32_0, %c0_i32_1 : i32, i32, i32
  }
  func.func @transform_4(%arg0: i32) -> (i32, i32) {
    %c0_i32 = arith.constant 0 : i32
    %c0_i32_0 = arith.constant 0 : i32
    %c0_i32_1 = arith.constant 0 : i32
    return %c0_i32, %c0_i32_0 : i32, i32
  }
  func.func @transform_5(%arg0: i32) -> (i32, i32, i32, i32) {
    %c0_i32 = arith.constant 0 : i32
    %c0_i32_0 = arith.constant 0 : i32
    %c0_i32_1 = arith.constant 0 : i32
    %c0_i32_2 = arith.constant 0 : i32
    return %arg0, %c0_i32, %c0_i32_0, %c0_i32_1 : i32, i32, i32, i32
  }
}

</mosaic_0001>

<llo_original>
// kernel: resblock_forward.1
$region0: #{resblock_forward.1}
  #allocation0 [shape = 'u32[]', space=smem, size = 0x4, offset = 0x4, fixed_abs, tag = 'smem constant byte address 0x4 - core index']
  #allocation1 [shape = 'u32[144,128]{1,0:T(1,128)}', space=vmem, size = 0x12000, scoped, tag = 'internal scratch']
  #allocation2 [shape = 'f32[18,24,64]{2,1,0:T(8,128)}', space=vmem, size = 0x36000, scoped, tag = 'scratch operand']
  %s0 = inlined_call_operand.vmem [shape: bf16[2,16,16,128], index: 0, kind: input, shape index: {}]
  %s1 = inlined_call_operand.vmem [shape: bf16[128,64], index: 1, kind: input, shape index: {}]
  %s2 = inlined_call_operand.vmem [shape: f32[1,64], index: 2, kind: input, shape index: {}]
  %s3 = inlined_call_operand.vmem [shape: bf16[3,192,128], index: 3, kind: input, shape index: {}]
  %s4 = inlined_call_operand.vmem [shape: f32[1,128], index: 4, kind: input, shape index: {}]
  %s5 = inlined_call_operand.vmem [shape: bf16[2,16,16,128], index: 5, kind: output, shape index: {}]
  %s6 = sld [smem:[#allocation0]]
  $region53: #{resblock_forward.1} parent=0
    _
  %s8 = ssub.s32 1, %s6
  %s9 = scalar_select 0, %s8, %s6
  loop: start=0, step=1, limit=4
  $region2: #{resblock_forward.1} parent=0 // loop_pre_header
    _
  $region3: #{resblock_forward.1} parent=0 // loop_header
    %s11 = sphi 0, %s15
    %p12 = scmp.ge.s32.totalorder %s11, 4
    %s21 = sphi 0, %s23
    %s24 = sphi 0, %s21
    %s25 = sphi 0, %s24
    %s41 = sphi 0, %s25
    %s45 = sphi 0, %s45
    %s47 = sphi 0, %s45
    %s48 = sphi 0, %s47
    %s62 = sphi 0, %s48
    %s66 = sphi 0, %s66
    %s68 = sphi 0, %s66
    %s69 = sphi 0, %s68
    %s83 = sphi 0, %s69
    %s87 = sphi 0, %s87
    %s89 = sphi 0, %s87
    %s90 = sphi 0, %s89
    %s104 = sphi 0, %s90
    %s108 = sphi 0, %s108
    %s110 = sphi 0, %s108
    %s111 = sphi 0, %s110
    %s125 = sphi 0, %s111
    %s131 = sphi 0, %s133
    %s134 = sphi 0, %s131
    %s135 = sphi 0, %s134
    %s151 = sphi 0, %s135
  $region4: #{resblock_forward.1} parent=0 // loop_header_branch
    %14 = sbr.rel (%p12) target = $region8
  $region5: #{resblock_forward.1} parent=0 // loop_body
    %s16 = ssub.s32 %s11, 1
    %s17 = ssub.s32 %s11, 2
    %s18 = sadd.s32 %s11, 1
    %s19 = ssub.s32 %s11, %s18
    %p20 = scmp.eq.s32.totalorder %s19, 0
    %s22 = sadd.s32 %s21, 1
    %s23 = scalar_select %p20, %s21, %s22
    %p26 = pneg %p20
    %p27 = scmp.eq.s32.totalorder %s11, 1
    %p28 = por %p26, %p27
    %p29 = scmp.ne.s32.totalorder %s21, %s24
    %p30 = scmp.eq.s32.totalorder %s11, 0
    %p31 = por %p29, %p30
    %p32 = scmp.ne.s32.totalorder %s21, %s24
    %p33 = scmp.eq.s32.totalorder %s16, 1
    %p34 = por %p32, %p33
    %p35 = scmp.ne.s32.totalorder %s24, %s25
    %p36 = scmp.eq.s32.totalorder %s16, 0
    %p37 = por %p35, %p36
    %p38 = scmp.ne.s32.totalorder %s24, %s25
    %p39 = scmp.eq.s32.totalorder %s17, 1
    %p40 = por %p38, %p39
    %p42 = scmp.ne.s32.totalorder %s25, %s41
    %p43 = scmp.eq.s32.totalorder %s17, 0
    %p44 = por %p42, %p43
    %s46 = sadd.s32 %s45, 1
    %p49 = scmp.eq.s32.totalorder %s11, 1
    %p50 = scmp.ne.s32.totalorder %s45, %s47
    %p51 = scmp.eq.s32.totalorder %s11, 0
    %p52 = por %p50, %p51
    %p53 = scmp.ne.s32.totalorder %s45, %s47
    %p54 = scmp.eq.s32.totalorder %s16, 1
    %p55 = por %p53, %p54
    %p56 = scmp.ne.s32.totalorder %s47, %s48
    %p57 = scmp.eq.s32.totalorder %s16, 0
    %p58 = por %p56, %p57
    %p59 = scmp.ne.s32.totalorder %s47, %s48
    %p60 = scmp.eq.s32.totalorder %s17, 1
    %p61 = por %p59, %p60
    %p63 = scmp.ne.s32.totalorder %s48, %s62
    %p64 = scmp.eq.s32.totalorder %s17, 0
    %p65 = por %p63, %p64
    %s67 = sadd.s32 %s66, 1
    %p70 = scmp.eq.s32.totalorder %s11, 1
    %p71 = scmp.ne.s32.totalorder %s66, %s68
    %p72 = scmp.eq.s32.totalorder %s11, 0
    %p73 = por %p71, %p72
    %p74 = scmp.ne.s32.totalorder %s66, %s68
    %p75 = scmp.eq.s32.totalorder %s16, 1
    %p76 = por %p74, %p75
    %p77 = scmp.ne.s32.totalorder %s68, %s69
    %p78 = scmp.eq.s32.totalorder %s16, 0
    %p79 = por %p77, %p78
    %p80 = scmp.ne.s32.totalorder %s68, %s69
    %p81 = scmp.eq.s32.totalorder %s17, 1
    %p82 = por %p80, %p81
    %p84 = scmp.ne.s32.totalorder %s69, %s83
    %p85 = scmp.eq.s32.totalorder %s17, 0
    %p86 = por %p84, %p85
    %s88 = sadd.s32 %s87, 1
    %p91 = scmp.eq.s32.totalorder %s11, 1
    %p92 = scmp.ne.s32.totalorder %s87, %s89
    %p93 = scmp.eq.s32.totalorder %s11, 0
    %p94 = por %p92, %p93
    %p95 = scmp.ne.s32.totalorder %s87, %s89
    %p96 = scmp.eq.s32.totalorder %s16, 1
    %p97 = por %p95, %p96
    %p98 = scmp.ne.s32.totalorder %s89, %s90
    %p99 = scmp.eq.s32.totalorder %s16, 0
    %p100 = por %p98, %p99
    %p101 = scmp.ne.s32.totalorder %s89, %s90
    %p102 = scmp.eq.s32.totalorder %s17, 1
    %p103 = por %p101, %p102
    %p105 = scmp.ne.s32.totalorder %s90, %s104
    %p106 = scmp.eq.s32.totalorder %s17, 0
    %p107 = por %p105, %p106
    %s109 = sadd.s32 %s108, 1
    %p112 = scmp.eq.s32.totalorder %s11, 1
    %p113 = scmp.ne.s32.totalorder %s108, %s110
    %p114 = scmp.eq.s32.totalorder %s11, 0
    %p115 = por %p113, %p114
    %p116 = scmp.ne.s32.totalorder %s108, %s110
    %p117 = scmp.eq.s32.totalorder %s16, 1
    %p118 = por %p116, %p117
    %p119 = scmp.ne.s32.totalorder %s110, %s111
    %p120 = scmp.eq.s32.totalorder %s16, 0
    %p121 = por %p119, %p120
    %p122 = scmp.ne.s32.totalorder %s110, %s111
    %p123 = scmp.eq.s32.totalorder %s17, 1
    %p124 = por %p122, %p123
    %p126 = scmp.ne.s32.totalorder %s111, %s125
    %p127 = scmp.eq.s32.totalorder %s17, 0
    %p128 = por %p126, %p127
    %s129 = ssub.s32 %s11, %s18
    %p130 = scmp.eq.s32.totalorder %s129, 0
    %s132 = sadd.s32 %s131, 1
    %s133 = scalar_select %p130, %s131, %s132
    %p136 = pneg %p130
    %p137 = scmp.eq.s32.totalorder %s11, 1
    %p138 = por %p136, %p137
    %p139 = scmp.ne.s32.totalorder %s131, %s134
    %p140 = scmp.eq.s32.totalorder %s11, 0
    %p141 = por %p139, %p140
    %p142 = scmp.ne.s32.totalorder %s131, %s134
    %p143 = scmp.eq.s32.totalorder %s16, 1
    %p144 = por %p142, %p143
    %p145 = scmp.ne.s32.totalorder %s134, %s135
    %p146 = scmp.eq.s32.totalorder %s16, 0
    %p147 = por %p145, %p146
    %p148 = scmp.ne.s32.totalorder %s134, %s135
    %p149 = scmp.eq.s32.totalorder %s17, 1
    %p150 = por %p148, %p149
    %p152 = scmp.ne.s32.totalorder %s135, %s151
    %p153 = scmp.eq.s32.totalorder %s17, 0
    %p154 = por %p152, %p153
    %p155 = scmp.le.s32.totalorder 1, %s11
    %p156 = scmp.lt.s32.totalorder %s11, 3
    %p157 = pnand %p155, %p156
    %p158 = pneg %p157
    // Predicated region
    $region9: #{resblock_forward.1} parent=5 // pred_check
      _
    $region10: #{resblock_forward.1} parent=5 // pred_check_branch
      %160 = sbr.rel (%p157) target = $region12
    $region11: #{resblock_forward.1} parent=5 // pred_region
      %s161 = ssub.s32 %s11, 1
      // Predicated region
      $region13: #{resblock_forward.1} parent=11 // pred_check
        %p162 = pneg %p58
      $region14: #{resblock_forward.1} parent=11 // pred_check_branch
        %164 = sbr.rel (%p162) target = $region16
      $region15: #{resblock_forward.1} parent=11 // pred_region
        _
      $region16: #{resblock_forward.1} parent=11 // pred_fallthru
        _
      // Predicated region
      $region17: #{resblock_forward.1} parent=11 // pred_check
        %p165 = pneg %p79
      $region18: #{resblock_forward.1} parent=11 // pred_check_branch
        %167 = sbr.rel (%p165) target = $region20
      $region19: #{resblock_forward.1} parent=11 // pred_region
        _
      $region20: #{resblock_forward.1} parent=11 // pred_fallthru
        _
      // Predicated region
      $region21: #{resblock_forward.1} parent=11 // pred_check
        %p168 = pneg %p100
      $region22: #{resblock_forward.1} parent=11 // pred_check_branch
        %170 = sbr.rel (%p168) target = $region24
      $region23: #{resblock_forward.1} parent=11 // pred_region
        _
      $region24: #{resblock_forward.1} parent=11 // pred_fallthru
        _
      // Predicated region
      $region25: #{resblock_forward.1} parent=11 // pred_check
        %p171 = pneg %p121
      $region26: #{resblock_forward.1} parent=11 // pred_check_branch
        %173 = sbr.rel (%p171) target = $region28
      $region27: #{resblock_forward.1} parent=11 // pred_region
        _
      $region28: #{resblock_forward.1} parent=11 // pred_fallthru
        _
    $region12: #{resblock_forward.1} parent=5 // pred_fallthru
      _
    %p174 = scmp.lt.s32.totalorder %s11, 2
    // Predicated region
    $region29: #{resblock_forward.1} parent=5 // pred_check
      %p175 = pneg %p174
    $region30: #{resblock_forward.1} parent=5 // pred_check_branch
      %177 = sbr.rel (%p175) target = $region32
    $region31: #{resblock_forward.1} parent=5 // pred_region
      // Predicated region
      $region33: #{resblock_forward.1} parent=31 // pred_check
        %p178 = pneg %p31
      $region34: #{resblock_forward.1} parent=31 // pred_check_branch
        %180 = sbr.rel (%p178) target = $region36
      $region35: #{resblock_forward.1} parent=31 // pred_region
        %p181 = scmp.lt.s32.totalorder %s11, 1
        %s182 = scalar_select %p181, %s11, 1
        %s183 = smul.addr %s182, 32
        %s184 = smul.addr %s183, 4
        %s185 = scalar_lea.vmem %s0, %s184
      $region36: #{resblock_forward.1} parent=31 // pred_fallthru
        _
    $region32: #{resblock_forward.1} parent=5 // pred_fallthru
      _
    %p186 = scmp.le.s32.totalorder 1, %s11
    %p187 = scmp.lt.s32.totalorder %s11, 3
    %p188 = pnand %p186, %p187
    %p189 = pneg %p188
    // Predicated region
    $region37: #{resblock_forward.1} parent=5 // pred_check
      _
    $region38: #{resblock_forward.1} parent=5 // pred_check_branch
      %191 = sbr.rel (%p188) target = $region40
    $region39: #{resblock_forward.1} parent=5 // pred_region
      %s192 = ssub.s32 %s11, 1
      %p193 = scmp.lt.s32.totalorder %s16, 1
      %s194 = scalar_select %p193, %s16, 1
      %s195 = smul.addr %s194, 32
      %s196 = smul.addr %s195, 4
      %s197 = scalar_lea.vmem %s0, %s196
      %p198 = pneg %p37
      %p199 = pneg %p34
      %p200 = pneg %p58
      %p201 = pneg %p55
      %p202 = pneg %p79
      %p203 = pneg %p76
      %p204 = pneg %p100
      %p205 = pneg %p97
      %p206 = pneg %p121
      %p207 = pneg %p118
      %p208 = pneg %p147
      %p209 = pneg %p144
      %p210 = scmp.lt.s32.totalorder %s16, 1
      %s211 = scalar_select %p210, %s16, 1
      %s212 = smul.addr %s211, 32
      %s213 = smul.addr %s212, 4
      %s214 = scalar_lea.vmem %s5, %s213
      %p215 = scmp.lt.s32.totalorder %s16, 1
      %s216 = scalar_select %p215, %s16, 1
      %s217 = smul.addr %s216, 32
      %s218 = smul.addr %s217, 4
      %s219 = scalar_lea.vmem %s0, %s218
      %p220 = scmp.lt.s32.totalorder %s16, 1
      %s221 = scalar_select %p220, %s16, 1
      %s222 = smul.addr %s221, 32
      %s223 = smul.addr %s222, 4
      %s224 = scalar_lea.vmem %s5, %s223
      %vm226 = vcmask 523264
      %227 = vst.msk [vmem:[#allocation2] sm:$0xff] %vm226, 0.0
      %228 = vst.msk [vmem:[#allocation2 + $0x8] sm:$0xff] %vm226, 0.0
      %229 = vst.msk [vmem:[#allocation2 + $0x10] sm:$0xff] %vm226, 0.0
      %s230 = scalar_lea.vmem [#allocation2], 408
      %231 = vst.msk [vmem:[%s230] sm:$0xff] %vm226, 0.0
      %232 = vst.msk [vmem:[%s230 + $0x8] sm:$0xff] %vm226, 0.0
      %233 = vst.msk [vmem:[%s230 + $0x10] sm:$0xff] %vm226, 0.0
      %s234 = scalar_lea.vmem [#allocation2], 24
      %235 = vst.msk [vmem:[%s234 + $0x10] sm:$0xff] %vm226, 0.0
      %236 = vst.msk [vmem:[%s234 + $0x28] sm:$0xff] %vm226, 0.0
      %237 = vst.msk [vmem:[%s234 + $0x40] sm:$0xff] %vm226, 0.0
      %238 = vst.msk [vmem:[%s234 + $0x58] sm:$0xff] %vm226, 0.0
      %239 = vst.msk [vmem:[%s234 + $0x70] sm:$0xff] %vm226, 0.0
      %240 = vst.msk [vmem:[%s234 + $0x88] sm:$0xff] %vm226, 0.0
      %241 = vst.msk [vmem:[%s234 + $0xa0] sm:$0xff] %vm226, 0.0
      %242 = vst.msk [vmem:[%s234 + $0xb8] sm:$0xff] %vm226, 0.0
      %243 = vst.msk [vmem:[%s234 + $0xd0] sm:$0xff] %vm226, 0.0
      %244 = vst.msk [vmem:[%s234 + $0xe8] sm:$0xff] %vm226, 0.0
      %245 = vst.msk [vmem:[%s234 + $0x100] sm:$0xff] %vm226, 0.0
      %246 = vst.msk [vmem:[%s234 + $0x118] sm:$0xff] %vm226, 0.0
      %247 = vst.msk [vmem:[%s234 + $0x130] sm:$0xff] %vm226, 0.0
      %248 = vst.msk [vmem:[%s234 + $0x148] sm:$0xff] %vm226, 0.0
      %249 = vst.msk [vmem:[%s234 + $0x160] sm:$0xff] %vm226, 0.0
      %250 = vst.msk [vmem:[%s234 + $0x178] sm:$0xff] %vm226, 0.0
      %v251 = vld [vmem:[%s1] sm:$0xf]
      %v252 = vld [vmem:[%s1 + $0x4] sm:$0xf]
      %v253 = vld [vmem:[%s1 + $0x8] sm:$0xf]
      %v254 = vld [vmem:[%s1 + $0xc] sm:$0xf]
      %v255 = vld [vmem:[%s1 + $0x10] sm:$0xf]
      %v256 = vld [vmem:[%s1 + $0x14] sm:$0xf]
      %v257 = vld [vmem:[%s1 + $0x18] sm:$0xf]
      %v258 = vld [vmem:[%s1 + $0x1c] sm:$0xf]
      %v259 = vld [vmem:[%s1 + $0x20] sm:$0xf]
      %v260 = vld [vmem:[%s1 + $0x24] sm:$0xf]
      %v261 = vld [vmem:[%s1 + $0x28] sm:$0xf]
      %v262 = vld [vmem:[%s1 + $0x2c] sm:$0xf]
      %v263 = vld [vmem:[%s1 + $0x30] sm:$0xf]
      %v264 = vld [vmem:[%s1 + $0x34] sm:$0xf]
      %v265 = vld [vmem:[%s1 + $0x38] sm:$0xf]
      %v266 = vld [vmem:[%s1 + $0x3c] sm:$0xf]
      %v267 = vld [vmem:[%s2] sm:$0x1]
      %s268 = smul.u32 0, 2
      %s269 = smul.addr %s268, 4
      %s270 = scalar_lea.vmem %s219, %s269
      %v271 = vld [vmem:[%s270] sm:$0xf]
      %v272 = vld [vmem:[%s270 + $0x4] sm:$0xf]
      %v273 = vld [vmem:[%s270 + $0x8] sm:$0xf]
      %v274 = vld [vmem:[%s270 + $0xc] sm:$0xf]
      %v275 = vld [vmem:[%s270 + $0x10] sm:$0xf]
      %v276 = vld [vmem:[%s270 + $0x14] sm:$0xf]
      %v277 = vld [vmem:[%s270 + $0x18] sm:$0xf]
      %v278 = vld [vmem:[%s270 + $0x1c] sm:$0xf]
      %v279 = vld [vmem:[%s270 + $0x20] sm:$0xf]
      %v280 = vld [vmem:[%s270 + $0x24] sm:$0xf]
      %v281 = vld [vmem:[%s270 + $0x28] sm:$0xf]
      %v282 = vld [vmem:[%s270 + $0x2c] sm:$0xf]
      %v283 = vld [vmem:[%s270 + $0x30] sm:$0xf]
      %v284 = vld [vmem:[%s270 + $0x34] sm:$0xf]
      %v285 = vld [vmem:[%s270 + $0x38] sm:$0xf]
      %v286 = vld [vmem:[%s270 + $0x3c] sm:$0xf]
      %v288 = vlaneseq
      %v289 = vshrl.u32 %v288, 7
      %v290 = vsub.s32 0, %v289
      %v291 = vrot.slane %v267, %v290
      %v309 = vunpack.c.l.b16 %v271
      %v310 = vunpack.c.l.b16 %v272
      %v311 = vunpack.c.l.b16 %v273
      %v312 = vunpack.c.l.b16 %v274
      %v313 = vunpack.c.l.b16 %v275
      %v314 = vunpack.c.l.b16 %v276
      %v315 = vunpack.c.l.b16 %v277
      %v316 = vunpack.c.l.b16 %v278
      %v317 = vunpack.c.l.b16 %v279
      %v318 = vunpack.c.l.b16 %v280
      %v319 = vunpack.c.l.b16 %v281
      %v320 = vunpack.c.l.b16 %v282
      %v321 = vunpack.c.l.b16 %v283
      %v322 = vunpack.c.l.b16 %v284
      %v323 = vunpack.c.l.b16 %v285
      %v324 = vunpack.c.l.b16 %v286
      %v325 = vpack.c.b16 %v310, %v309
      %v326 = vpack.c.b16 %v312, %v311
      %v327 = vpack.c.b16 %v314, %v313
      %v328 = vpack.c.b16 %v316, %v315
      %v329 = vpack.c.b16 %v318, %v317
      %v330 = vpack.c.b16 %v320, %v319
      %v331 = vpack.c.b16 %v322, %v321
      %v332 = vpack.c.b16 %v324, %v323
      %v357 = vunpack.c.l.b16 %v251
      %v358 = vunpack.c.l.b16 %v252
      %v359 = vunpack.c.l.b16 %v253
      %v360 = vunpack.c.l.b16 %v254
      %v361 = vunpack.c.l.b16 %v255
      %v362 = vunpack.c.l.b16 %v256
      %v363 = vunpack.c.l.b16 %v257
      %v364 = vunpack.c.l.b16 %v258
      %v365 = vunpack.c.l.b16 %v259
      %v366 = vunpack.c.l.b16 %v260
      %v367 = vunpack.c.l.b16 %v261
      %v368 = vunpack.c.l.b16 %v262
      %v369 = vunpack.c.l.b16 %v263
      %v370 = vunpack.c.l.b16 %v264
      %v371 = vunpack.c.l.b16 %v265
      %v372 = vunpack.c.l.b16 %v266
      %v373 = vpack.c.b16 %v358, %v357
      %v374 = vpack.c.b16 %v360, %v359
      %v375 = vpack.c.b16 %v362, %v361
      %v376 = vpack.c.b16 %v364, %v363
      %v377 = vpack.c.b16 %v366, %v365
      %v378 = vpack.c.b16 %v368, %v367
      %v379 = vpack.c.b16 %v370, %v369
      %v380 = vpack.c.b16 %v372, %v371
      %389 = vmatprep.subr.bf16.mxu0 0
      %390 = vmatpush1.bf16.msra.mxu0 %v380
      %391 = vmatprep.subr.bf16.mxu0 0
      %392 = vmatpush1.bf16.msra.mxu0 %v379
      %393 = vmatprep.subr.bf16.mxu0 0
      %394 = vmatpush1.bf16.msra.mxu0 %v378
      %395 = vmatprep.subr.bf16.mxu0 0
      %396 = vmatpush1.bf16.msra.mxu0 %v377
      %397 = vmatprep.subr.bf16.mxu0 0
      %398 = vmatpush1.bf16.msra.mxu0 %v376
      %399 = vmatprep.subr.bf16.mxu0 0
      %400 = vmatpush1.bf16.msra.mxu0 %v375
      %401 = vmatprep.subr.bf16.mxu0 0
      %402 = vmatpush1.bf16.msra.mxu0 %v374
      %403 = vmatprep.subr.bf16.mxu0 0
      %404 = vmatpush1.bf16.msra.mxu0 %v373
      %405 = vmatprep.subr.bf16.mxu0 0
      %406 = vmatpush2.bf16.msra.mxu0 0
      %407 = vmatprep.subr.bf16.mxu0 0
      %408 = vmatpush2.bf16.msra.mxu0 0
      %409 = vmatprep.subr.bf16.mxu0 0
      %410 = vmatpush2.bf16.msra.mxu0 0
      %411 = vmatprep.subr.bf16.mxu0 0
      %412 = vmatpush2.bf16.msra.mxu0 0
      %413 = vmatprep.subr.bf16.mxu0 0
      %414 = vmatpush2.bf16.msra.mxu0 0
      %415 = vmatprep.subr.bf16.mxu0 0
      %416 = vmatpush2.bf16.msra.mxu0 0
      %417 = vmatprep.subr.bf16.mxu0 0
      %418 = vmatpush2.bf16.msra.mxu0 0
      %419 = vmatprep.subr.bf16.mxu0 0
      %420 = vmatpush2.bf16.msra.mxu0 0
      %421 = vmatprep.mubr.bf16.mxu0 0
      %422 = vmatmul.mubr.bf16.gmra.mxu0 %v325
      %v423 = vpop.f32.mrf.mxu0
      %v424 = vadd.f32 %v291, %v423
      %v425 = vpop.f32.mrf.mxu0
      %v426 = vpop.f32.mrf.mxu0
      %v427 = vadd.f32 %v291, %v426
      %v428 = vpop.f32.mrf.mxu0
      %429 = vmatprep.mubr.bf16.mxu0 0
      %430 = vmatmul.mubr.bf16.gmra.mxu0 %v326
      %v431 = vpop.f32.mrf.mxu0
      %v432 = vadd.f32 %v291, %v431
      %v433 = vpop.f32.mrf.mxu0
      %v434 = vpop.f32.mrf.mxu0
      %v435 = vadd.f32 %v291, %v434
      %v436 = vpop.f32.mrf.mxu0
      %437 = vmatprep.mubr.bf16.mxu0 0
      %438 = vmatmul.mubr.bf16.gmra.mxu0 %v327
      %v439 = vpop.f32.mrf.mxu0
      %v440 = vadd.f32 %v291, %v439
      %v441 = vpop.f32.mrf.mxu0
      %v442 = vpop.f32.mrf.mxu0
      %v443 = vadd.f32 %v291, %v442
      %v444 = vpop.f32.mrf.mxu0
      %445 = vmatprep.mubr.bf16.mxu0 0
      %446 = vmatmul.mubr.bf16.gmra.mxu0 %v328
      %v447 = vpop.f32.mrf.mxu0
      %v448 = vadd.f32 %v291, %v447
      %v449 = vpop.f32.mrf.mxu0
      %v450 = vpop.f32.mrf.mxu0
      %v451 = vadd.f32 %v291, %v450
      %v452 = vpop.f32.mrf.mxu0
      %453 = vmatprep.mubr.bf16.mxu0 0
      %454 = vmatmul.mubr.bf16.gmra.mxu0 %v329
      %v455 = vpop.f32.mrf.mxu0
      %v456 = vadd.f32 %v291, %v455
      %v457 = vpop.f32.mrf.mxu0
      %v458 = vpop.f32.mrf.mxu0
      %v459 = vadd.f32 %v291, %v458
      %v460 = vpop.f32.mrf.mxu0
      %461 = vmatprep.mubr.bf16.mxu0 0
      %462 = vmatmul.mubr.bf16.gmra.mxu0 %v330
      %v463 = vpop.f32.mrf.mxu0
      %v464 = vadd.f32 %v291, %v463
      %v465 = vpop.f32.mrf.mxu0
      %v466 = vpop.f32.mrf.mxu0
      %v467 = vadd.f32 %v291, %v466
      %v468 = vpop.f32.mrf.mxu0
      %469 = vmatprep.mubr.bf16.mxu0 0
      %470 = vmatmul.mubr.bf16.gmra.mxu0 %v331
      %v471 = vpop.f32.mrf.mxu0
      %v472 = vadd.f32 %v291, %v471
      %v473 = vpop.f32.mrf.mxu0
      %v474 = vpop.f32.mrf.mxu0
      %v475 = vadd.f32 %v291, %v474
      %v476 = vpop.f32.mrf.mxu0
      %477 = vmatprep.mubr.bf16.mxu0 0
      %478 = vmatmul.mubr.bf16.gmra.mxu0 %v332
      %v479 = vpop.f32.mrf.mxu0
      %v480 = vadd.f32 %v291, %v479
      %v481 = vpop.f32.mrf.mxu0
      %v482 = vpop.f32.mrf.mxu0
      %v483 = vadd.f32 %v291, %v482
      %v484 = vpop.f32.mrf.mxu0
      %485 = vdwg.mxu0
      %v486 = vmul.f32 %v424, 0.01
      %v487 = vmul.f32 %v427, 0.01
      %v488 = vmul.f32 %v432, 0.01
      %v489 = vmul.f32 %v435, 0.01
      %v490 = vmul.f32 %v440, 0.01
      %v491 = vmul.f32 %v443, 0.01
      %v492 = vmul.f32 %v448, 0.01
      %v493 = vmul.f32 %v451, 0.01
      %v494 = vmul.f32 %v456, 0.01
      %v495 = vmul.f32 %v459, 0.01
      %v496 = vmul.f32 %v464, 0.01
      %v497 = vmul.f32 %v467, 0.01
      %v498 = vmul.f32 %v472, 0.01
      %v499 = vmul.f32 %v475, 0.01
      %v500 = vmul.f32 %v480, 0.01
      %v501 = vmul.f32 %v483, 0.01
      %v502 = vmax.f32 %v424, %v486
      %v503 = vmax.f32 %v427, %v487
      %v504 = vmax.f32 %v432, %v488
      %v505 = vmax.f32 %v435, %v489
      %v506 = vmax.f32 %v440, %v490
      %v507 = vmax.f32 %v443, %v491
      %v508 = vmax.f32 %v448, %v492
      %v509 = vmax.f32 %v451, %v493
      %v510 = vmax.f32 %v456, %v494
      %v511 = vmax.f32 %v459, %v495
      %v512 = vmax.f32 %v464, %v496
      %v513 = vmax.f32 %v467, %v497
      %v514 = vmax.f32 %v472, %v498
      %v515 = vmax.f32 %v475, %v499
      %v516 = vmax.f32 %v480, %v500
      %v517 = vmax.f32 %v483, %v501
      %s518 = sadd.s32 0, 1
      %s519 = smul.u32 %s518, 24
      %s520 = scalar_lea.vmem [#allocation2], %s519
      %521 = vst.msk [vmem:[%s520] sm:$0xff] %vm226, %v502
      %522 = vst.msk [vmem:[%s520 + $0x8] sm:$0xff] %vm226, %v503
      %523 = vst.msk [vmem:[%s520 + $0x18] sm:$0xff] %vm226, %v504
      %524 = vst.msk [vmem:[%s520 + $0x20] sm:$0xff] %vm226, %v505
      %525 = vst.msk [vmem:[%s520 + $0x30] sm:$0xff] %vm226, %v506
      %526 = vst.msk [vmem:[%s520 + $0x38] sm:$0xff] %vm226, %v507
      %527 = vst.msk [vmem:[%s520 + $0x48] sm:$0xff] %vm226, %v508
      %528 = vst.msk [vmem:[%s520 + $0x50] sm:$0xff] %vm226, %v509
      %529 = vst.msk [vmem:[%s520 + $0x60] sm:$0xff] %vm226, %v510
      %530 = vst.msk [vmem:[%s520 + $0x68] sm:$0xff] %vm226, %v511
      %531 = vst.msk [vmem:[%s520 + $0x78] sm:$0xff] %vm226, %v512
      %532 = vst.msk [vmem:[%s520 + $0x80] sm:$0xff] %vm226, %v513
      %533 = vst.msk [vmem:[%s520 + $0x90] sm:$0xff] %vm226, %v514
      %534 = vst.msk [vmem:[%s520 + $0x98] sm:$0xff] %vm226, %v515
      %535 = vst.msk [vmem:[%s520 + $0xa8] sm:$0xff] %vm226, %v516
      %536 = vst.msk [vmem:[%s520 + $0xb0] sm:$0xff] %vm226, %v517
      %s537 = smul.u32 8, 2
      %s538 = smul.addr %s537, 4
      %s539 = scalar_lea.vmem %s219, %s538
      %v540 = vld [vmem:[%s539] sm:$0xf]
      %v541 = vld [vmem:[%s539 + $0x4] sm:$0xf]
      %v542 = vld [vmem:[%s539 + $0x8] sm:$0xf]
      %v543 = vld [vmem:[%s539 + $0xc] sm:$0xf]
      %v544 = vld [vmem:[%s539 + $0x10] sm:$0xf]
      %v545 = vld [vmem:[%s539 + $0x14] sm:$0xf]
      %v546 = vld [vmem:[%s539 + $0x18] sm:$0xf]
      %v547 = vld [vmem:[%s539 + $0x1c] sm:$0xf]
      %v548 = vld [vmem:[%s539 + $0x20] sm:$0xf]
      %v549 = vld [vmem:[%s539 + $0x24] sm:$0xf]
      %v550 = vld [vmem:[%s539 + $0x28] sm:$0xf]
      %v551 = vld [vmem:[%s539 + $0x2c] sm:$0xf]
      %v552 = vld [vmem:[%s539 + $0x30] sm:$0xf]
      %v553 = vld [vmem:[%s539 + $0x34] sm:$0xf]
      %v554 = vld [vmem:[%s539 + $0x38] sm:$0xf]
      %v555 = vld [vmem:[%s539 + $0x3c] sm:$0xf]
      %v572 = vunpack.c.l.b16 %v540
      %v573 = vunpack.c.l.b16 %v541
      %v574 = vunpack.c.l.b16 %v542
      %v575 = vunpack.c.l.b16 %v543
      %v576 = vunpack.c.l.b16 %v544
      %v577 = vunpack.c.l.b16 %v545
      %v578 = vunpack.c.l.b16 %v546
      %v579 = vunpack.c.l.b16 %v547
      %v580 = vunpack.c.l.b16 %v548
      %v581 = vunpack.c.l.b16 %v549
      %v582 = vunpack.c.l.b16 %v550
      %v583 = vunpack.c.l.b16 %v551
      %v584 = vunpack.c.l.b16 %v552
      %v585 = vunpack.c.l.b16 %v553
      %v586 = vunpack.c.l.b16 %v554
      %v587 = vunpack.c.l.b16 %v555
      %v588 = vpack.c.b16 %v573, %v572
      %v589 = vpack.c.b16 %v575, %v574
      %v590 = vpack.c.b16 %v577, %v576
      %v591 = vpack.c.b16 %v579, %v578
      %v592 = vpack.c.b16 %v581, %v580
      %v593 = vpack.c.b16 %v583, %v582
      %v594 = vpack.c.b16 %v585, %v584
      %v595 = vpack.c.b16 %v587, %v586
      %604 = vmatprep.subr.bf16.mxu0 0
      %605 = vmatpush1.bf16.msra.mxu0 %v380
      %606 = vmatprep.subr.bf16.mxu0 0
      %607 = vmatpush1.bf16.msra.mxu0 %v379
      %608 = vmatprep.subr.bf16.mxu0 0
      %609 = vmatpush1.bf16.msra.mxu0 %v378
      %610 = vmatprep.subr.bf16.mxu0 0
      %611 = vmatpush1.bf16.msra.mxu0 %v377
      %612 = vmatprep.subr.bf16.mxu0 0
      %613 = vmatpush1.bf16.msra.mxu0 %v376
      %614 = vmatprep.subr.bf16.mxu0 0
      %615 = vmatpush1.bf16.msra.mxu0 %v375
      %616 = vmatprep.subr.bf16.mxu0 0
      %617 = vmatpush1.bf16.msra.mxu0 %v374
      %618 = vmatprep.subr.bf16.mxu0 0
      %619 = vmatpush1.bf16.msra.mxu0 %v373
      %620 = vmatprep.subr.bf16.mxu0 0
      %621 = vmatpush2.bf16.msra.mxu0 0
      %622 = vmatprep.subr.bf16.mxu0 0
      %623 = vmatpush2.bf16.msra.mxu0 0
      %624 = vmatprep.subr.bf16.mxu0 0
      %625 = vmatpush2.bf16.msra.mxu0 0
      %626 = vmatprep.subr.bf16.mxu0 0
      %627 = vmatpush2.bf16.msra.mxu0 0
      %628 = vmatprep.subr.bf16.mxu0 0
      %629 = vmatpush2.bf16.msra.mxu0 0
      %630 = vmatprep.subr.bf16.mxu0 0
      %631 = vmatpush2.bf16.msra.mxu0 0
      %632 = vmatprep.subr.bf16.mxu0 0
      %633 = vmatpush2.bf16.msra.mxu0 0
      %634 = vmatprep.subr.bf16.mxu0 0
      %635 = vmatpush2.bf16.msra.mxu0 0
      %636 = vmatprep.mubr.bf16.mxu0 0
      %637 = vmatmul.mubr.bf16.gmra.mxu0 %v588
      %v638 = vpop.f32.mrf.mxu0
      %v639 = vadd.f32 %v291, %v638
      %v640 = vpop.f32.mrf.mxu0
      %v641 = vpop.f32.mrf.mxu0
      %v642 = vadd.f32 %v291, %v641
      %v643 = vpop.f32.mrf.mxu0
      %644 = vmatprep.mubr.bf16.mxu0 0
      %645 = vmatmul.mubr.bf16.gmra.mxu0 %v589
      %v646 = vpop.f32.mrf.mxu0
      %v647 = vadd.f32 %v291, %v646
      %v648 = vpop.f32.mrf.mxu0
      %v649 = vpop.f32.mrf.mxu0
      %v650 = vadd.f32 %v291, %v649
      %v651 = vpop.f32.mrf.mxu0
      %652 = vmatprep.mubr.bf16.mxu0 0
      %653 = vmatmul.mubr.bf16.gmra.mxu0 %v590
      %v654 = vpop.f32.mrf.mxu0
      %v655 = vadd.f32 %v291, %v654
      %v656 = vpop.f32.mrf.mxu0
      %v657 = vpop.f32.mrf.mxu0
      %v658 = vadd.f32 %v291, %v657
      %v659 = vpop.f32.mrf.mxu0
      %660 = vmatprep.mubr.bf16.mxu0 0
      %661 = vmatmul.mubr.bf16.gmra.mxu0 %v591
      %v662 = vpop.f32.mrf.mxu0
      %v663 = vadd.f32 %v291, %v662
      %v664 = vpop.f32.mrf.mxu0
      %v665 = vpop.f32.mrf.mxu0
      %v666 = vadd.f32 %v291, %v665
      %v667 = vpop.f32.mrf.mxu0
      %668 = vmatprep.mubr.bf16.mxu0 0
      %669 = vmatmul.mubr.bf16.gmra.mxu0 %v592
      %v670 = vpop.f32.mrf.mxu0
      %v671 = vadd.f32 %v291, %v670
      %v672 = vpop.f32.mrf.mxu0
      %v673 = vpop.f32.mrf.mxu0
      %v674 = vadd.f32 %v291, %v673
      %v675 = vpop.f32.mrf.mxu0
      %676 = vmatprep.mubr.bf16.mxu0 0
      %677 = vmatmul.mubr.bf16.gmra.mxu0 %v593
      %v678 = vpop.f32.mrf.mxu0
      %v679 = vadd.f32 %v291, %v678
      %v680 = vpop.f32.mrf.mxu0
      %v681 = vpop.f32.mrf.mxu0
      %v682 = vadd.f32 %v291, %v681
      %v683 = vpop.f32.mrf.mxu0
      %684 = vmatprep.mubr.bf16.mxu0 0
      %685 = vmatmul.mubr.bf16.gmra.mxu0 %v594
      %v686 = vpop.f32.mrf.mxu0
      %v687 = vadd.f32 %v291, %v686
      %v688 = vpop.f32.mrf.mxu0
      %v689 = vpop.f32.mrf.mxu0
      %v690 = vadd.f32 %v291, %v689
      %v691 = vpop.f32.mrf.mxu0
      %692 = vmatprep.mubr.bf16.mxu0 0
      %693 = vmatmul.mubr.bf16.gmra.mxu0 %v595
      %v694 = vpop.f32.mrf.mxu0
      %v695 = vadd.f32 %v291, %v694
      %v696 = vpop.f32.mrf.mxu0
      %v697 = vpop.f32.mrf.mxu0
      %v698 = vadd.f32 %v291, %v697
      %v699 = vpop.f32.mrf.mxu0
      %700 = vdwg.mxu0
      %v701 = vmul.f32 %v639, 0.01
      %v702 = vmul.f32 %v642, 0.01
      %v703 = vmul.f32 %v647, 0.01
      %v704 = vmul.f32 %v650, 0.01
      %v705 = vmul.f32 %v655, 0.01
      %v706 = vmul.f32 %v658, 0.01
      %v707 = vmul.f32 %v663, 0.01
      %v708 = vmul.f32 %v666, 0.01
      %v709 = vmul.f32 %v671, 0.01
      %v710 = vmul.f32 %v674, 0.01
      %v711 = vmul.f32 %v679, 0.01
      %v712 = vmul.f32 %v682, 0.01
      %v713 = vmul.f32 %v687, 0.01
      %v714 = vmul.f32 %v690, 0.01
      %v715 = vmul.f32 %v695, 0.01
      %v716 = vmul.f32 %v698, 0.01
      %v717 = vmax.f32 %v639, %v701
      %v718 = vmax.f32 %v642, %v702
      %v719 = vmax.f32 %v647, %v703
      %v720 = vmax.f32 %v650, %v704
      %v721 = vmax.f32 %v655, %v705
      %v722 = vmax.f32 %v658, %v706
      %v723 = vmax.f32 %v663, %v707
      %v724 = vmax.f32 %v666, %v708
      %v725 = vmax.f32 %v671, %v709
      %v726 = vmax.f32 %v674, %v710
      %v727 = vmax.f32 %v679, %v711
      %v728 = vmax.f32 %v682, %v712
      %v729 = vmax.f32 %v687, %v713
      %v730 = vmax.f32 %v690, %v714
      %v731 = vmax.f32 %v695, %v715
      %v732 = vmax.f32 %v698, %v716
      %s733 = sadd.s32 8, 1
      %s734 = smul.u32 %s733, 24
      %s735 = scalar_lea.vmem [#allocation2], %s734
      %736 = vst.msk [vmem:[%s735] sm:$0xff] %vm226, %v717
      %737 = vst.msk [vmem:[%s735 + $0x8] sm:$0xff] %vm226, %v718
      %738 = vst.msk [vmem:[%s735 + $0x18] sm:$0xff] %vm226, %v719
      %739 = vst.msk [vmem:[%s735 + $0x20] sm:$0xff] %vm226, %v720
      %740 = vst.msk [vmem:[%s735 + $0x30] sm:$0xff] %vm226, %v721
      %741 = vst.msk [vmem:[%s735 + $0x38] sm:$0xff] %vm226, %v722
      %742 = vst.msk [vmem:[%s735 + $0x48] sm:$0xff] %vm226, %v723
      %743 = vst.msk [vmem:[%s735 + $0x50] sm:$0xff] %vm226, %v724
      %744 = vst.msk [vmem:[%s735 + $0x60] sm:$0xff] %vm226, %v725
      %745 = vst.msk [vmem:[%s735 + $0x68] sm:$0xff] %vm226, %v726
      %746 = vst.msk [vmem:[%s735 + $0x78] sm:$0xff] %vm226, %v727
      %747 = vst.msk [vmem:[%s735 + $0x80] sm:$0xff] %vm226, %v728
      %748 = vst.msk [vmem:[%s735 + $0x90] sm:$0xff] %vm226, %v729
      %749 = vst.msk [vmem:[%s735 + $0x98] sm:$0xff] %vm226, %v730
      %750 = vst.msk [vmem:[%s735 + $0xa8] sm:$0xff] %vm226, %v731
      %751 = vst.msk [vmem:[%s735 + $0xb0] sm:$0xff] %vm226, %v732
      %v752 = vld [vmem:[%s4] sm:$0x1]
      %s753 = smul.u32 0, 24
      %s754 = scalar_lea.vmem [#allocation2], %s753
      %v755 = vld [vmem:[%s754] sm:$0xff]
      %v756 = vld [vmem:[%s754 + $0x8] sm:$0xff]
      %v757 = vld [vmem:[%s754 + $0x10] sm:$0xff]
      %v758 = vld [vmem:[%s754 + $0x18] sm:$0xff]
      %v759 = vld [vmem:[%s754 + $0x20] sm:$0xff]
      %v760 = vld [vmem:[%s754 + $0x28] sm:$0xff]
      %v761 = vld [vmem:[%s754 + $0x30] sm:$0xff]
      %v762 = vld [vmem:[%s754 + $0x38] sm:$0xff]
      %v763 = vld [vmem:[%s754 + $0x40] sm:$0xff]
      %v764 = vld [vmem:[%s754 + $0x48] sm:$0xff]
      %v765 = vld [vmem:[%s754 + $0x50] sm:$0xff]
      %v766 = vld [vmem:[%s754 + $0x58] sm:$0xff]
      %v767 = vld [vmem:[%s754 + $0x60] sm:$0xff]
      %v768 = vld [vmem:[%s754 + $0x68] sm:$0xff]
      %v769 = vld [vmem:[%s754 + $0x70] sm:$0xff]
      %v770 = vld [vmem:[%s754 + $0x78] sm:$0xff]
      %v771 = vld [vmem:[%s754 + $0x80] sm:$0xff]
      %v772 = vld [vmem:[%s754 + $0x88] sm:$0xff]
      %v773 = vld [vmem:[%s754 + $0x90] sm:$0xff]
      %v774 = vld [vmem:[%s754 + $0x98] sm:$0xff]
      %v775 = vld [vmem:[%s754 + $0xa0] sm:$0xff]
      %v776 = vld [vmem:[%s754 + $0xa8] sm:$0xff]
      %v777 = vld [vmem:[%s754 + $0xb0] sm:$0xff]
      %v778 = vld [vmem:[%s754 + $0xb8] sm:$0xff]
      %v779 = vld [vmem:[%s754 + $0xc0] sm:$0xff]
      %v780 = vld [vmem:[%s754 + $0xc8] sm:$0xff]
      %v781 = vld [vmem:[%s754 + $0xd0] sm:$0xff]
      %v782 = vld [vmem:[%s754 + $0xd8] sm:$0xff]
      %v783 = vld [vmem:[%s754 + $0xe0] sm:$0xff]
      %v784 = vld [vmem:[%s754 + $0xe8] sm:$0xff]
      %v785 = vrot.slane %v755, 7
      %v786 = vrot.slane %v758, 7
      %v787 = vrot.slane %v761, 7
      %v788 = vrot.slane %v764, 7
      %v789 = vrot.slane %v767, 7
      %v790 = vrot.slane %v770, 7
      %v791 = vrot.slane %v773, 7
      %v792 = vrot.slane %v776, 7
      %v793 = vrot.slane %v779, 7
      %v794 = vrot.slane %v782, 7
      %v795 = vrot.slane %v756, 7
      %v796 = vrot.slane %v759, 7
      %v797 = vrot.slane %v762, 7
      %v798 = vrot.slane %v765, 7
      %v799 = vrot.slane %v768, 7
      %v800 = vrot.slane %v771, 7
      %v801 = vrot.slane %v774, 7
      %v802 = vrot.slane %v777, 7
      %v803 = vrot.slane %v780, 7
      %v804 = vrot.slane %v783, 7
      %v805 = vrot.slane %v757, 7
      %v806 = vrot.slane %v760, 7
      %v807 = vrot.slane %v763, 7
      %v808 = vrot.slane %v766, 7
      %v809 = vrot.slane %v769, 7
      %v810 = vrot.slane %v772, 7
      %v811 = vrot.slane %v775, 7
      %v812 = vrot.slane %v778, 7
      %v813 = vrot.slane %v781, 7
      %v814 = vrot.slane %v784, 7
      %v815 = vlaneseq
      %v816 = vshrl.u32 %v815, 7
      %vm817 = vcmp.lt.s32.totalorder %v816, 1
      %v818 = vsel %vm817, %v785, %v795
      %v819 = vsel %vm817, %v786, %v796
      %v820 = vsel %vm817, %v787, %v797
      %v821 = vsel %vm817, %v788, %v798
      %v822 = vsel %vm817, %v789, %v799
      %v823 = vsel %vm817, %v790, %v800
      %v824 = vsel %vm817, %v791, %v801
      %v825 = vsel %vm817, %v792, %v802
      %v826 = vsel %vm817, %v793, %v803
      %v827 = vsel %vm817, %v794, %v804
      %v828 = vsel %vm817, %v805, %v785
      %v829 = vsel %vm817, %v806, %v786
      %v830 = vsel %vm817, %v807, %v787
      %v831 = vsel %vm817, %v808, %v788
      %v832 = vsel %vm817, %v809, %v789
      %v833 = vsel %vm817, %v810, %v790
      %v834 = vsel %vm817, %v811, %v791
      %v835 = vsel %vm817, %v812, %v792
      %v836 = vsel %vm817, %v813, %v793
      %v837 = vsel %vm817, %v814, %v794
      %v838 = vrot.slane %v755, 1
      %v839 = vrot.slane %v758, 1
      %v840 = vrot.slane %v761, 1
      %v841 = vrot.slane %v764, 1
      %v842 = vrot.slane %v767, 1
      %v843 = vrot.slane %v770, 1
      %v844 = vrot.slane %v773, 1
      %v845 = vrot.slane %v776, 1
      %v846 = vrot.slane %v779, 1
      %v847 = vrot.slane %v782, 1
      %v848 = vrot.slane %v756, 1
      %v849 = vrot.slane %v759, 1
      %v850 = vrot.slane %v762, 1
      %v851 = vrot.slane %v765, 1
      %v852 = vrot.slane %v768, 1
      %v853 = vrot.slane %v771, 1
      %v854 = vrot.slane %v774, 1
      %v855 = vrot.slane %v777, 1
      %v856 = vrot.slane %v780, 1
      %v857 = vrot.slane %v783, 1
      %v858 = vrot.slane %v757, 1
      %v859 = vrot.slane %v760, 1
      %v860 = vrot.slane %v763, 1
      %v861 = vrot.slane %v766, 1
      %v862 = vrot.slane %v769, 1
      %v863 = vrot.slane %v772, 1
      %v864 = vrot.slane %v775, 1
      %v865 = vrot.slane %v778, 1
      %v866 = vrot.slane %v781, 1
      %v867 = vrot.slane %v784, 1
      %vm868 = vcmp.lt.s32.totalorder %v816, 7
      %v869 = vsel %vm868, %v848, %v858
      %v870 = vsel %vm868, %v849, %v859
      %v871 = vsel %vm868, %v850, %v860
      %v872 = vsel %vm868, %v851, %v861
      %v873 = vsel %vm868, %v852, %v862
      %v874 = vsel %vm868, %v853, %v863
      %v875 = vsel %vm868, %v854, %v864
      %v876 = vsel %vm868, %v855, %v865
      %v877 = vsel %vm868, %v856, %v866
      %v878 = vsel %vm868, %v857, %v867
      %v879 = vsel %vm868, %v838, %v848
      %v880 = vsel %vm868, %v839, %v849
      %v881 = vsel %vm868, %v840, %v850
      %v882 = vsel %vm868, %v841, %v851
      %v883 = vsel %vm868, %v842, %v852
      %v884 = vsel %vm868, %v843, %v853
      %v885 = vsel %vm868, %v844, %v854
      %v886 = vsel %vm868, %v845, %v855
      %v887 = vsel %vm868, %v846, %v856
      %v888 = vsel %vm868, %v847, %v857
      %v889 = vpack.c.bf16 %v818, %v828
      %v890 = vpack.c.bf16 %v819, %v829
      %v891 = vpack.c.bf16 %v820, %v830
      %v892 = vpack.c.bf16 %v821, %v831
      %v893 = vpack.c.bf16 %v822, %v832
      %v894 = vpack.c.bf16 %v823, %v833
      %v895 = vpack.c.bf16 %v824, %v834
      %v896 = vpack.c.bf16 %v825, %v835
      %v897 = vpack.c.bf16 %v756, %v755
      %v898 = vpack.c.bf16 %v759, %v758
      %v899 = vpack.c.bf16 %v762, %v761
      %v900 = vpack.c.bf16 %v765, %v764
      %v901 = vpack.c.bf16 %v768, %v767
      %v902 = vpack.c.bf16 %v771, %v770
      %v903 = vpack.c.bf16 %v774, %v773
      %v904 = vpack.c.bf16 %v777, %v776
      %v905 = vpack.c.bf16 %v869, %v879
      %v906 = vpack.c.bf16 %v870, %v880
      %v907 = vpack.c.bf16 %v871, %v881
      %v908 = vpack.c.bf16 %v872, %v882
      %v909 = vpack.c.bf16 %v873, %v883
      %v910 = vpack.c.bf16 %v874, %v884
      %v911 = vpack.c.bf16 %v875, %v885
      %v912 = vpack.c.bf16 %v876, %v886
      %921 = vrot.lane.b32.xlu0 %v897, 64
      %v922 = vpop.permute.xlu0 %921
      %923 = vrot.lane.b32.xlu0 %v898, 64
      %v924 = vpop.permute.xlu0 %923
      %925 = vrot.lane.b32.xlu0 %v899, 64
      %v926 = vpop.permute.xlu0 %925
      %927 = vrot.lane.b32.xlu0 %v900, 64
      %v928 = vpop.permute.xlu0 %927
      %929 = vrot.lane.b32.xlu0 %v901, 64
      %v930 = vpop.permute.xlu0 %929
      %931 = vrot.lane.b32.xlu0 %v902, 64
      %v932 = vpop.permute.xlu0 %931
      %933 = vrot.lane.b32.xlu0 %v903, 64
      %v934 = vpop.permute.xlu0 %933
      %935 = vrot.lane.b32.xlu0 %v904, 64
      %v936 = vpop.permute.xlu0 %935
      %v939 = vsel %vm226, %v889, %v922
      %v943 = vsel %vm226, %v890, %v924
      %v947 = vsel %vm226, %v891, %v926
      %v951 = vsel %vm226, %v892, %v928
      %v955 = vsel %vm226, %v893, %v930
      %v959 = vsel %vm226, %v894, %v932
      %v963 = vsel %vm226, %v895, %v934
      %v967 = vsel %vm226, %v896, %v936
      %v969 = vld [vmem:[%s3] sm:$0xf]
      %v970 = vld [vmem:[%s3 + $0x4] sm:$0xf]
      %v971 = vld [vmem:[%s3 + $0x8] sm:$0xf]
      %v972 = vld [vmem:[%s3 + $0xc] sm:$0xf]
      %v973 = vld [vmem:[%s3 + $0x10] sm:$0xf]
      %v974 = vld [vmem:[%s3 + $0x14] sm:$0xf]
      %v975 = vld [vmem:[%s3 + $0x18] sm:$0xf]
      %v976 = vld [vmem:[%s3 + $0x1c] sm:$0xf]
      %v977 = vld [vmem:[%s3 + $0x20] sm:$0xf]
      %v978 = vld [vmem:[%s3 + $0x24] sm:$0xf]
      %v979 = vld [vmem:[%s3 + $0x28] sm:$0xf]
      %v980 = vld [vmem:[%s3 + $0x2c] sm:$0xf]
      %v981 = vld [vmem:[%s3 + $0x30] sm:$0xf]
      %v982 = vld [vmem:[%s3 + $0x34] sm:$0xf]
      %v983 = vld [vmem:[%s3 + $0x38] sm:$0xf]
      %v984 = vld [vmem:[%s3 + $0x3c] sm:$0xf]
      %v985 = vld [vmem:[%s3 + $0x40] sm:$0xf]
      %v986 = vld [vmem:[%s3 + $0x44] sm:$0xf]
      %v987 = vld [vmem:[%s3 + $0x48] sm:$0xf]
      %v988 = vld [vmem:[%s3 + $0x4c] sm:$0xf]
      %v989 = vld [vmem:[%s3 + $0x50] sm:$0xf]
      %v990 = vld [vmem:[%s3 + $0x54] sm:$0xf]
      %v991 = vld [vmem:[%s3 + $0x58] sm:$0xf]
      %v992 = vld [vmem:[%s3 + $0x5c] sm:$0xf]
      %v993 = vpack.c.bf16 %v826, %v836
      %v994 = vpack.c.bf16 %v780, %v779
      %v995 = vpack.c.bf16 %v877, %v887
      %997 = vrot.lane.b32.xlu0 %v994, 64
      %v998 = vpop.permute.xlu0 %997
      %v1001 = vsel %vm226, %v993, %v998
      %s1003 = scalar_lea.vmem %s3, 96
      %v1004 = vld [vmem:[%s1003] sm:$0xf]
      %v1005 = vld [vmem:[%s1003 + $0x4] sm:$0xf]
      %v1006 = vld [vmem:[%s1003 + $0x8] sm:$0xf]
      %v1007 = vld [vmem:[%s1003 + $0xc] sm:$0xf]
      %v1008 = vld [vmem:[%s1003 + $0x10] sm:$0xf]
      %v1009 = vld [vmem:[%s1003 + $0x14] sm:$0xf]
      %v1010 = vld [vmem:[%s1003 + $0x18] sm:$0xf]
      %v1011 = vld [vmem:[%s1003 + $0x1c] sm:$0xf]
      %v1012 = vld [vmem:[%s1003 + $0x20] sm:$0xf]
      %v1013 = vld [vmem:[%s1003 + $0x24] sm:$0xf]
      %v1014 = vld [vmem:[%s1003 + $0x28] sm:$0xf]
      %v1015 = vld [vmem:[%s1003 + $0x2c] sm:$0xf]
      %v1016 = vld [vmem:[%s1003 + $0x30] sm:$0xf]
      %v1017 = vld [vmem:[%s1003 + $0x34] sm:$0xf]
      %v1018 = vld [vmem:[%s1003 + $0x38] sm:$0xf]
      %v1019 = vld [vmem:[%s1003 + $0x3c] sm:$0xf]
      %v1020 = vld [vmem:[%s1003 + $0x40] sm:$0xf]
      %v1021 = vld [vmem:[%s1003 + $0x44] sm:$0xf]
      %v1022 = vld [vmem:[%s1003 + $0x48] sm:$0xf]
      %v1023 = vld [vmem:[%s1003 + $0x4c] sm:$0xf]
      %v1024 = vld [vmem:[%s1003 + $0x50] sm:$0xf]
      %v1025 = vld [vmem:[%s1003 + $0x54] sm:$0xf]
      %v1026 = vld [vmem:[%s1003 + $0x58] sm:$0xf]
      %v1027 = vld [vmem:[%s1003 + $0x5c] sm:$0xf]
      %v1052 = vunpack.c.l.b16 %v1004
      %v1053 = vunpack.c.l.b16 %v1005
      %v1054 = vunpack.c.l.b16 %v1006
      %v1055 = vunpack.c.l.b16 %v1007
      %v1056 = vunpack.c.l.b16 %v1008
      %v1057 = vunpack.c.l.b16 %v1009
      %v1058 = vunpack.c.l.b16 %v1010
      %v1059 = vunpack.c.l.b16 %v1011
      %v1060 = vunpack.c.l.b16 %v1012
      %v1061 = vunpack.c.l.b16 %v1013
      %v1062 = vunpack.c.l.b16 %v1014
      %v1063 = vunpack.c.l.b16 %v1015
      %v1064 = vunpack.c.l.b16 %v1016
      %v1065 = vunpack.c.l.b16 %v1017
      %v1066 = vunpack.c.l.b16 %v1018
      %v1067 = vunpack.c.l.b16 %v1019
      %v1068 = vunpack.c.l.b16 %v1020
      %v1069 = vunpack.c.l.b16 %v1021
      %v1070 = vunpack.c.l.b16 %v1022
      %v1071 = vunpack.c.l.b16 %v1023
      %v1072 = vunpack.c.l.b16 %v1024
      %v1073 = vunpack.c.l.b16 %v1025
      %v1074 = vunpack.c.l.b16 %v1026
      %v1075 = vunpack.c.l.b16 %v1027
      %v1076 = vpack.c.b16 %v1053, %v1052
      %v1077 = vpack.c.b16 %v1055, %v1054
      %v1078 = vpack.c.b16 %v1057, %v1056
      %v1079 = vpack.c.b16 %v1059, %v1058
      %v1080 = vpack.c.b16 %v1061, %v1060
      %v1081 = vpack.c.b16 %v1063, %v1062
      %v1082 = vpack.c.b16 %v1065, %v1064
      %v1083 = vpack.c.b16 %v1067, %v1066
      %v1084 = vpack.c.b16 %v1069, %v1068
      %v1085 = vpack.c.b16 %v1071, %v1070
      %v1086 = vpack.c.b16 %v1073, %v1072
      %v1087 = vpack.c.b16 %v1075, %v1074
      %v1101 = vsel %vm226, %v906, 0
      %v1104 = vsel %vm226, %v907, 0
      %v1107 = vsel %vm226, %v908, 0
      %v1110 = vsel %vm226, %v909, 0
      %v1113 = vsel %vm226, %v910, 0
      %v1116 = vsel %vm226, %v911, 0
      %v1119 = vsel %vm226, %v912, 0
      %v1122 = vsel %vm226, %v995, 0
      %1124 = vmatprep.subr.bf16.mxu0 0
      %1125 = vmatpush1.bf16.msra.mxu0 %v1083
      %1126 = vmatprep.subr.bf16.mxu0 0
      %1127 = vmatpush1.bf16.msra.mxu0 %v1082
      %1128 = vmatprep.subr.bf16.mxu0 0
      %1129 = vmatpush1.bf16.msra.mxu0 %v1081
      %1130 = vmatprep.subr.bf16.mxu0 0
      %1131 = vmatpush1.bf16.msra.mxu0 %v1080
      %1132 = vmatprep.subr.bf16.mxu0 0
      %1133 = vmatpush1.bf16.msra.mxu0 %v1079
      %1134 = vmatprep.subr.bf16.mxu0 0
      %1135 = vmatpush1.bf16.msra.mxu0 %v1078
      %1136 = vmatprep.subr.bf16.mxu0 0
      %1137 = vmatpush1.bf16.msra.mxu0 %v1077
      %1138 = vmatprep.subr.bf16.mxu0 0
      %1139 = vmatpush1.bf16.msra.mxu0 %v1076
      %1140 = vmatprep.subr.bf16.mxu0 0
      %1141 = vmatpush2.bf16.msra.mxu0 0
      %1142 = vmatprep.subr.bf16.mxu0 0
      %1143 = vmatpush2.bf16.msra.mxu0 0
      %1144 = vmatprep.subr.bf16.mxu0 0
      %1145 = vmatpush2.bf16.msra.mxu0 0
      %1146 = vmatprep.subr.bf16.mxu0 0
      %1147 = vmatpush2.bf16.msra.mxu0 0
      %1148 = vmatprep.subr.bf16.mxu0 0
      %1149 = vmatpush2.bf16.msra.mxu0 %v1087
      %1150 = vmatprep.subr.bf16.mxu0 0
      %1151 = vmatpush2.bf16.msra.mxu0 %v1086
      %1152 = vmatprep.subr.bf16.mxu0 0
      %1153 = vmatpush2.bf16.msra.mxu0 %v1085
      %1154 = vmatprep.subr.bf16.mxu0 0
      %1155 = vmatpush2.bf16.msra.mxu0 %v1084
      %1156 = vmatprep.mubr.bf16.mxu0 %v1101
      %1157 = vmatmul.mubr.bf16.gmra.mxu0 %v943
      %v1158 = vpop.f32.mrf.mxu0
      %v1159 = vadd.f32 0.0, %v1158
      %v1160 = vpop.f32.mrf.mxu0
      %v1161 = vpop.f32.mrf.mxu0
      %v1162 = vadd.f32 0.0, %v1161
      %v1163 = vpop.f32.mrf.mxu0
      %1164 = vmatprep.mubr.bf16.mxu0 %v1104
      %1165 = vmatmul.mubr.bf16.gmra.mxu0 %v947
      %v1166 = vpop.f32.mrf.mxu0
      %v1167 = vadd.f32 0.0, %v1166
      %v1168 = vpop.f32.mrf.mxu0
      %v1169 = vpop.f32.mrf.mxu0
      %v1170 = vadd.f32 0.0, %v1169
      %v1171 = vpop.f32.mrf.mxu0
      %1172 = vmatprep.mubr.bf16.mxu0 %v1107
      %1173 = vmatmul.mubr.bf16.gmra.mxu0 %v951
      %v1174 = vpop.f32.mrf.mxu0
      %v1175 = vadd.f32 0.0, %v1174
      %v1176 = vpop.f32.mrf.mxu0
      %v1177 = vpop.f32.mrf.mxu0
      %v1178 = vadd.f32 0.0, %v1177
      %v1179 = vpop.f32.mrf.mxu0
      %1180 = vmatprep.mubr.bf16.mxu0 %v1110
      %1181 = vmatmul.mubr.bf16.gmra.mxu0 %v955
      %v1182 = vpop.f32.mrf.mxu0
      %v1183 = vadd.f32 0.0, %v1182
      %v1184 = vpop.f32.mrf.mxu0
      %v1185 = vpop.f32.mrf.mxu0
      %v1186 = vadd.f32 0.0, %v1185
      %v1187 = vpop.f32.mrf.mxu0
      %1188 = vmatprep.mubr.bf16.mxu0 %v1113
      %1189 = vmatmul.mubr.bf16.gmra.mxu0 %v959
      %v1190 = vpop.f32.mrf.mxu0
      %v1191 = vadd.f32 0.0, %v1190
      %v1192 = vpop.f32.mrf.mxu0
      %v1193 = vpop.f32.mrf.mxu0
      %v1194 = vadd.f32 0.0, %v1193
      %v1195 = vpop.f32.mrf.mxu0
      %1196 = vmatprep.mubr.bf16.mxu0 %v1116
      %1197 = vmatmul.mubr.bf16.gmra.mxu0 %v963
      %v1198 = vpop.f32.mrf.mxu0
      %v1199 = vadd.f32 0.0, %v1198
      %v1200 = vpop.f32.mrf.mxu0
      %v1201 = vpop.f32.mrf.mxu0
      %v1202 = vadd.f32 0.0, %v1201
      %v1203 = vpop.f32.mrf.mxu0
      %1204 = vmatprep.mubr.bf16.mxu0 %v1119
      %1205 = vmatmul.mubr.bf16.gmra.mxu0 %v967
      %v1206 = vpop.f32.mrf.mxu0
      %v1207 = vadd.f32 0.0, %v1206
      %v1208 = vpop.f32.mrf.mxu0
      %v1209 = vpop.f32.mrf.mxu0
      %v1210 = vadd.f32 0.0, %v1209
      %v1211 = vpop.f32.mrf.mxu0
      %1212 = vmatprep.mubr.bf16.mxu0 %v1122
      %1213 = vmatmul.mubr.bf16.gmra.mxu0 %v1001
      %v1214 = vpop.f32.mrf.mxu0
      %v1215 = vadd.f32 0.0, %v1214
      %v1216 = vpop.f32.mrf.mxu0
      %v1217 = vpop.f32.mrf.mxu0
      %v1218 = vadd.f32 0.0, %v1217
      %v1219 = vpop.f32.mrf.mxu0
      %1220 = vdwg.mxu0
      %v1245 = vunpack.c.l.b16 %v969
      %v1246 = vunpack.c.l.b16 %v970
      %v1247 = vunpack.c.l.b16 %v971
      %v1248 = vunpack.c.l.b16 %v972
      %v1249 = vunpack.c.l.b16 %v973
      %v1250 = vunpack.c.l.b16 %v974
      %v1251 = vunpack.c.l.b16 %v975
      %v1252 = vunpack.c.l.b16 %v976
      %v1253 = vunpack.c.l.b16 %v977
      %v1254 = vunpack.c.l.b16 %v978
      %v1255 = vunpack.c.l.b16 %v979
      %v1256 = vunpack.c.l.b16 %v980
      %v1257 = vunpack.c.l.b16 %v981
      %v1258 = vunpack.c.l.b16 %v982
      %v1259 = vunpack.c.l.b16 %v983
      %v1260 = vunpack.c.l.b16 %v984
      %v1261 = vunpack.c.l.b16 %v985
      %v1262 = vunpack.c.l.b16 %v986
      %v1263 = vunpack.c.l.b16 %v987
      %v1264 = vunpack.c.l.b16 %v988
      %v1265 = vunpack.c.l.b16 %v989
      %v1266 = vunpack.c.l.b16 %v990
      %v1267 = vunpack.c.l.b16 %v991
      %v1268 = vunpack.c.l.b16 %v992
      %v1269 = vpack.c.b16 %v1246, %v1245
      %v1270 = vpack.c.b16 %v1248, %v1247
      %v1271 = vpack.c.b16 %v1250, %v1249
      %v1272 = vpack.c.b16 %v1252, %v1251
      %v1273 = vpack.c.b16 %v1254, %v1253
      %v1274 = vpack.c.b16 %v1256, %v1255
      %v1275 = vpack.c.b16 %v1258, %v1257
      %v1276 = vpack.c.b16 %v1260, %v1259
      %v1277 = vpack.c.b16 %v1262, %v1261
      %v1278 = vpack.c.b16 %v1264, %v1263
      %v1279 = vpack.c.b16 %v1266, %v1265
      %v1280 = vpack.c.b16 %v1268, %v1267
      %v1294 = vsel %vm226, %v905, 0
      %1296 = vmatprep.subr.bf16.mxu0 0
      %1297 = vmatpush1.bf16.msra.mxu0 %v1276
      %1298 = vmatprep.subr.bf16.mxu0 0
      %1299 = vmatpush1.bf16.msra.mxu0 %v1275
      %1300 = vmatprep.subr.bf16.mxu0 0
      %1301 = vmatpush1.bf16.msra.mxu0 %v1274
      %1302 = vmatprep.subr.bf16.mxu0 0
      %1303 = vmatpush1.bf16.msra.mxu0 %v1273
      %1304 = vmatprep.subr.bf16.mxu0 0
      %1305 = vmatpush1.bf16.msra.mxu0 %v1272
      %1306 = vmatprep.subr.bf16.mxu0 0
      %1307 = vmatpush1.bf16.msra.mxu0 %v1271
      %1308 = vmatprep.subr.bf16.mxu0 0
      %1309 = vmatpush1.bf16.msra.mxu0 %v1270
      %1310 = vmatprep.subr.bf16.mxu0 0
      %1311 = vmatpush1.bf16.msra.mxu0 %v1269
      %1312 = vmatprep.subr.bf16.mxu0 0
      %1313 = vmatpush2.bf16.msra.mxu0 0
      %1314 = vmatprep.subr.bf16.mxu0 0
      %1315 = vmatpush2.bf16.msra.mxu0 0
      %1316 = vmatprep.subr.bf16.mxu0 0
      %1317 = vmatpush2.bf16.msra.mxu0 0
      %1318 = vmatprep.subr.bf16.mxu0 0
      %1319 = vmatpush2.bf16.msra.mxu0 0
      %1320 = vmatprep.subr.bf16.mxu0 0
      %1321 = vmatpush2.bf16.msra.mxu0 %v1280
      %1322 = vmatprep.subr.bf16.mxu0 0
      %1323 = vmatpush2.bf16.msra.mxu0 %v1279
      %1324 = vmatprep.subr.bf16.mxu0 0
      %1325 = vmatpush2.bf16.msra.mxu0 %v1278
      %1326 = vmatprep.subr.bf16.mxu0 0
      %1327 = vmatpush2.bf16.msra.mxu0 %v1277
      %1328 = vmatprep.mubr.bf16.mxu0 %v1294
      %1329 = vmatmul.mubr.bf16.gmra.mxu0 %v939
      %v1330 = vpop.f32.mrf.mxu0
      %v1331 = vadd.f32 %v1159, %v1330
      %v1332 = vpop.f32.mrf.mxu0
      %v1333 = vpop.f32.mrf.mxu0
      %v1334 = vadd.f32 %v1162, %v1333
      %v1335 = vpop.f32.mrf.mxu0
      %1336 = vmatprep.mubr.bf16.mxu0 %v1101
      %1337 = vmatmul.mubr.bf16.gmra.mxu0 %v943
      %v1338 = vpop.f32.mrf.mxu0
      %v1339 = vadd.f32 %v1167, %v1338
      %v1340 = vpop.f32.mrf.mxu0
      %v1341 = vpop.f32.mrf.mxu0
      %v1342 = vadd.f32 %v1170, %v1341
      %v1343 = vpop.f32.mrf.mxu0
      %1344 = vmatprep.mubr.bf16.mxu0 %v1104
      %1345 = vmatmul.mubr.bf16.gmra.mxu0 %v947
      %v1346 = vpop.f32.mrf.mxu0
      %v1347 = vadd.f32 %v1175, %v1346
      %v1348 = vpop.f32.mrf.mxu0
      %v1349 = vpop.f32.mrf.mxu0
      %v1350 = vadd.f32 %v1178, %v1349
      %v1351 = vpop.f32.mrf.mxu0
      %1352 = vmatprep.mubr.bf16.mxu0 %v1107
      %1353 = vmatmul.mubr.bf16.gmra.mxu0 %v951
      %v1354 = vpop.f32.mrf.mxu0
      %v1355 = vadd.f32 %v1183, %v1354
      %v1356 = vpop.f32.mrf.mxu0
      %v1357 = vpop.f32.mrf.mxu0
      %v1358 = vadd.f32 %v1186, %v1357
      %v1359 = vpop.f32.mrf.mxu0
      %1360 = vmatprep.mubr.bf16.mxu0 %v1110
      %1361 = vmatmul.mubr.bf16.gmra.mxu0 %v955
      %v1362 = vpop.f32.mrf.mxu0
      %v1363 = vadd.f32 %v1191, %v1362
      %v1364 = vpop.f32.mrf.mxu0
      %v1365 = vpop.f32.mrf.mxu0
      %v1366 = vadd.f32 %v1194, %v1365
      %v1367 = vpop.f32.mrf.mxu0
      %1368 = vmatprep.mubr.bf16.mxu0 %v1113
      %1369 = vmatmul.mubr.bf16.gmra.mxu0 %v959
      %v1370 = vpop.f32.mrf.mxu0
      %v1371 = vadd.f32 %v1199, %v1370
      %v1372 = vpop.f32.mrf.mxu0
      %v1373 = vpop.f32.mrf.mxu0
      %v1374 = vadd.f32 %v1202, %v1373
      %v1375 = vpop.f32.mrf.mxu0
      %1376 = vmatprep.mubr.bf16.mxu0 %v1116
      %1377 = vmatmul.mubr.bf16.gmra.mxu0 %v963
      %v1378 = vpop.f32.mrf.mxu0
      %v1379 = vadd.f32 %v1207, %v1378
      %v1380 = vpop.f32.mrf.mxu0
      %v1381 = vpop.f32.mrf.mxu0
      %v1382 = vadd.f32 %v1210, %v1381
      %v1383 = vpop.f32.mrf.mxu0
      %1384 = vmatprep.mubr.bf16.mxu0 %v1119
      %1385 = vmatmul.mubr.bf16.gmra.mxu0 %v967
      %v1386 = vpop.f32.mrf.mxu0
      %v1387 = vadd.f32 %v1215, %v1386
      %v1388 = vpop.f32.mrf.mxu0
      %v1389 = vpop.f32.mrf.mxu0
      %v1390 = vadd.f32 %v1218, %v1389
      %v1391 = vpop.f32.mrf.mxu0
      %1392 = vdwg.mxu0
      %v1393 = vpack.c.bf16 %v827, %v837
      %v1394 = vpack.c.bf16 %v783, %v782
      %v1395 = vpack.c.bf16 %v878, %v888
      %1397 = vrot.lane.b32.xlu0 %v1394, 64
      %v1398 = vpop.permute.xlu0 %1397
      %v1401 = vsel %vm226, %v1393, %v1398
      %s1403 = scalar_lea.vmem %s3, 192
      %v1404 = vld [vmem:[%s1403] sm:$0xf]
      %v1405 = vld [vmem:[%s1403 + $0x4] sm:$0xf]
      %v1406 = vld [vmem:[%s1403 + $0x8] sm:$0xf]
      %v1407 = vld [vmem:[%s1403 + $0xc] sm:$0xf]
      %v1408 = vld [vmem:[%s1403 + $0x10] sm:$0xf]
      %v1409 = vld [vmem:[%s1403 + $0x14] sm:$0xf]
      %v1410 = vld [vmem:[%s1403 + $0x18] sm:$0xf]
      %v1411 = vld [vmem:[%s1403 + $0x1c] sm:$0xf]
      %v1412 = vld [vmem:[%s1403 + $0x20] sm:$0xf]
      %v1413 = vld [vmem:[%s1403 + $0x24] sm:$0xf]
      %v1414 = vld [vmem:[%s1403 + $0x28] sm:$0xf]
      %v1415 = vld [vmem:[%s1403 + $0x2c] sm:$0xf]
      %v1416 = vld [vmem:[%s1403 + $0x30] sm:$0xf]
      %v1417 = vld [vmem:[%s1403 + $0x34] sm:$0xf]
      %v1418 = vld [vmem:[%s1403 + $0x38] sm:$0xf]
      %v1419 = vld [vmem:[%s1403 + $0x3c] sm:$0xf]
      %v1420 = vld [vmem:[%s1403 + $0x40] sm:$0xf]
      %v1421 = vld [vmem:[%s1403 + $0x44] sm:$0xf]
      %v1422 = vld [vmem:[%s1403 + $0x48] sm:$0xf]
      %v1423 = vld [vmem:[%s1403 + $0x4c] sm:$0xf]
      %v1424 = vld [vmem:[%s1403 + $0x50] sm:$0xf]
      %v1425 = vld [vmem:[%s1403 + $0x54] sm:$0xf]
      %v1426 = vld [vmem:[%s1403 + $0x58] sm:$0xf]
      %v1427 = vld [vmem:[%s1403 + $0x5c] sm:$0xf]
      %v1452 = vunpack.c.l.b16 %v1404
      %v1453 = vunpack.c.l.b16 %v1405
      %v1454 = vunpack.c.l.b16 %v1406
      %v1455 = vunpack.c.l.b16 %v1407
      %v1456 = vunpack.c.l.b16 %v1408
      %v1457 = vunpack.c.l.b16 %v1409
      %v1458 = vunpack.c.l.b16 %v1410
      %v1459 = vunpack.c.l.b16 %v1411
      %v1460 = vunpack.c.l.b16 %v1412
      %v1461 = vunpack.c.l.b16 %v1413
      %v1462 = vunpack.c.l.b16 %v1414
      %v1463 = vunpack.c.l.b16 %v1415
      %v1464 = vunpack.c.l.b16 %v1416
      %v1465 = vunpack.c.l.b16 %v1417
      %v1466 = vunpack.c.l.b16 %v1418
      %v1467 = vunpack.c.l.b16 %v1419
      %v1468 = vunpack.c.l.b16 %v1420
      %v1469 = vunpack.c.l.b16 %v1421
      %v1470 = vunpack.c.l.b16 %v1422
      %v1471 = vunpack.c.l.b16 %v1423
      %v1472 = vunpack.c.l.b16 %v1424
      %v1473 = vunpack.c.l.b16 %v1425
      %v1474 = vunpack.c.l.b16 %v1426
      %v1475 = vunpack.c.l.b16 %v1427
      %v1476 = vpack.c.b16 %v1453, %v1452
      %v1477 = vpack.c.b16 %v1455, %v1454
      %v1478 = vpack.c.b16 %v1457, %v1456
      %v1479 = vpack.c.b16 %v1459, %v1458
      %v1480 = vpack.c.b16 %v1461, %v1460
      %v1481 = vpack.c.b16 %v1463, %v1462
      %v1482 = vpack.c.b16 %v1465, %v1464
      %v1483 = vpack.c.b16 %v1467, %v1466
      %v1484 = vpack.c.b16 %v1469, %v1468
      %v1485 = vpack.c.b16 %v1471, %v1470
      %v1486 = vpack.c.b16 %v1473, %v1472
      %v1487 = vpack.c.b16 %v1475, %v1474
      %v1501 = vsel %vm226, %v1395, 0
      %1503 = vmatprep.subr.bf16.mxu0 0
      %1504 = vmatpush1.bf16.msra.mxu0 %v1483
      %1505 = vmatprep.subr.bf16.mxu0 0
      %1506 = vmatpush1.bf16.msra.mxu0 %v1482
      %1507 = vmatprep.subr.bf16.mxu0 0
      %1508 = vmatpush1.bf16.msra.mxu0 %v1481
      %1509 = vmatprep.subr.bf16.mxu0 0
      %1510 = vmatpush1.bf16.msra.mxu0 %v1480
      %1511 = vmatprep.subr.bf16.mxu0 0
      %1512 = vmatpush1.bf16.msra.mxu0 %v1479
      %1513 = vmatprep.subr.bf16.mxu0 0
      %1514 = vmatpush1.bf16.msra.mxu0 %v1478
      %1515 = vmatprep.subr.bf16.mxu0 0
      %1516 = vmatpush1.bf16.msra.mxu0 %v1477
      %1517 = vmatprep.subr.bf16.mxu0 0
      %1518 = vmatpush1.bf16.msra.mxu0 %v1476
      %1519 = vmatprep.subr.bf16.mxu0 0
      %1520 = vmatpush2.bf16.msra.mxu0 0
      %1521 = vmatprep.subr.bf16.mxu0 0
      %1522 = vmatpush2.bf16.msra.mxu0 0
      %1523 = vmatprep.subr.bf16.mxu0 0
      %1524 = vmatpush2.bf16.msra.mxu0 0
      %1525 = vmatprep.subr.bf16.mxu0 0
      %1526 = vmatpush2.bf16.msra.mxu0 0
      %1527 = vmatprep.subr.bf16.mxu0 0
      %1528 = vmatpush2.bf16.msra.mxu0 %v1487
      %1529 = vmatprep.subr.bf16.mxu0 0
      %1530 = vmatpush2.bf16.msra.mxu0 %v1486
      %1531 = vmatprep.subr.bf16.mxu0 0
      %1532 = vmatpush2.bf16.msra.mxu0 %v1485
      %1533 = vmatprep.subr.bf16.mxu0 0
      %1534 = vmatpush2.bf16.msra.mxu0 %v1484
      %1535 = vmatprep.mubr.bf16.mxu0 %v1104
      %1536 = vmatmul.mubr.bf16.gmra.mxu0 %v947
      %v1537 = vpop.f32.mrf.mxu0
      %v1538 = vadd.f32 0.0, %v1537
      %v1539 = vpop.f32.mrf.mxu0
      %v1540 = vpop.f32.mrf.mxu0
      %v1541 = vadd.f32 0.0, %v1540
      %v1542 = vpop.f32.mrf.mxu0
      %1543 = vmatprep.mubr.bf16.mxu0 %v1107
      %1544 = vmatmul.mubr.bf16.gmra.mxu0 %v951
      %v1545 = vpop.f32.mrf.mxu0
      %v1546 = vadd.f32 0.0, %v1545
      %v1547 = vpop.f32.mrf.mxu0
      %v1548 = vpop.f32.mrf.mxu0
      %v1549 = vadd.f32 0.0, %v1548
      %v1550 = vpop.f32.mrf.mxu0
      %1551 = vmatprep.mubr.bf16.mxu0 %v1110
      %1552 = vmatmul.mubr.bf16.gmra.mxu0 %v955
      %v1553 = vpop.f32.mrf.mxu0
      %v1554 = vadd.f32 0.0, %v1553
      %v1555 = vpop.f32.mrf.mxu0
      %v1556 = vpop.f32.mrf.mxu0
      %v1557 = vadd.f32 0.0, %v1556
      %v1558 = vpop.f32.mrf.mxu0
      %1559 = vmatprep.mubr.bf16.mxu0 %v1113
      %1560 = vmatmul.mubr.bf16.gmra.mxu0 %v959
      %v1561 = vpop.f32.mrf.mxu0
      %v1562 = vadd.f32 0.0, %v1561
      %v1563 = vpop.f32.mrf.mxu0
      %v1564 = vpop.f32.mrf.mxu0
      %v1565 = vadd.f32 0.0, %v1564
      %v1566 = vpop.f32.mrf.mxu0
      %1567 = vmatprep.mubr.bf16.mxu0 %v1116
      %1568 = vmatmul.mubr.bf16.gmra.mxu0 %v963
      %v1569 = vpop.f32.mrf.mxu0
      %v1570 = vadd.f32 0.0, %v1569
      %v1571 = vpop.f32.mrf.mxu0
      %v1572 = vpop.f32.mrf.mxu0
      %v1573 = vadd.f32 0.0, %v1572
      %v1574 = vpop.f32.mrf.mxu0
      %1575 = vmatprep.mubr.bf16.mxu0 %v1119
      %1576 = vmatmul.mubr.bf16.gmra.mxu0 %v967
      %v1577 = vpop.f32.mrf.mxu0
      %v1578 = vadd.f32 0.0, %v1577
      %v1579 = vpop.f32.mrf.mxu0
      %v1580 = vpop.f32.mrf.mxu0
      %v1581 = vadd.f32 0.0, %v1580
      %v1582 = vpop.f32.mrf.mxu0
      %1583 = vmatprep.mubr.bf16.mxu0 %v1122
      %1584 = vmatmul.mubr.bf16.gmra.mxu0 %v1001
      %v1585 = vpop.f32.mrf.mxu0
      %v1586 = vadd.f32 0.0, %v1585
      %v1587 = vpop.f32.mrf.mxu0
      %v1588 = vpop.f32.mrf.mxu0
      %v1589 = vadd.f32 0.0, %v1588
      %v1590 = vpop.f32.mrf.mxu0
      %1591 = vmatprep.mubr.bf16.mxu0 %v1501
      %1592 = vmatmul.mubr.bf16.gmra.mxu0 %v1401
      %v1593 = vpop.f32.mrf.mxu0
      %v1594 = vadd.f32 0.0, %v1593
      %v1595 = vpop.f32.mrf.mxu0
      %v1596 = vpop.f32.mrf.mxu0
      %v1597 = vadd.f32 0.0, %v1596
      %v1598 = vpop.f32.mrf.mxu0
      %1599 = vdwg.mxu0
      %v1600 = vadd.f32 %v1331, %v1538
      %v1601 = vadd.f32 %v1334, %v1541
      %v1602 = vadd.f32 %v1339, %v1546
      %v1603 = vadd.f32 %v1342, %v1549
      %v1604 = vadd.f32 %v1347, %v1554
      %v1605 = vadd.f32 %v1350, %v1557
      %v1606 = vadd.f32 %v1355, %v1562
      %v1607 = vadd.f32 %v1358, %v1565
      %v1608 = vadd.f32 %v1363, %v1570
      %v1609 = vadd.f32 %v1366, %v1573
      %v1610 = vadd.f32 %v1371, %v1578
      %v1611 = vadd.f32 %v1374, %v1581
      %v1612 = vadd.f32 %v1379, %v1586
      %v1613 = vadd.f32 %v1382, %v1589
      %v1614 = vadd.f32 %v1387, %v1594
      %v1615 = vadd.f32 %v1390, %v1597
      %v1617 = vlaneseq
      %v1618 = vshrl.u32 %v1617, 7
      %v1619 = vsub.s32 0, %v1618
      %v1620 = vrot.slane %v752, %v1619
      %v1622 = vadd.f32 %v1600, %v1620
      %v1623 = vadd.f32 %v1601, %v1620
      %v1624 = vadd.f32 %v1602, %v1620
      %v1625 = vadd.f32 %v1603, %v1620
      %v1626 = vadd.f32 %v1604, %v1620
      %v1627 = vadd.f32 %v1605, %v1620
      %v1628 = vadd.f32 %v1606, %v1620
      %v1629 = vadd.f32 %v1607, %v1620
      %v1630 = vadd.f32 %v1608, %v1620
      %v1631 = vadd.f32 %v1609, %v1620
      %v1632 = vadd.f32 %v1610, %v1620
      %v1633 = vadd.f32 %v1611, %v1620
      %v1634 = vadd.f32 %v1612, %v1620
      %v1635 = vadd.f32 %v1613, %v1620
      %v1636 = vadd.f32 %v1614, %v1620
      %v1637 = vadd.f32 %v1615, %v1620
      %v1638 = vmul.f32 %v1622, 0.01
      %v1639 = vmul.f32 %v1623, 0.01
      %v1640 = vmul.f32 %v1624, 0.01
      %v1641 = vmul.f32 %v1625, 0.01
      %v1642 = vmul.f32 %v1626, 0.01
      %v1643 = vmul.f32 %v1627, 0.01
      %v1644 = vmul.f32 %v1628, 0.01
      %v1645 = vmul.f32 %v1629, 0.01
      %v1646 = vmul.f32 %v1630, 0.01
      %v1647 = vmul.f32 %v1631, 0.01
      %v1648 = vmul.f32 %v1632, 0.01
      %v1649 = vmul.f32 %v1633, 0.01
      %v1650 = vmul.f32 %v1634, 0.01
      %v1651 = vmul.f32 %v1635, 0.01
      %v1652 = vmul.f32 %v1636, 0.01
      %v1653 = vmul.f32 %v1637, 0.01
      %v1654 = vmax.f32 %v1622, %v1638
      %v1655 = vmax.f32 %v1623, %v1639
      %v1656 = vmax.f32 %v1624, %v1640
      %v1657 = vmax.f32 %v1625, %v1641
      %v1658 = vmax.f32 %v1626, %v1642
      %v1659 = vmax.f32 %v1627, %v1643
      %v1660 = vmax.f32 %v1628, %v1644
      %v1661 = vmax.f32 %v1629, %v1645
      %v1662 = vmax.f32 %v1630, %v1646
      %v1663 = vmax.f32 %v1631, %v1647
      %v1664 = vmax.f32 %v1632, %v1648
      %v1665 = vmax.f32 %v1633, %v1649
      %v1666 = vmax.f32 %v1634, %v1650
      %v1667 = vmax.f32 %v1635, %v1651
      %v1668 = vmax.f32 %v1636, %v1652
      %v1669 = vmax.f32 %v1637, %v1653
      %v1670 = vld [vmem:[%s270] sm:$0xf]
      %v1671 = vld [vmem:[%s270 + $0x4] sm:$0xf]
      %v1672 = vld [vmem:[%s270 + $0x8] sm:$0xf]
      %v1673 = vld [vmem:[%s270 + $0xc] sm:$0xf]
      %v1674 = vld [vmem:[%s270 + $0x10] sm:$0xf]
      %v1675 = vld [vmem:[%s270 + $0x14] sm:$0xf]
      %v1676 = vld [vmem:[%s270 + $0x18] sm:$0xf]
      %v1677 = vld [vmem:[%s270 + $0x1c] sm:$0xf]
      %v1678 = vld [vmem:[%s270 + $0x20] sm:$0xf]
      %v1679 = vld [vmem:[%s270 + $0x24] sm:$0xf]
      %v1680 = vld [vmem:[%s270 + $0x28] sm:$0xf]
      %v1681 = vld [vmem:[%s270 + $0x2c] sm:$0xf]
      %v1682 = vld [vmem:[%s270 + $0x30] sm:$0xf]
      %v1683 = vld [vmem:[%s270 + $0x34] sm:$0xf]
      %v1684 = vld [vmem:[%s270 + $0x38] sm:$0xf]
      %v1685 = vld [vmem:[%s270 + $0x3c] sm:$0xf]
      %v1686 = vunpack.c.l.bf16 %v1670
      %v1687 = vunpack.c.l.bf16 %v1671
      %v1688 = vunpack.c.l.bf16 %v1672
      %v1689 = vunpack.c.l.bf16 %v1673
      %v1690 = vunpack.c.l.bf16 %v1674
      %v1691 = vunpack.c.l.bf16 %v1675
      %v1692 = vunpack.c.l.bf16 %v1676
      %v1693 = vunpack.c.l.bf16 %v1677
      %v1694 = vunpack.c.l.bf16 %v1678
      %v1695 = vunpack.c.l.bf16 %v1679
      %v1696 = vunpack.c.l.bf16 %v1680
      %v1697 = vunpack.c.l.bf16 %v1681
      %v1698 = vunpack.c.l.bf16 %v1682
      %v1699 = vunpack.c.l.bf16 %v1683
      %v1700 = vunpack.c.l.bf16 %v1684
      %v1701 = vunpack.c.l.bf16 %v1685
      %v1702 = vadd.f32 %v1654, %v1686
      %v1703 = vadd.f32 %v1655, %v1687
      %v1704 = vadd.f32 %v1656, %v1688
      %v1705 = vadd.f32 %v1657, %v1689
      %v1706 = vadd.f32 %v1658, %v1690
      %v1707 = vadd.f32 %v1659, %v1691
      %v1708 = vadd.f32 %v1660, %v1692
      %v1709 = vadd.f32 %v1661, %v1693
      %v1710 = vadd.f32 %v1662, %v1694
      %v1711 = vadd.f32 %v1663, %v1695
      %v1712 = vadd.f32 %v1664, %v1696
      %v1713 = vadd.f32 %v1665, %v1697
      %v1714 = vadd.f32 %v1666, %v1698
      %v1715 = vadd.f32 %v1667, %v1699
      %v1716 = vadd.f32 %v1668, %v1700
      %v1717 = vadd.f32 %v1669, %v1701
      %v1718 = vpack.c.bf16 %v1703, %v1702
      %v1719 = vpack.c.bf16 %v1705, %v1704
      %v1720 = vpack.c.bf16 %v1707, %v1706
      %v1721 = vpack.c.bf16 %v1709, %v1708
      %v1722 = vpack.c.bf16 %v1711, %v1710
      %v1723 = vpack.c.bf16 %v1713, %v1712
      %v1724 = vpack.c.bf16 %v1715, %v1714
      %v1725 = vpack.c.bf16 %v1717, %v1716
      %v1734 = vunpack.c.l.b16 %v1718
      %v1735 = vunpack.c.h.b16 %v1718
      %v1736 = vunpack.c.l.b16 %v1719
      %v1737 = vunpack.c.h.b16 %v1719
      %v1738 = vunpack.c.l.b16 %v1720
      %v1739 = vunpack.c.h.b16 %v1720
      %v1740 = vunpack.c.l.b16 %v1721
      %v1741 = vunpack.c.h.b16 %v1721
      %v1742 = vunpack.c.l.b16 %v1722
      %v1743 = vunpack.c.h.b16 %v1722
      %v1744 = vunpack.c.l.b16 %v1723
      %v1745 = vunpack.c.h.b16 %v1723
      %v1746 = vunpack.c.l.b16 %v1724
      %v1747 = vunpack.c.h.b16 %v1724
      %v1748 = vunpack.c.l.b16 %v1725
      %v1749 = vunpack.c.h.b16 %v1725
      %v1750 = vpack.c.b16 %v1734, %v1734
      %v1751 = vpack.c.b16 %v1735, %v1735
      %v1752 = vpack.c.b16 %v1736, %v1736
      %v1753 = vpack.c.b16 %v1737, %v1737
      %v1754 = vpack.c.b16 %v1738, %v1738
      %v1755 = vpack.c.b16 %v1739, %v1739
      %v1756 = vpack.c.b16 %v1740, %v1740
      %v1757 = vpack.c.b16 %v1741, %v1741
      %v1758 = vpack.c.b16 %v1742, %v1742
      %v1759 = vpack.c.b16 %v1743, %v1743
      %v1760 = vpack.c.b16 %v1744, %v1744
      %v1761 = vpack.c.b16 %v1745, %v1745
      %v1762 = vpack.c.b16 %v1746, %v1746
      %v1763 = vpack.c.b16 %v1747, %v1747
      %v1764 = vpack.c.b16 %v1748, %v1748
      %v1765 = vpack.c.b16 %v1749, %v1749
      %s1782 = smul.addr %s268, 4
      %s1783 = scalar_lea.vmem %s224, %s1782
      %1784 = vst [vmem:[%s1783] sm:$0xf] %v1750
      %1785 = vst [vmem:[%s1783 + $0x4] sm:$0xf] %v1751
      %1786 = vst [vmem:[%s1783 + $0x8] sm:$0xf] %v1752
      %1787 = vst [vmem:[%s1783 + $0xc] sm:$0xf] %v1753
      %1788 = vst [vmem:[%s1783 + $0x10] sm:$0xf] %v1754
      %1789 = vst [vmem:[%s1783 + $0x14] sm:$0xf] %v1755
      %1790 = vst [vmem:[%s1783 + $0x18] sm:$0xf] %v1756
      %1791 = vst [vmem:[%s1783 + $0x1c] sm:$0xf] %v1757
      %1792 = vst [vmem:[%s1783 + $0x20] sm:$0xf] %v1758
      %1793 = vst [vmem:[%s1783 + $0x24] sm:$0xf] %v1759
      %1794 = vst [vmem:[%s1783 + $0x28] sm:$0xf] %v1760
      %1795 = vst [vmem:[%s1783 + $0x2c] sm:$0xf] %v1761
      %1796 = vst [vmem:[%s1783 + $0x30] sm:$0xf] %v1762
      %1797 = vst [vmem:[%s1783 + $0x34] sm:$0xf] %v1763
      %1798 = vst [vmem:[%s1783 + $0x38] sm:$0xf] %v1764
      %1799 = vst [vmem:[%s1783 + $0x3c] sm:$0xf] %v1765
      %s1800 = smul.u32 8, 24
      %s1801 = scalar_lea.vmem [#allocation2], %s1800
      %v1802 = vld [vmem:[%s1801] sm:$0xff]
      %v1803 = vld [vmem:[%s1801 + $0x8] sm:$0xff]
      %v1804 = vld [vmem:[%s1801 + $0x10] sm:$0xff]
      %v1805 = vld [vmem:[%s1801 + $0x18] sm:$0xff]
      %v1806 = vld [vmem:[%s1801 + $0x20] sm:$0xff]
      %v1807 = vld [vmem:[%s1801 + $0x28] sm:$0xff]
      %v1808 = vld [vmem:[%s1801 + $0x30] sm:$0xff]
      %v1809 = vld [vmem:[%s1801 + $0x38] sm:$0xff]
      %v1810 = vld [vmem:[%s1801 + $0x40] sm:$0xff]
      %v1811 = vld [vmem:[%s1801 + $0x48] sm:$0xff]
      %v1812 = vld [vmem:[%s1801 + $0x50] sm:$0xff]
      %v1813 = vld [vmem:[%s1801 + $0x58] sm:$0xff]
      %v1814 = vld [vmem:[%s1801 + $0x60] sm:$0xff]
      %v1815 = vld [vmem:[%s1801 + $0x68] sm:$0xff]
      %v1816 = vld [vmem:[%s1801 + $0x70] sm:$0xff]
      %v1817 = vld [vmem:[%s1801 + $0x78] sm:$0xff]
      %v1818 = vld [vmem:[%s1801 + $0x80] sm:$0xff]
      %v1819 = vld [vmem:[%s1801 + $0x88] sm:$0xff]
      %v1820 = vld [vmem:[%s1801 + $0x90] sm:$0xff]
      %v1821 = vld [vmem:[%s1801 + $0x98] sm:$0xff]
      %v1822 = vld [vmem:[%s1801 + $0xa0] sm:$0xff]
      %v1823 = vld [vmem:[%s1801 + $0xa8] sm:$0xff]
      %v1824 = vld [vmem:[%s1801 + $0xb0] sm:$0xff]
      %v1825 = vld [vmem:[%s1801 + $0xb8] sm:$0xff]
      %v1826 = vld [vmem:[%s1801 + $0xc0] sm:$0xff]
      %v1827 = vld [vmem:[%s1801 + $0xc8] sm:$0xff]
      %v1828 = vld [vmem:[%s1801 + $0xd0] sm:$0xff]
      %v1829 = vld [vmem:[%s1801 + $0xd8] sm:$0xff]
      %v1830 = vld [vmem:[%s1801 + $0xe0] sm:$0xff]
      %v1831 = vld [vmem:[%s1801 + $0xe8] sm:$0xff]
      %v1832 = vrot.slane %v1802, 7
      %v1833 = vrot.slane %v1805, 7
      %v1834 = vrot.slane %v1808, 7
      %v1835 = vrot.slane %v1811, 7
      %v1836 = vrot.slane %v1814, 7
      %v1837 = vrot.slane %v1817, 7
      %v1838 = vrot.slane %v1820, 7
      %v1839 = vrot.slane %v1823, 7
      %v1840 = vrot.slane %v1826, 7
      %v1841 = vrot.slane %v1829, 7
      %v1842 = vrot.slane %v1803, 7
      %v1843 = vrot.slane %v1806, 7
      %v1844 = vrot.slane %v1809, 7
      %v1845 = vrot.slane %v1812, 7
      %v1846 = vrot.slane %v1815, 7
      %v1847 = vrot.slane %v1818, 7
      %v1848 = vrot.slane %v1821, 7
      %v1849 = vrot.slane %v1824, 7
      %v1850 = vrot.slane %v1827, 7
      %v1851 = vrot.slane %v1830, 7
      %v1852 = vrot.slane %v1804, 7
      %v1853 = vrot.slane %v1807, 7
      %v1854 = vrot.slane %v1810, 7
      %v1855 = vrot.slane %v1813, 7
      %v1856 = vrot.slane %v1816, 7
      %v1857 = vrot.slane %v1819, 7
      %v1858 = vrot.slane %v1822, 7
      %v1859 = vrot.slane %v1825, 7
      %v1860 = vrot.slane %v1828, 7
      %v1861 = vrot.slane %v1831, 7
      %v1862 = vsel %vm817, %v1832, %v1842
      %v1863 = vsel %vm817, %v1833, %v1843
      %v1864 = vsel %vm817, %v1834, %v1844
      %v1865 = vsel %vm817, %v1835, %v1845
      %v1866 = vsel %vm817, %v1836, %v1846
      %v1867 = vsel %vm817, %v1837, %v1847
      %v1868 = vsel %vm817, %v1838, %v1848
      %v1869 = vsel %vm817, %v1839, %v1849
      %v1870 = vsel %vm817, %v1840, %v1850
      %v1871 = vsel %vm817, %v1841, %v1851
      %v1872 = vsel %vm817, %v1852, %v1832
      %v1873 = vsel %vm817, %v1853, %v1833
      %v1874 = vsel %vm817, %v1854, %v1834
      %v1875 = vsel %vm817, %v1855, %v1835
      %v1876 = vsel %vm817, %v1856, %v1836
      %v1877 = vsel %vm817, %v1857, %v1837
      %v1878 = vsel %vm817, %v1858, %v1838
      %v1879 = vsel %vm817, %v1859, %v1839
      %v1880 = vsel %vm817, %v1860, %v1840
      %v1881 = vsel %vm817, %v1861, %v1841
      %v1882 = vrot.slane %v1802, 1
      %v1883 = vrot.slane %v1805, 1
      %v1884 = vrot.slane %v1808, 1
      %v1885 = vrot.slane %v1811, 1
      %v1886 = vrot.slane %v1814, 1
      %v1887 = vrot.slane %v1817, 1
      %v1888 = vrot.slane %v1820, 1
      %v1889 = vrot.slane %v1823, 1
      %v1890 = vrot.slane %v1826, 1
      %v1891 = vrot.slane %v1829, 1
      %v1892 = vrot.slane %v1803, 1
      %v1893 = vrot.slane %v1806, 1
      %v1894 = vrot.slane %v1809, 1
      %v1895 = vrot.slane %v1812, 1
      %v1896 = vrot.slane %v1815, 1
      %v1897 = vrot.slane %v1818, 1
      %v1898 = vrot.slane %v1821, 1
      %v1899 = vrot.slane %v1824, 1
      %v1900 = vrot.slane %v1827, 1
      %v1901 = vrot.slane %v1830, 1
      %v1902 = vrot.slane %v1804, 1
      %v1903 = vrot.slane %v1807, 1
      %v1904 = vrot.slane %v1810, 1
      %v1905 = vrot.slane %v1813, 1
      %v1906 = vrot.slane %v1816, 1
      %v1907 = vrot.slane %v1819, 1
      %v1908 = vrot.slane %v1822, 1
      %v1909 = vrot.slane %v1825, 1
      %v1910 = vrot.slane %v1828, 1
      %v1911 = vrot.slane %v1831, 1
      %v1912 = vsel %vm868, %v1892, %v1902
      %v1913 = vsel %vm868, %v1893, %v1903
      %v1914 = vsel %vm868, %v1894, %v1904
      %v1915 = vsel %vm868, %v1895, %v1905
      %v1916 = vsel %vm868, %v1896, %v1906
      %v1917 = vsel %vm868, %v1897, %v1907
      %v1918 = vsel %vm868, %v1898, %v1908
      %v1919 = vsel %vm868, %v1899, %v1909
      %v1920 = vsel %vm868, %v1900, %v1910
      %v1921 = vsel %vm868, %v1901, %v1911
      %v1922 = vsel %vm868, %v1882, %v1892
      %v1923 = vsel %vm868, %v1883, %v1893
      %v1924 = vsel %vm868, %v1884, %v1894
      %v1925 = vsel %vm868, %v1885, %v1895
      %v1926 = vsel %vm868, %v1886, %v1896
      %v1927 = vsel %vm868, %v1887, %v1897
      %v1928 = vsel %vm868, %v1888, %v1898
      %v1929 = vsel %vm868, %v1889, %v1899
      %v1930 = vsel %vm868, %v1890, %v1900
      %v1931 = vsel %vm868, %v1891, %v1901
      %v1932 = vpack.c.bf16 %v1862, %v1872
      %v1933 = vpack.c.bf16 %v1863, %v1873
      %v1934 = vpack.c.bf16 %v1864, %v1874
      %v1935 = vpack.c.bf16 %v1865, %v1875
      %v1936 = vpack.c.bf16 %v1866, %v1876
      %v1937 = vpack.c.bf16 %v1867, %v1877
      %v1938 = vpack.c.bf16 %v1868, %v1878
      %v1939 = vpack.c.bf16 %v1869, %v1879
      %v1940 = vpack.c.bf16 %v1803, %v1802
      %v1941 = vpack.c.bf16 %v1806, %v1805
      %v1942 = vpack.c.bf16 %v1809, %v1808
      %v1943 = vpack.c.bf16 %v1812, %v1811
      %v1944 = vpack.c.bf16 %v1815, %v1814
      %v1945 = vpack.c.bf16 %v1818, %v1817
      %v1946 = vpack.c.bf16 %v1821, %v1820
      %v1947 = vpack.c.bf16 %v1824, %v1823
      %v1948 = vpack.c.bf16 %v1912, %v1922
      %v1949 = vpack.c.bf16 %v1913, %v1923
      %v1950 = vpack.c.bf16 %v1914, %v1924
      %v1951 = vpack.c.bf16 %v1915, %v1925
      %v1952 = vpack.c.bf16 %v1916, %v1926
      %v1953 = vpack.c.bf16 %v1917, %v1927
      %v1954 = vpack.c.bf16 %v1918, %v1928
      %v1955 = vpack.c.bf16 %v1919, %v1929
      %1964 = vrot.lane.b32.xlu0 %v1940, 64
      %v1965 = vpop.permute.xlu0 %1964
      %1966 = vrot.lane.b32.xlu0 %v1941, 64
      %v1967 = vpop.permute.xlu0 %1966
      %1968 = vrot.lane.b32.xlu0 %v1942, 64
      %v1969 = vpop.permute.xlu0 %1968
      %1970 = vrot.lane.b32.xlu0 %v1943, 64
      %v1971 = vpop.permute.xlu0 %1970
      %1972 = vrot.lane.b32.xlu0 %v1944, 64
      %v1973 = vpop.permute.xlu0 %1972
      %1974 = vrot.lane.b32.xlu0 %v1945, 64
      %v1975 = vpop.permute.xlu0 %1974
      %1976 = vrot.lane.b32.xlu0 %v1946, 64
      %v1977 = vpop.permute.xlu0 %1976
      %1978 = vrot.lane.b32.xlu0 %v1947, 64
      %v1979 = vpop.permute.xlu0 %1978
      %v1982 = vsel %vm226, %v1932, %v1965
      %v1986 = vsel %vm226, %v1933, %v1967
      %v1990 = vsel %vm226, %v1934, %v1969
      %v1994 = vsel %vm226, %v1935, %v1971
      %v1998 = vsel %vm226, %v1936, %v1973
      %v2002 = vsel %vm226, %v1937, %v1975
      %v2006 = vsel %vm226, %v1938, %v1977
      %v2010 = vsel %vm226, %v1939, %v1979
      %v2012 = vld [vmem:[%s3] sm:$0xf]
      %v2013 = vld [vmem:[%s3 + $0x4] sm:$0xf]
      %v2014 = vld [vmem:[%s3 + $0x8] sm:$0xf]
      %v2015 = vld [vmem:[%s3 + $0xc] sm:$0xf]
      %v2016 = vld [vmem:[%s3 + $0x10] sm:$0xf]
      %v2017 = vld [vmem:[%s3 + $0x14] sm:$0xf]
      %v2018 = vld [vmem:[%s3 + $0x18] sm:$0xf]
      %v2019 = vld [vmem:[%s3 + $0x1c] sm:$0xf]
      %v2020 = vld [vmem:[%s3 + $0x20] sm:$0xf]
      %v2021 = vld [vmem:[%s3 + $0x24] sm:$0xf]
      %v2022 = vld [vmem:[%s3 + $0x28] sm:$0xf]
      %v2023 = vld [vmem:[%s3 + $0x2c] sm:$0xf]
      %v2024 = vld [vmem:[%s3 + $0x30] sm:$0xf]
      %v2025 = vld [vmem:[%s3 + $0x34] sm:$0xf]
      %v2026 = vld [vmem:[%s3 + $0x38] sm:$0xf]
      %v2027 = vld [vmem:[%s3 + $0x3c] sm:$0xf]
      %v2028 = vld [vmem:[%s3 + $0x40] sm:$0xf]
      %v2029 = vld [vmem:[%s3 + $0x44] sm:$0xf]
      %v2030 = vld [vmem:[%s3 + $0x48] sm:$0xf]
      %v2031 = vld [vmem:[%s3 + $0x4c] sm:$0xf]
      %v2032 = vld [vmem:[%s3 + $0x50] sm:$0xf]
      %v2033 = vld [vmem:[%s3 + $0x54] sm:$0xf]
      %v2034 = vld [vmem:[%s3 + $0x58] sm:$0xf]
      %v2035 = vld [vmem:[%s3 + $0x5c] sm:$0xf]
      %v2036 = vpack.c.bf16 %v1870, %v1880
      %v2037 = vpack.c.bf16 %v1827, %v1826
      %v2038 = vpack.c.bf16 %v1920, %v1930
      %2040 = vrot.lane.b32.xlu0 %v2037, 64
      %v2041 = vpop.permute.xlu0 %2040
      %v2044 = vsel %vm226, %v2036, %v2041
      %v2046 = vld [vmem:[%s1003] sm:$0xf]
      %v2047 = vld [vmem:[%s1003 + $0x4] sm:$0xf]
      %v2048 = vld [vmem:[%s1003 + $0x8] sm:$0xf]
      %v2049 = vld [vmem:[%s1003 + $0xc] sm:$0xf]
      %v2050 = vld [vmem:[%s1003 + $0x10] sm:$0xf]
      %v2051 = vld [vmem:[%s1003 + $0x14] sm:$0xf]
      %v2052 = vld [vmem:[%s1003 + $0x18] sm:$0xf]
      %v2053 = vld [vmem:[%s1003 + $0x1c] sm:$0xf]
      %v2054 = vld [vmem:[%s1003 + $0x20] sm:$0xf]
      %v2055 = vld [vmem:[%s1003 + $0x24] sm:$0xf]
      %v2056 = vld [vmem:[%s1003 + $0x28] sm:$0xf]
      %v2057 = vld [vmem:[%s1003 + $0x2c] sm:$0xf]
      %v2058 = vld [vmem:[%s1003 + $0x30] sm:$0xf]
      %v2059 = vld [vmem:[%s1003 + $0x34] sm:$0xf]
      %v2060 = vld [vmem:[%s1003 + $0x38] sm:$0xf]
      %v2061 = vld [vmem:[%s1003 + $0x3c] sm:$0xf]
      %v2062 = vld [vmem:[%s1003 + $0x40] sm:$0xf]
      %v2063 = vld [vmem:[%s1003 + $0x44] sm:$0xf]
      %v2064 = vld [vmem:[%s1003 + $0x48] sm:$0xf]
      %v2065 = vld [vmem:[%s1003 + $0x4c] sm:$0xf]
      %v2066 = vld [vmem:[%s1003 + $0x50] sm:$0xf]
      %v2067 = vld [vmem:[%s1003 + $0x54] sm:$0xf]
      %v2068 = vld [vmem:[%s1003 + $0x58] sm:$0xf]
      %v2069 = vld [vmem:[%s1003 + $0x5c] sm:$0xf]
      %v2094 = vunpack.c.l.b16 %v2046
      %v2095 = vunpack.c.l.b16 %v2047
      %v2096 = vunpack.c.l.b16 %v2048
      %v2097 = vunpack.c.l.b16 %v2049
      %v2098 = vunpack.c.l.b16 %v2050
      %v2099 = vunpack.c.l.b16 %v2051
      %v2100 = vunpack.c.l.b16 %v2052
      %v2101 = vunpack.c.l.b16 %v2053
      %v2102 = vunpack.c.l.b16 %v2054
      %v2103 = vunpack.c.l.b16 %v2055
      %v2104 = vunpack.c.l.b16 %v2056
      %v2105 = vunpack.c.l.b16 %v2057
      %v2106 = vunpack.c.l.b16 %v2058
      %v2107 = vunpack.c.l.b16 %v2059
      %v2108 = vunpack.c.l.b16 %v2060
      %v2109 = vunpack.c.l.b16 %v2061
      %v2110 = vunpack.c.l.b16 %v2062
      %v2111 = vunpack.c.l.b16 %v2063
      %v2112 = vunpack.c.l.b16 %v2064
      %v2113 = vunpack.c.l.b16 %v2065
      %v2114 = vunpack.c.l.b16 %v2066
      %v2115 = vunpack.c.l.b16 %v2067
      %v2116 = vunpack.c.l.b16 %v2068
      %v2117 = vunpack.c.l.b16 %v2069
      %v2118 = vpack.c.b16 %v2095, %v2094
      %v2119 = vpack.c.b16 %v2097, %v2096
      %v2120 = vpack.c.b16 %v2099, %v2098
      %v2121 = vpack.c.b16 %v2101, %v2100
      %v2122 = vpack.c.b16 %v2103, %v2102
      %v2123 = vpack.c.b16 %v2105, %v2104
      %v2124 = vpack.c.b16 %v2107, %v2106
      %v2125 = vpack.c.b16 %v2109, %v2108
      %v2126 = vpack.c.b16 %v2111, %v2110
      %v2127 = vpack.c.b16 %v2113, %v2112
      %v2128 = vpack.c.b16 %v2115, %v2114
      %v2129 = vpack.c.b16 %v2117, %v2116
      %v2143 = vsel %vm226, %v1949, 0
      %v2146 = vsel %vm226, %v1950, 0
      %v2149 = vsel %vm226, %v1951, 0
      %v2152 = vsel %vm226, %v1952, 0
      %v2155 = vsel %vm226, %v1953, 0
      %v2158 = vsel %vm226, %v1954, 0
      %v2161 = vsel %vm226, %v1955, 0
      %v2164 = vsel %vm226, %v2038, 0
      %2166 = vmatprep.subr.bf16.mxu0 0
      %2167 = vmatpush1.bf16.msra.mxu0 %v2125
      %2168 = vmatprep.subr.bf16.mxu0 0
      %2169 = vmatpush1.bf16.msra.mxu0 %v2124
      %2170 = vmatprep.subr.bf16.mxu0 0
      %2171 = vmatpush1.bf16.msra.mxu0 %v2123
      %2172 = vmatprep.subr.bf16.mxu0 0
      %2173 = vmatpush1.bf16.msra.mxu0 %v2122
      %2174 = vmatprep.subr.bf16.mxu0 0
      %2175 = vmatpush1.bf16.msra.mxu0 %v2121
      %2176 = vmatprep.subr.bf16.mxu0 0
      %2177 = vmatpush1.bf16.msra.mxu0 %v2120
      %2178 = vmatprep.subr.bf16.mxu0 0
      %2179 = vmatpush1.bf16.msra.mxu0 %v2119
      %2180 = vmatprep.subr.bf16.mxu0 0
      %2181 = vmatpush1.bf16.msra.mxu0 %v2118
      %2182 = vmatprep.subr.bf16.mxu0 0
      %2183 = vmatpush2.bf16.msra.mxu0 0
      %2184 = vmatprep.subr.bf16.mxu0 0
      %2185 = vmatpush2.bf16.msra.mxu0 0
      %2186 = vmatprep.subr.bf16.mxu0 0
      %2187 = vmatpush2.bf16.msra.mxu0 0
      %2188 = vmatprep.subr.bf16.mxu0 0
      %2189 = vmatpush2.bf16.msra.mxu0 0
      %2190 = vmatprep.subr.bf16.mxu0 0
      %2191 = vmatpush2.bf16.msra.mxu0 %v2129
      %2192 = vmatprep.subr.bf16.mxu0 0
      %2193 = vmatpush2.bf16.msra.mxu0 %v2128
      %2194 = vmatprep.subr.bf16.mxu0 0
      %2195 = vmatpush2.bf16.msra.mxu0 %v2127
      %2196 = vmatprep.subr.bf16.mxu0 0
      %2197 = vmatpush2.bf16.msra.mxu0 %v2126
      %2198 = vmatprep.mubr.bf16.mxu0 %v2143
      %2199 = vmatmul.mubr.bf16.gmra.mxu0 %v1986
      %v2200 = vpop.f32.mrf.mxu0
      %v2201 = vadd.f32 0.0, %v2200
      %v2202 = vpop.f32.mrf.mxu0
      %v2203 = vpop.f32.mrf.mxu0
      %v2204 = vadd.f32 0.0, %v2203
      %v2205 = vpop.f32.mrf.mxu0
      %2206 = vmatprep.mubr.bf16.mxu0 %v2146
      %2207 = vmatmul.mubr.bf16.gmra.mxu0 %v1990
      %v2208 = vpop.f32.mrf.mxu0
      %v2209 = vadd.f32 0.0, %v2208
      %v2210 = vpop.f32.mrf.mxu0
      %v2211 = vpop.f32.mrf.mxu0
      %v2212 = vadd.f32 0.0, %v2211
      %v2213 = vpop.f32.mrf.mxu0
      %2214 = vmatprep.mubr.bf16.mxu0 %v2149
      %2215 = vmatmul.mubr.bf16.gmra.mxu0 %v1994
      %v2216 = vpop.f32.mrf.mxu0
      %v2217 = vadd.f32 0.0, %v2216
      %v2218 = vpop.f32.mrf.mxu0
      %v2219 = vpop.f32.mrf.mxu0
      %v2220 = vadd.f32 0.0, %v2219
      %v2221 = vpop.f32.mrf.mxu0
      %2222 = vmatprep.mubr.bf16.mxu0 %v2152
      %2223 = vmatmul.mubr.bf16.gmra.mxu0 %v1998
      %v2224 = vpop.f32.mrf.mxu0
      %v2225 = vadd.f32 0.0, %v2224
      %v2226 = vpop.f32.mrf.mxu0
      %v2227 = vpop.f32.mrf.mxu0
      %v2228 = vadd.f32 0.0, %v2227
      %v2229 = vpop.f32.mrf.mxu0
      %2230 = vmatprep.mubr.bf16.mxu0 %v2155
      %2231 = vmatmul.mubr.bf16.gmra.mxu0 %v2002
      %v2232 = vpop.f32.mrf.mxu0
      %v2233 = vadd.f32 0.0, %v2232
      %v2234 = vpop.f32.mrf.mxu0
      %v2235 = vpop.f32.mrf.mxu0
      %v2236 = vadd.f32 0.0, %v2235
      %v2237 = vpop.f32.mrf.mxu0
      %2238 = vmatprep.mubr.bf16.mxu0 %v2158
      %2239 = vmatmul.mubr.bf16.gmra.mxu0 %v2006
      %v2240 = vpop.f32.mrf.mxu0
      %v2241 = vadd.f32 0.0, %v2240
      %v2242 = vpop.f32.mrf.mxu0
      %v2243 = vpop.f32.mrf.mxu0
      %v2244 = vadd.f32 0.0, %v2243
      %v2245 = vpop.f32.mrf.mxu0
      %2246 = vmatprep.mubr.bf16.mxu0 %v2161
      %2247 = vmatmul.mubr.bf16.gmra.mxu0 %v2010
      %v2248 = vpop.f32.mrf.mxu0
      %v2249 = vadd.f32 0.0, %v2248
      %v2250 = vpop.f32.mrf.mxu0
      %v2251 = vpop.f32.mrf.mxu0
      %v2252 = vadd.f32 0.0, %v2251
      %v2253 = vpop.f32.mrf.mxu0
      %2254 = vmatprep.mubr.bf16.mxu0 %v2164
      %2255 = vmatmul.mubr.bf16.gmra.mxu0 %v2044
      %v2256 = vpop.f32.mrf.mxu0
      %v2257 = vadd.f32 0.0, %v2256
      %v2258 = vpop.f32.mrf.mxu0
      %v2259 = vpop.f32.mrf.mxu0
      %v2260 = vadd.f32 0.0, %v2259
      %v2261 = vpop.f32.mrf.mxu0
      %2262 = vdwg.mxu0
      %v2287 = vunpack.c.l.b16 %v2012
      %v2288 = vunpack.c.l.b16 %v2013
      %v2289 = vunpack.c.l.b16 %v2014
      %v2290 = vunpack.c.l.b16 %v2015
      %v2291 = vunpack.c.l.b16 %v2016
      %v2292 = vunpack.c.l.b16 %v2017
      %v2293 = vunpack.c.l.b16 %v2018
      %v2294 = vunpack.c.l.b16 %v2019
      %v2295 = vunpack.c.l.b16 %v2020
      %v2296 = vunpack.c.l.b16 %v2021
      %v2297 = vunpack.c.l.b16 %v2022
      %v2298 = vunpack.c.l.b16 %v2023
      %v2299 = vunpack.c.l.b16 %v2024
      %v2300 = vunpack.c.l.b16 %v2025
      %v2301 = vunpack.c.l.b16 %v2026
      %v2302 = vunpack.c.l.b16 %v2027
      %v2303 = vunpack.c.l.b16 %v2028
      %v2304 = vunpack.c.l.b16 %v2029
      %v2305 = vunpack.c.l.b16 %v2030
      %v2306 = vunpack.c.l.b16 %v2031
      %v2307 = vunpack.c.l.b16 %v2032
      %v2308 = vunpack.c.l.b16 %v2033
      %v2309 = vunpack.c.l.b16 %v2034
      %v2310 = vunpack.c.l.b16 %v2035
      %v2311 = vpack.c.b16 %v2288, %v2287
      %v2312 = vpack.c.b16 %v2290, %v2289
      %v2313 = vpack.c.b16 %v2292, %v2291
      %v2314 = vpack.c.b16 %v2294, %v2293
      %v2315 = vpack.c.b16 %v2296, %v2295
      %v2316 = vpack.c.b16 %v2298, %v2297
      %v2317 = vpack.c.b16 %v2300, %v2299
      %v2318 = vpack.c.b16 %v2302, %v2301
      %v2319 = vpack.c.b16 %v2304, %v2303
      %v2320 = vpack.c.b16 %v2306, %v2305
      %v2321 = vpack.c.b16 %v2308, %v2307
      %v2322 = vpack.c.b16 %v2310, %v2309
      %v2336 = vsel %vm226, %v1948, 0
      %2338 = vmatprep.subr.bf16.mxu0 0
      %2339 = vmatpush1.bf16.msra.mxu0 %v2318
      %2340 = vmatprep.subr.bf16.mxu0 0
      %2341 = vmatpush1.bf16.msra.mxu0 %v2317
      %2342 = vmatprep.subr.bf16.mxu0 0
      %2343 = vmatpush1.bf16.msra.mxu0 %v2316
      %2344 = vmatprep.subr.bf16.mxu0 0
      %2345 = vmatpush1.bf16.msra.mxu0 %v2315
      %2346 = vmatprep.subr.bf16.mxu0 0
      %2347 = vmatpush1.bf16.msra.mxu0 %v2314
      %2348 = vmatprep.subr.bf16.mxu0 0
      %2349 = vmatpush1.bf16.msra.mxu0 %v2313
      %2350 = vmatprep.subr.bf16.mxu0 0
      %2351 = vmatpush1.bf16.msra.mxu0 %v2312
      %2352 = vmatprep.subr.bf16.mxu0 0
      %2353 = vmatpush1.bf16.msra.mxu0 %v2311
      %2354 = vmatprep.subr.bf16.mxu0 0
      %2355 = vmatpush2.bf16.msra.mxu0 0
      %2356 = vmatprep.subr.bf16.mxu0 0
      %2357 = vmatpush2.bf16.msra.mxu0 0
      %2358 = vmatprep.subr.bf16.mxu0 0
      %2359 = vmatpush2.bf16.msra.mxu0 0
      %2360 = vmatprep.subr.bf16.mxu0 0
      %2361 = vmatpush2.bf16.msra.mxu0 0
      %2362 = vmatprep.subr.bf16.mxu0 0
      %2363 = vmatpush2.bf16.msra.mxu0 %v2322
      %2364 = vmatprep.subr.bf16.mxu0 0
      %2365 = vmatpush2.bf16.msra.mxu0 %v2321
      %2366 = vmatprep.subr.bf16.mxu0 0
      %2367 = vmatpush2.bf16.msra.mxu0 %v2320
      %2368 = vmatprep.subr.bf16.mxu0 0
      %2369 = vmatpush2.bf16.msra.mxu0 %v2319
      %2370 = vmatprep.mubr.bf16.mxu0 %v2336
      %2371 = vmatmul.mubr.bf16.gmra.mxu0 %v1982
      %v2372 = vpop.f32.mrf.mxu0
      %v2373 = vadd.f32 %v2201, %v2372
      %v2374 = vpop.f32.mrf.mxu0
      %v2375 = vpop.f32.mrf.mxu0
      %v2376 = vadd.f32 %v2204, %v2375
      %v2377 = vpop.f32.mrf.mxu0
      %2378 = vmatprep.mubr.bf16.mxu0 %v2143
      %2379 = vmatmul.mubr.bf16.gmra.mxu0 %v1986
      %v2380 = vpop.f32.mrf.mxu0
      %v2381 = vadd.f32 %v2209, %v2380
      %v2382 = vpop.f32.mrf.mxu0
      %v2383 = vpop.f32.mrf.mxu0
      %v2384 = vadd.f32 %v2212, %v2383
      %v2385 = vpop.f32.mrf.mxu0
      %2386 = vmatprep.mubr.bf16.mxu0 %v2146
      %2387 = vmatmul.mubr.bf16.gmra.mxu0 %v1990
      %v2388 = vpop.f32.mrf.mxu0
      %v2389 = vadd.f32 %v2217, %v2388
      %v2390 = vpop.f32.mrf.mxu0
      %v2391 = vpop.f32.mrf.mxu0
      %v2392 = vadd.f32 %v2220, %v2391
      %v2393 = vpop.f32.mrf.mxu0
      %2394 = vmatprep.mubr.bf16.mxu0 %v2149
      %2395 = vmatmul.mubr.bf16.gmra.mxu0 %v1994
      %v2396 = vpop.f32.mrf.mxu0
      %v2397 = vadd.f32 %v2225, %v2396
      %v2398 = vpop.f32.mrf.mxu0
      %v2399 = vpop.f32.mrf.mxu0
      %v2400 = vadd.f32 %v2228, %v2399
      %v2401 = vpop.f32.mrf.mxu0
      %2402 = vmatprep.mubr.bf16.mxu0 %v2152
      %2403 = vmatmul.mubr.bf16.gmra.mxu0 %v1998
      %v2404 = vpop.f32.mrf.mxu0
      %v2405 = vadd.f32 %v2233, %v2404
      %v2406 = vpop.f32.mrf.mxu0
      %v2407 = vpop.f32.mrf.mxu0
      %v2408 = vadd.f32 %v2236, %v2407
      %v2409 = vpop.f32.mrf.mxu0
      %2410 = vmatprep.mubr.bf16.mxu0 %v2155
      %2411 = vmatmul.mubr.bf16.gmra.mxu0 %v2002
      %v2412 = vpop.f32.mrf.mxu0
      %v2413 = vadd.f32 %v2241, %v2412
      %v2414 = vpop.f32.mrf.mxu0
      %v2415 = vpop.f32.mrf.mxu0
      %v2416 = vadd.f32 %v2244, %v2415
      %v2417 = vpop.f32.mrf.mxu0
      %2418 = vmatprep.mubr.bf16.mxu0 %v2158
      %2419 = vmatmul.mubr.bf16.gmra.mxu0 %v2006
      %v2420 = vpop.f32.mrf.mxu0
      %v2421 = vadd.f32 %v2249, %v2420
      %v2422 = vpop.f32.mrf.mxu0
      %v2423 = vpop.f32.mrf.mxu0
      %v2424 = vadd.f32 %v2252, %v2423
      %v2425 = vpop.f32.mrf.mxu0
      %2426 = vmatprep.mubr.bf16.mxu0 %v2161
      %2427 = vmatmul.mubr.bf16.gmra.mxu0 %v2010
      %v2428 = vpop.f32.mrf.mxu0
      %v2429 = vadd.f32 %v2257, %v2428
      %v2430 = vpop.f32.mrf.mxu0
      %v2431 = vpop.f32.mrf.mxu0
      %v2432 = vadd.f32 %v2260, %v2431
      %v2433 = vpop.f32.mrf.mxu0
      %2434 = vdwg.mxu0
      %v2435 = vpack.c.bf16 %v1871, %v1881
      %v2436 = vpack.c.bf16 %v1830, %v1829
      %v2437 = vpack.c.bf16 %v1921, %v1931
      %2439 = vrot.lane.b32.xlu0 %v2436, 64
      %v2440 = vpop.permute.xlu0 %2439
      %v2443 = vsel %vm226, %v2435, %v2440
      %v2445 = vld [vmem:[%s1403] sm:$0xf]
      %v2446 = vld [vmem:[%s1403 + $0x4] sm:$0xf]
      %v2447 = vld [vmem:[%s1403 + $0x8] sm:$0xf]
      %v2448 = vld [vmem:[%s1403 + $0xc] sm:$0xf]
      %v2449 = vld [vmem:[%s1403 + $0x10] sm:$0xf]
      %v2450 = vld [vmem:[%s1403 + $0x14] sm:$0xf]
      %v2451 = vld [vmem:[%s1403 + $0x18] sm:$0xf]
      %v2452 = vld [vmem:[%s1403 + $0x1c] sm:$0xf]
      %v2453 = vld [vmem:[%s1403 + $0x20] sm:$0xf]
      %v2454 = vld [vmem:[%s1403 + $0x24] sm:$0xf]
      %v2455 = vld [vmem:[%s1403 + $0x28] sm:$0xf]
      %v2456 = vld [vmem:[%s1403 + $0x2c] sm:$0xf]
      %v2457 = vld [vmem:[%s1403 + $0x30] sm:$0xf]
      %v2458 = vld [vmem:[%s1403 + $0x34] sm:$0xf]
      %v2459 = vld [vmem:[%s1403 + $0x38] sm:$0xf]
      %v2460 = vld [vmem:[%s1403 + $0x3c] sm:$0xf]
      %v2461 = vld [vmem:[%s1403 + $0x40] sm:$0xf]
      %v2462 = vld [vmem:[%s1403 + $0x44] sm:$0xf]
      %v2463 = vld [vmem:[%s1403 + $0x48] sm:$0xf]
      %v2464 = vld [vmem:[%s1403 + $0x4c] sm:$0xf]
      %v2465 = vld [vmem:[%s1403 + $0x50] sm:$0xf]
      %v2466 = vld [vmem:[%s1403 + $0x54] sm:$0xf]
      %v2467 = vld [vmem:[%s1403 + $0x58] sm:$0xf]
      %v2468 = vld [vmem:[%s1403 + $0x5c] sm:$0xf]
      %v2493 = vunpack.c.l.b16 %v2445
      %v2494 = vunpack.c.l.b16 %v2446
      %v2495 = vunpack.c.l.b16 %v2447
      %v2496 = vunpack.c.l.b16 %v2448
      %v2497 = vunpack.c.l.b16 %v2449
      %v2498 = vunpack.c.l.b16 %v2450
      %v2499 = vunpack.c.l.b16 %v2451
      %v2500 = vunpack.c.l.b16 %v2452
      %v2501 = vunpack.c.l.b16 %v2453
      %v2502 = vunpack.c.l.b16 %v2454
      %v2503 = vunpack.c.l.b16 %v2455
      %v2504 = vunpack.c.l.b16 %v2456
      %v2505 = vunpack.c.l.b16 %v2457
      %v2506 = vunpack.c.l.b16 %v2458
      %v2507 = vunpack.c.l.b16 %v2459
      %v2508 = vunpack.c.l.b16 %v2460
      %v2509 = vunpack.c.l.b16 %v2461
      %v2510 = vunpack.c.l.b16 %v2462
      %v2511 = vunpack.c.l.b16 %v2463
      %v2512 = vunpack.c.l.b16 %v2464
      %v2513 = vunpack.c.l.b16 %v2465
      %v2514 = vunpack.c.l.b16 %v2466
      %v2515 = vunpack.c.l.b16 %v2467
      %v2516 = vunpack.c.l.b16 %v2468
      %v2517 = vpack.c.b16 %v2494, %v2493
      %v2518 = vpack.c.b16 %v2496, %v2495
      %v2519 = vpack.c.b16 %v2498, %v2497
      %v2520 = vpack.c.b16 %v2500, %v2499
      %v2521 = vpack.c.b16 %v2502, %v2501
      %v2522 = vpack.c.b16 %v2504, %v2503
      %v2523 = vpack.c.b16 %v2506, %v2505
      %v2524 = vpack.c.b16 %v2508, %v2507
      %v2525 = vpack.c.b16 %v2510, %v2509
      %v2526 = vpack.c.b16 %v2512, %v2511
      %v2527 = vpack.c.b16 %v2514, %v2513
      %v2528 = vpack.c.b16 %v2516, %v2515
      %v2542 = vsel %vm226, %v2437, 0
      %2544 = vmatprep.subr.bf16.mxu0 0
      %2545 = vmatpush1.bf16.msra.mxu0 %v2524
      %2546 = vmatprep.subr.bf16.mxu0 0
      %2547 = vmatpush1.bf16.msra.mxu0 %v2523
      %2548 = vmatprep.subr.bf16.mxu0 0
      %2549 = vmatpush1.bf16.msra.mxu0 %v2522
      %2550 = vmatprep.subr.bf16.mxu0 0
      %2551 = vmatpush1.bf16.msra.mxu0 %v2521
      %2552 = vmatprep.subr.bf16.mxu0 0
      %2553 = vmatpush1.bf16.msra.mxu0 %v2520
      %2554 = vmatprep.subr.bf16.mxu0 0
      %2555 = vmatpush1.bf16.msra.mxu0 %v2519
      %2556 = vmatprep.subr.bf16.mxu0 0
      %2557 = vmatpush1.bf16.msra.mxu0 %v2518
      %2558 = vmatprep.subr.bf16.mxu0 0
      %2559 = vmatpush1.bf16.msra.mxu0 %v2517
      %2560 = vmatprep.subr.bf16.mxu0 0
      %2561 = vmatpush2.bf16.msra.mxu0 0
      %2562 = vmatprep.subr.bf16.mxu0 0
      %2563 = vmatpush2.bf16.msra.mxu0 0
      %2564 = vmatprep.subr.bf16.mxu0 0
      %2565 = vmatpush2.bf16.msra.mxu0 0
      %2566 = vmatprep.subr.bf16.mxu0 0
      %2567 = vmatpush2.bf16.msra.mxu0 0
      %2568 = vmatprep.subr.bf16.mxu0 0
      %2569 = vmatpush2.bf16.msra.mxu0 %v2528
      %2570 = vmatprep.subr.bf16.mxu0 0
      %2571 = vmatpush2.bf16.msra.mxu0 %v2527
      %2572 = vmatprep.subr.bf16.mxu0 0
      %2573 = vmatpush2.bf16.msra.mxu0 %v2526
      %2574 = vmatprep.subr.bf16.mxu0 0
      %2575 = vmatpush2.bf16.msra.mxu0 %v2525
      %2576 = vmatprep.mubr.bf16.mxu0 %v2146
      %2577 = vmatmul.mubr.bf16.gmra.mxu0 %v1990
      %v2578 = vpop.f32.mrf.mxu0
      %v2579 = vadd.f32 0.0, %v2578
      %v2580 = vpop.f32.mrf.mxu0
      %v2581 = vpop.f32.mrf.mxu0
      %v2582 = vadd.f32 0.0, %v2581
      %v2583 = vpop.f32.mrf.mxu0
      %2584 = vmatprep.mubr.bf16.mxu0 %v2149
      %2585 = vmatmul.mubr.bf16.gmra.mxu0 %v1994
      %v2586 = vpop.f32.mrf.mxu0
      %v2587 = vadd.f32 0.0, %v2586
      %v2588 = vpop.f32.mrf.mxu0
      %v2589 = vpop.f32.mrf.mxu0
      %v2590 = vadd.f32 0.0, %v2589
      %v2591 = vpop.f32.mrf.mxu0
      %2592 = vmatprep.mubr.bf16.mxu0 %v2152
      %2593 = vmatmul.mubr.bf16.gmra.mxu0 %v1998
      %v2594 = vpop.f32.mrf.mxu0
      %v2595 = vadd.f32 0.0, %v2594
      %v2596 = vpop.f32.mrf.mxu0
      %v2597 = vpop.f32.mrf.mxu0
      %v2598 = vadd.f32 0.0, %v2597
      %v2599 = vpop.f32.mrf.mxu0
      %2600 = vmatprep.mubr.bf16.mxu0 %v2155
      %2601 = vmatmul.mubr.bf16.gmra.mxu0 %v2002
      %v2602 = vpop.f32.mrf.mxu0
      %v2603 = vadd.f32 0.0, %v2602
      %v2604 = vpop.f32.mrf.mxu0
      %v2605 = vpop.f32.mrf.mxu0
      %v2606 = vadd.f32 0.0, %v2605
      %v2607 = vpop.f32.mrf.mxu0
      %2608 = vmatprep.mubr.bf16.mxu0 %v2158
      %2609 = vmatmul.mubr.bf16.gmra.mxu0 %v2006
      %v2610 = vpop.f32.mrf.mxu0
      %v2611 = vadd.f32 0.0, %v2610
      %v2612 = vpop.f32.mrf.mxu0
      %v2613 = vpop.f32.mrf.mxu0
      %v2614 = vadd.f32 0.0, %v2613
      %v2615 = vpop.f32.mrf.mxu0
      %2616 = vmatprep.mubr.bf16.mxu0 %v2161
      %2617 = vmatmul.mubr.bf16.gmra.mxu0 %v2010
      %v2618 = vpop.f32.mrf.mxu0
      %v2619 = vadd.f32 0.0, %v2618
      %v2620 = vpop.f32.mrf.mxu0
      %v2621 = vpop.f32.mrf.mxu0
      %v2622 = vadd.f32 0.0, %v2621
      %v2623 = vpop.f32.mrf.mxu0
      %2624 = vmatprep.mubr.bf16.mxu0 %v2164
      %2625 = vmatmul.mubr.bf16.gmra.mxu0 %v2044
      %v2626 = vpop.f32.mrf.mxu0
      %v2627 = vadd.f32 0.0, %v2626
      %v2628 = vpop.f32.mrf.mxu0
      %v2629 = vpop.f32.mrf.mxu0
      %v2630 = vadd.f32 0.0, %v2629
      %v2631 = vpop.f32.mrf.mxu0
      %2632 = vmatprep.mubr.bf16.mxu0 %v2542
      %2633 = vmatmul.mubr.bf16.gmra.mxu0 %v2443
      %v2634 = vpop.f32.mrf.mxu0
      %v2635 = vadd.f32 0.0, %v2634
      %v2636 = vpop.f32.mrf.mxu0
      %v2637 = vpop.f32.mrf.mxu0
      %v2638 = vadd.f32 0.0, %v2637
      %v2639 = vpop.f32.mrf.mxu0
      %2640 = vdwg.mxu0
      %v2641 = vadd.f32 %v2373, %v2579
      %v2642 = vadd.f32 %v2376, %v2582
      %v2643 = vadd.f32 %v2381, %v2587
      %v2644 = vadd.f32 %v2384, %v2590
      %v2645 = vadd.f32 %v2389, %v2595
      %v2646 = vadd.f32 %v2392, %v2598
      %v2647 = vadd.f32 %v2397, %v2603
      %v2648 = vadd.f32 %v2400, %v2606
      %v2649 = vadd.f32 %v2405, %v2611
      %v2650 = vadd.f32 %v2408, %v2614
      %v2651 = vadd.f32 %v2413, %v2619
      %v2652 = vadd.f32 %v2416, %v2622
      %v2653 = vadd.f32 %v2421, %v2627
      %v2654 = vadd.f32 %v2424, %v2630
      %v2655 = vadd.f32 %v2429, %v2635
      %v2656 = vadd.f32 %v2432, %v2638
      %v2657 = vadd.f32 %v2641, %v1620
      %v2658 = vadd.f32 %v2642, %v1620
      %v2659 = vadd.f32 %v2643, %v1620
      %v2660 = vadd.f32 %v2644, %v1620
      %v2661 = vadd.f32 %v2645, %v1620
      %v2662 = vadd.f32 %v2646, %v1620
      %v2663 = vadd.f32 %v2647, %v1620
      %v2664 = vadd.f32 %v2648, %v1620
      %v2665 = vadd.f32 %v2649, %v1620
      %v2666 = vadd.f32 %v2650, %v1620
      %v2667 = vadd.f32 %v2651, %v1620
      %v2668 = vadd.f32 %v2652, %v1620
      %v2669 = vadd.f32 %v2653, %v1620
      %v2670 = vadd.f32 %v2654, %v1620
      %v2671 = vadd.f32 %v2655, %v1620
      %v2672 = vadd.f32 %v2656, %v1620
      %v2673 = vmul.f32 %v2657, 0.01
      %v2674 = vmul.f32 %v2658, 0.01
      %v2675 = vmul.f32 %v2659, 0.01
      %v2676 = vmul.f32 %v2660, 0.01
      %v2677 = vmul.f32 %v2661, 0.01
      %v2678 = vmul.f32 %v2662, 0.01
      %v2679 = vmul.f32 %v2663, 0.01
      %v2680 = vmul.f32 %v2664, 0.01
      %v2681 = vmul.f32 %v2665, 0.01
      %v2682 = vmul.f32 %v2666, 0.01
      %v2683 = vmul.f32 %v2667, 0.01
      %v2684 = vmul.f32 %v2668, 0.01
      %v2685 = vmul.f32 %v2669, 0.01
      %v2686 = vmul.f32 %v2670, 0.01
      %v2687 = vmul.f32 %v2671, 0.01
      %v2688 = vmul.f32 %v2672, 0.01
      %v2689 = vmax.f32 %v2657, %v2673
      %v2690 = vmax.f32 %v2658, %v2674
      %v2691 = vmax.f32 %v2659, %v2675
      %v2692 = vmax.f32 %v2660, %v2676
      %v2693 = vmax.f32 %v2661, %v2677
      %v2694 = vmax.f32 %v2662, %v2678
      %v2695 = vmax.f32 %v2663, %v2679
      %v2696 = vmax.f32 %v2664, %v2680
      %v2697 = vmax.f32 %v2665, %v2681
      %v2698 = vmax.f32 %v2666, %v2682
      %v2699 = vmax.f32 %v2667, %v2683
      %v2700 = vmax.f32 %v2668, %v2684
      %v2701 = vmax.f32 %v2669, %v2685
      %v2702 = vmax.f32 %v2670, %v2686
      %v2703 = vmax.f32 %v2671, %v2687
      %v2704 = vmax.f32 %v2672, %v2688
      %v2705 = vld [vmem:[%s539] sm:$0xf]
      %v2706 = vld [vmem:[%s539 + $0x4] sm:$0xf]
      %v2707 = vld [vmem:[%s539 + $0x8] sm:$0xf]
      %v2708 = vld [vmem:[%s539 + $0xc] sm:$0xf]
      %v2709 = vld [vmem:[%s539 + $0x10] sm:$0xf]
      %v2710 = vld [vmem:[%s539 + $0x14] sm:$0xf]
      %v2711 = vld [vmem:[%s539 + $0x18] sm:$0xf]
      %v2712 = vld [vmem:[%s539 + $0x1c] sm:$0xf]
      %v2713 = vld [vmem:[%s539 + $0x20] sm:$0xf]
      %v2714 = vld [vmem:[%s539 + $0x24] sm:$0xf]
      %v2715 = vld [vmem:[%s539 + $0x28] sm:$0xf]
      %v2716 = vld [vmem:[%s539 + $0x2c] sm:$0xf]
      %v2717 = vld [vmem:[%s539 + $0x30] sm:$0xf]
      %v2718 = vld [vmem:[%s539 + $0x34] sm:$0xf]
      %v2719 = vld [vmem:[%s539 + $0x38] sm:$0xf]
      %v2720 = vld [vmem:[%s539 + $0x3c] sm:$0xf]
      %v2721 = vunpack.c.l.bf16 %v2705
      %v2722 = vunpack.c.l.bf16 %v2706
      %v2723 = vunpack.c.l.bf16 %v2707
      %v2724 = vunpack.c.l.bf16 %v2708
      %v2725 = vunpack.c.l.bf16 %v2709
      %v2726 = vunpack.c.l.bf16 %v2710
      %v2727 = vunpack.c.l.bf16 %v2711
      %v2728 = vunpack.c.l.bf16 %v2712
      %v2729 = vunpack.c.l.bf16 %v2713
      %v2730 = vunpack.c.l.bf16 %v2714
      %v2731 = vunpack.c.l.bf16 %v2715
      %v2732 = vunpack.c.l.bf16 %v2716
      %v2733 = vunpack.c.l.bf16 %v2717
      %v2734 = vunpack.c.l.bf16 %v2718
      %v2735 = vunpack.c.l.bf16 %v2719
      %v2736 = vunpack.c.l.bf16 %v2720
      %v2737 = vadd.f32 %v2689, %v2721
      %v2738 = vadd.f32 %v2690, %v2722
      %v2739 = vadd.f32 %v2691, %v2723
      %v2740 = vadd.f32 %v2692, %v2724
      %v2741 = vadd.f32 %v2693, %v2725
      %v2742 = vadd.f32 %v2694, %v2726
      %v2743 = vadd.f32 %v2695, %v2727
      %v2744 = vadd.f32 %v2696, %v2728
      %v2745 = vadd.f32 %v2697, %v2729
      %v2746 = vadd.f32 %v2698, %v2730
      %v2747 = vadd.f32 %v2699, %v2731
      %v2748 = vadd.f32 %v2700, %v2732
      %v2749 = vadd.f32 %v2701, %v2733
      %v2750 = vadd.f32 %v2702, %v2734
      %v2751 = vadd.f32 %v2703, %v2735
      %v2752 = vadd.f32 %v2704, %v2736
      %v2753 = vpack.c.bf16 %v2738, %v2737
      %v2754 = vpack.c.bf16 %v2740, %v2739
      %v2755 = vpack.c.bf16 %v2742, %v2741
      %v2756 = vpack.c.bf16 %v2744, %v2743
      %v2757 = vpack.c.bf16 %v2746, %v2745
      %v2758 = vpack.c.bf16 %v2748, %v2747
      %v2759 = vpack.c.bf16 %v2750, %v2749
      %v2760 = vpack.c.bf16 %v2752, %v2751
      %v2769 = vunpack.c.l.b16 %v2753
      %v2770 = vunpack.c.h.b16 %v2753
      %v2771 = vunpack.c.l.b16 %v2754
      %v2772 = vunpack.c.h.b16 %v2754
      %v2773 = vunpack.c.l.b16 %v2755
      %v2774 = vunpack.c.h.b16 %v2755
      %v2775 = vunpack.c.l.b16 %v2756
      %v2776 = vunpack.c.h.b16 %v2756
      %v2777 = vunpack.c.l.b16 %v2757
      %v2778 = vunpack.c.h.b16 %v2757
      %v2779 = vunpack.c.l.b16 %v2758
      %v2780 = vunpack.c.h.b16 %v2758
      %v2781 = vunpack.c.l.b16 %v2759
      %v2782 = vunpack.c.h.b16 %v2759
      %v2783 = vunpack.c.l.b16 %v2760
      %v2784 = vunpack.c.h.b16 %v2760
      %v2785 = vpack.c.b16 %v2769, %v2769
      %v2786 = vpack.c.b16 %v2770, %v2770
      %v2787 = vpack.c.b16 %v2771, %v2771
      %v2788 = vpack.c.b16 %v2772, %v2772
      %v2789 = vpack.c.b16 %v2773, %v2773
      %v2790 = vpack.c.b16 %v2774, %v2774
      %v2791 = vpack.c.b16 %v2775, %v2775
      %v2792 = vpack.c.b16 %v2776, %v2776
      %v2793 = vpack.c.b16 %v2777, %v2777
      %v2794 = vpack.c.b16 %v2778, %v2778
      %v2795 = vpack.c.b16 %v2779, %v2779
      %v2796 = vpack.c.b16 %v2780, %v2780
      %v2797 = vpack.c.b16 %v2781, %v2781
      %v2798 = vpack.c.b16 %v2782, %v2782
      %v2799 = vpack.c.b16 %v2783, %v2783
      %v2800 = vpack.c.b16 %v2784, %v2784
      %s2817 = smul.addr %s537, 4
      %s2818 = scalar_lea.vmem %s224, %s2817
      %2819 = vst [vmem:[%s2818] sm:$0xf] %v2785
      %2820 = vst [vmem:[%s2818 + $0x4] sm:$0xf] %v2786
      %2821 = vst [vmem:[%s2818 + $0x8] sm:$0xf] %v2787
      %2822 = vst [vmem:[%s2818 + $0xc] sm:$0xf] %v2788
      %2823 = vst [vmem:[%s2818 + $0x10] sm:$0xf] %v2789
      %2824 = vst [vmem:[%s2818 + $0x14] sm:$0xf] %v2790
      %2825 = vst [vmem:[%s2818 + $0x18] sm:$0xf] %v2791
      %2826 = vst [vmem:[%s2818 + $0x1c] sm:$0xf] %v2792
      %2827 = vst [vmem:[%s2818 + $0x20] sm:$0xf] %v2793
      %2828 = vst [vmem:[%s2818 + $0x24] sm:$0xf] %v2794
      %2829 = vst [vmem:[%s2818 + $0x28] sm:$0xf] %v2795
      %2830 = vst [vmem:[%s2818 + $0x2c] sm:$0xf] %v2796
      %2831 = vst [vmem:[%s2818 + $0x30] sm:$0xf] %v2797
      %2832 = vst [vmem:[%s2818 + $0x34] sm:$0xf] %v2798
      %2833 = vst [vmem:[%s2818 + $0x38] sm:$0xf] %v2799
      %2834 = vst [vmem:[%s2818 + $0x3c] sm:$0xf] %v2800
      %p2835 = scmp.lt.s32.totalorder %s16, 1
      %s2836 = scalar_select %p2835, %s16, 1
      %s2837 = smul.addr %s2836, 32
      %s2838 = smul.addr %s2837, 4
      %s2839 = scalar_lea.vmem %s5, %s2838
      // Predicated region
      $region41: #{resblock_forward.1} parent=39 // pred_check
        %p2840 = pneg %p144
      $region42: #{resblock_forward.1} parent=39 // pred_check_branch
        %2842 = sbr.rel (%p2840) target = $region44
      $region43: #{resblock_forward.1} parent=39 // pred_region
        _
      $region44: #{resblock_forward.1} parent=39 // pred_fallthru
        _
    $region40: #{resblock_forward.1} parent=5 // pred_fallthru
      _
    %p2843 = scmp.le.s32.totalorder 2, %s11
    // Predicated region
    $region45: #{resblock_forward.1} parent=5 // pred_check
      %p2844 = pneg %p2843
    $region46: #{resblock_forward.1} parent=5 // pred_check_branch
      %2846 = sbr.rel (%p2844) target = $region48
    $region47: #{resblock_forward.1} parent=5 // pred_region
      %s2847 = ssub.s32 %s11, 2
      // Predicated region
      $region49: #{resblock_forward.1} parent=47 // pred_check
        %p2848 = pneg %p150
      $region50: #{resblock_forward.1} parent=47 // pred_check_branch
        %2850 = sbr.rel (%p2848) target = $region52
      $region51: #{resblock_forward.1} parent=47 // pred_region
        %p2851 = scmp.lt.s32.totalorder %s17, 1
        %s2852 = scalar_select %p2851, %s17, 1
        %s2853 = smul.addr %s2852, 32
        %s2854 = smul.addr %s2853, 4
        %s2855 = scalar_lea.vmem %s5, %s2854
      $region52: #{resblock_forward.1} parent=47 // pred_fallthru
        _
    $region48: #{resblock_forward.1} parent=5 // pred_fallthru
      _
  $region6: #{resblock_forward.1} parent=0 // loop_footer
    %s15 = sadd.s32 1, %s11
  $region7: #{resblock_forward.1} parent=0 // loop_footer_branch
    %10 = sbr.rel target = $region3
  $region8: #{resblock_forward.1} parent=0 // loop_exit
    _

// kernel: resblock_forward.1
$region0: #{resblock_forward.1}
  #allocation0 [shape = 'u32[]', space=smem, size = 0x4, offset = 0x4, fixed_abs, tag = 'smem constant byte address 0x4 - core index']
  #allocation1 [shape = 'u32[144,128]{1,0:T(1,128)}', space=vmem, size = 0x12000, scoped, tag = 'internal scratch']
  #allocation2 [shape = 'f32[18,24,64]{2,1,0:T(8,128)}', space=vmem, size = 0x36000, scoped, tag = 'scratch operand']
  %s0 = inlined_call_operand.vmem [shape: bf16[2,16,16,128], index: 0, kind: input, shape index: {}]
  %s1 = inlined_call_operand.vmem [shape: bf16[128,64], index: 1, kind: input, shape index: {}]
  %s2 = inlined_call_operand.vmem [shape: f32[1,64], index: 2, kind: input, shape index: {}]
  %s3 = inlined_call_operand.vmem [shape: bf16[3,192,128], index: 3, kind: input, shape index: {}]
  %s4 = inlined_call_operand.vmem [shape: f32[1,128], index: 4, kind: input, shape index: {}]
  %s5 = inlined_call_operand.vmem [shape: bf16[2,16,16,128], index: 5, kind: output, shape index: {}]
  %s6 = sld [smem:[#allocation0]]
  $region53: #{resblock_forward.1} parent=0
    _
  %s8 = ssub.s32 1, %s6
  %s9 = scalar_select 0, %s8, %s6
  loop: start=0, step=1, limit=4
  $region2: #{resblock_forward.1} parent=0 // loop_pre_header
    _
  $region3: #{resblock_forward.1} parent=0 // loop_header
    %s11 = sphi 0, %s15
    %p12 = scmp.ge.s32.totalorder %s11, 4
    %s21 = sphi 0, %s23
    %s24 = sphi 0, %s21
    %s25 = sphi 0, %s24
    %s41 = sphi 0, %s25
    %s45 = sphi 0, %s45
    %s47 = sphi 0, %s45
    %s48 = sphi 0, %s47
    %s62 = sphi 0, %s48
    %s66 = sphi 0, %s66
    %s68 = sphi 0, %s66
    %s69 = sphi 0, %s68
    %s83 = sphi 0, %s69
    %s87 = sphi 0, %s87
    %s89 = sphi 0, %s87
    %s90 = sphi 0, %s89
    %s104 = sphi 0, %s90
    %s108 = sphi 0, %s108
    %s110 = sphi 0, %s108
    %s111 = sphi 0, %s110
    %s125 = sphi 0, %s111
    %s131 = sphi 0, %s133
    %s134 = sphi 0, %s131
    %s135 = sphi 0, %s134
    %s151 = sphi 0, %s135
  $region4: #{resblock_forward.1} parent=0 // loop_header_branch
    %14 = sbr.rel (%p12) target = $region8
  $region5: #{resblock_forward.1} parent=0 // loop_body
    %s16 = ssub.s32 %s11, 1
    %s17 = ssub.s32 %s11, 2
    %s18 = sadd.s32 %s11, 1
    %s19 = ssub.s32 %s11, %s18
    %p20 = scmp.eq.s32.totalorder %s19, 0
    %s22 = sadd.s32 %s21, 1
    %s23 = scalar_select %p20, %s21, %s22
    %p26 = pneg %p20
    %p27 = scmp.eq.s32.totalorder %s11, 1
    %p28 = por %p26, %p27
    %p29 = scmp.ne.s32.totalorder %s21, %s24
    %p30 = scmp.eq.s32.totalorder %s11, 0
    %p31 = por %p29, %p30
    %p32 = scmp.ne.s32.totalorder %s21, %s24
    %p33 = scmp.eq.s32.totalorder %s16, 1
    %p34 = por %p32, %p33
    %p35 = scmp.ne.s32.totalorder %s24, %s25
    %p36 = scmp.eq.s32.totalorder %s16, 0
    %p37 = por %p35, %p36
    %p38 = scmp.ne.s32.totalorder %s24, %s25
    %p39 = scmp.eq.s32.totalorder %s17, 1
    %p40 = por %p38, %p39
    %p42 = scmp.ne.s32.totalorder %s25, %s41
    %p43 = scmp.eq.s32.totalorder %s17, 0
    %p44 = por %p42, %p43
    %s46 = sadd.s32 %s45, 1
    %p49 = scmp.eq.s32.totalorder %s11, 1
    %p50 = scmp.ne.s32.totalorder %s45, %s47
    %p51 = scmp.eq.s32.totalorder %s11, 0
    %p52 = por %p50, %p51
    %p53 = scmp.ne.s32.totalorder %s45, %s47
    %p54 = scmp.eq.s32.totalorder %s16, 1
    %p55 = por %p53, %p54
    %p56 = scmp.ne.s32.totalorder %s47, %s48
    %p57 = scmp.eq.s32.totalorder %s16, 0
    %p58 = por %p56, %p57
    %p59 = scmp.ne.s32.totalorder %s47, %s48
    %p60 = scmp.eq.s32.totalorder %s17, 1
    %p61 = por %p59, %p60
    %p63 = scmp.ne.s32.totalorder %s48, %s62
    %p64 = scmp.eq.s32.totalorder %s17, 0
    %p65 = por %p63, %p64
    %s67 = sadd.s32 %s66, 1
    %p70 = scmp.eq.s32.totalorder %s11, 1
    %p71 = scmp.ne.s32.totalorder %s66, %s68
    %p72 = scmp.eq.s32.totalorder %s11, 0
    %p73 = por %p71, %p72
    %p74 = scmp.ne.s32.totalorder %s66, %s68
    %p75 = scmp.eq.s32.totalorder %s16, 1
    %p76 = por %p74, %p75
    %p77 = scmp.ne.s32.totalorder %s68, %s69
    %p78 = scmp.eq.s32.totalorder %s16, 0
    %p79 = por %p77, %p78
    %p80 = scmp.ne.s32.totalorder %s68, %s69
    %p81 = scmp.eq.s32.totalorder %s17, 1
    %p82 = por %p80, %p81
    %p84 = scmp.ne.s32.totalorder %s69, %s83
    %p85 = scmp.eq.s32.totalorder %s17, 0
    %p86 = por %p84, %p85
    %s88 = sadd.s32 %s87, 1
    %p91 = scmp.eq.s32.totalorder %s11, 1
    %p92 = scmp.ne.s32.totalorder %s87, %s89
    %p93 = scmp.eq.s32.totalorder %s11, 0
    %p94 = por %p92, %p93
    %p95 = scmp.ne.s32.totalorder %s87, %s89
    %p96 = scmp.eq.s32.totalorder %s16, 1
    %p97 = por %p95, %p96
    %p98 = scmp.ne.s32.totalorder %s89, %s90
    %p99 = scmp.eq.s32.totalorder %s16, 0
    %p100 = por %p98, %p99
    %p101 = scmp.ne.s32.totalorder %s89, %s90
    %p102 = scmp.eq.s32.totalorder %s17, 1
    %p103 = por %p101, %p102
    %p105 = scmp.ne.s32.totalorder %s90, %s104
    %p106 = scmp.eq.s32.totalorder %s17, 0
    %p107 = por %p105, %p106
    %s109 = sadd.s32 %s108, 1
    %p112 = scmp.eq.s32.totalorder %s11, 1
    %p113 = scmp.ne.s32.totalorder %s108, %s110
    %p114 = scmp.eq.s32.totalorder %s11, 0
    %p115 = por %p113, %p114
    %p116 = scmp.ne.s32.totalorder %s108, %s110
    %p117 = scmp.eq.s32.totalorder %s16, 1
    %p118 = por %p116, %p117
    %p119 = scmp.ne.s32.totalorder %s110, %s111
    %p120 = scmp.eq.s32.totalorder %s16, 0
    %p121 = por %p119, %p120
    %p122 = scmp.ne.s32.totalorder %s110, %s111
    %p123 = scmp.eq.s32.totalorder %s17, 1
    %p124 = por %p122, %p123
    %p126 = scmp.ne.s32.totalorder %s111, %s125
    %p127 = scmp.eq.s32.totalorder %s17, 0
    %p128 = por %p126, %p127
    %s129 = ssub.s32 %s11, %s18
    %p130 = scmp.eq.s32.totalorder %s129, 0
    %s132 = sadd.s32 %s131, 1
    %s133 = scalar_select %p130, %s131, %s132
    %p136 = pneg %p130
    %p137 = scmp.eq.s32.totalorder %s11, 1
    %p138 = por %p136, %p137
    %p139 = scmp.ne.s32.totalorder %s131, %s134
    %p140 = scmp.eq.s32.totalorder %s11, 0
    %p141 = por %p139, %p140
    %p142 = scmp.ne.s32.totalorder %s131, %s134
    %p143 = scmp.eq.s32.totalorder %s16, 1
    %p144 = por %p142, %p143
    %p145 = scmp.ne.s32.totalorder %s134, %s135
    %p146 = scmp.eq.s32.totalorder %s16, 0
    %p147 = por %p145, %p146
    %p148 = scmp.ne.s32.totalorder %s134, %s135
    %p149 = scmp.eq.s32.totalorder %s17, 1
    %p150 = por %p148, %p149
    %p152 = scmp.ne.s32.totalorder %s135, %s151
    %p153 = scmp.eq.s32.totalorder %s17, 0
    %p154 = por %p152, %p153
    %p155 = scmp.le.s32.totalorder 1, %s11
    %p156 = scmp.lt.s32.totalorder %s11, 3
    %p157 = pnand %p155, %p156
    %p158 = pneg %p157
    // Predicated region
    $region9: #{resblock_forward.1} parent=5 // pred_check
      _
    $region10: #{resblock_forward.1} parent=5 // pred_check_branch
      %160 = sbr.rel (%p157) target = $region12
    $region11: #{resblock_forward.1} parent=5 // pred_region
      %s161 = ssub.s32 %s11, 1
      // Predicated region
      $region13: #{resblock_forward.1} parent=11 // pred_check
        %p162 = pneg %p58
      $region14: #{resblock_forward.1} parent=11 // pred_check_branch
        %164 = sbr.rel (%p162) target = $region16
      $region15: #{resblock_forward.1} parent=11 // pred_region
        _
      $region16: #{resblock_forward.1} parent=11 // pred_fallthru
        _
      // Predicated region
      $region17: #{resblock_forward.1} parent=11 // pred_check
        %p165 = pneg %p79
      $region18: #{resblock_forward.1} parent=11 // pred_check_branch
        %167 = sbr.rel (%p165) target = $region20
      $region19: #{resblock_forward.1} parent=11 // pred_region
        _
      $region20: #{resblock_forward.1} parent=11 // pred_fallthru
        _
      // Predicated region
      $region21: #{resblock_forward.1} parent=11 // pred_check
        %p168 = pneg %p100
      $region22: #{resblock_forward.1} parent=11 // pred_check_branch
        %170 = sbr.rel (%p168) target = $region24
      $region23: #{resblock_forward.1} parent=11 // pred_region
        _
      $region24: #{resblock_forward.1} parent=11 // pred_fallthru
        _
      // Predicated region
      $region25: #{resblock_forward.1} parent=11 // pred_check
        %p171 = pneg %p121
      $region26: #{resblock_forward.1} parent=11 // pred_check_branch
        %173 = sbr.rel (%p171) target = $region28
      $region27: #{resblock_forward.1} parent=11 // pred_region
        _
      $region28: #{resblock_forward.1} parent=11 // pred_fallthru
        _
    $region12: #{resblock_forward.1} parent=5 // pred_fallthru
      _
    %p174 = scmp.lt.s32.totalorder %s11, 2
    // Predicated region
    $region29: #{resblock_forward.1} parent=5 // pred_check
      %p175 = pneg %p174
    $region30: #{resblock_forward.1} parent=5 // pred_check_branch
      %177 = sbr.rel (%p175) target = $region32
    $region31: #{resblock_forward.1} parent=5 // pred_region
      // Predicated region
      $region33: #{resblock_forward.1} parent=31 // pred_check
        %p178 = pneg %p31
      $region34: #{resblock_forward.1} parent=31 // pred_check_branch
        %180 = sbr.rel (%p178) target = $region36
      $region35: #{resblock_forward.1} parent=31 // pred_region
        %p181 = scmp.lt.s32.totalorder %s11, 1
        %s182 = scalar_select %p181, %s11, 1
        %s183 = smul.addr %s182, 32
        %s184 = smul.addr %s183, 4
        %s185 = scalar_lea.vmem %s0, %s184
      $region36: #{resblock_forward.1} parent=31 // pred_fallthru
        _
    $region32: #{resblock_forward.1} parent=5 // pred_fallthru
      _
    %p186 = scmp.le.s32.totalorder 1, %s11
    %p187 = scmp.lt.s32.totalorder %s11, 3
    %p188 = pnand %p186, %p187
    %p189 = pneg %p188
    // Predicated region
    $region37: #{resblock_forward.1} parent=5 // pred_check
      _
    $region38: #{resblock_forward.1} parent=5 // pred_check_branch
      %191 = sbr.rel (%p188) target = $region40
    $region39: #{resblock_forward.1} parent=5 // pred_region
      %s192 = ssub.s32 %s11, 1
      %p193 = scmp.lt.s32.totalorder %s16, 1
      %s194 = scalar_select %p193, %s16, 1
      %s195 = smul.addr %s194, 32
      %s196 = smul.addr %s195, 4
      %s197 = scalar_lea.vmem %s0, %s196
      %p198 = pneg %p37
      %p199 = pneg %p34
      %p200 = pneg %p58
      %p201 = pneg %p55
      %p202 = pneg %p79
      %p203 = pneg %p76
      %p204 = pneg %p100
      %p205 = pneg %p97
      %p206 = pneg %p121
      %p207 = pneg %p118
      %p208 = pneg %p147
      %p209 = pneg %p144
      %p210 = scmp.lt.s32.totalorder %s16, 1
      %s211 = scalar_select %p210, %s16, 1
      %s212 = smul.addr %s211, 32
      %s213 = smul.addr %s212, 4
      %s214 = scalar_lea.vmem %s5, %s213
      %p215 = scmp.lt.s32.totalorder %s16, 1
      %s216 = scalar_select %p215, %s16, 1
      %s217 = smul.addr %s216, 32
      %s218 = smul.addr %s217, 4
      %s219 = scalar_lea.vmem %s0, %s218
      %p220 = scmp.lt.s32.totalorder %s16, 1
      %s221 = scalar_select %p220, %s16, 1
      %s222 = smul.addr %s221, 32
      %s223 = smul.addr %s222, 4
      %s224 = scalar_lea.vmem %s5, %s223
      %vm226 = vcmask 523264
      %227 = vst.msk [vmem:[#allocation2] sm:$0xff] %vm226, 0.0
      %228 = vst.msk [vmem:[#allocation2 + $0x8] sm:$0xff] %vm226, 0.0
      %229 = vst.msk [vmem:[#allocation2 + $0x10] sm:$0xff] %vm226, 0.0
      %s230 = scalar_lea.vmem [#allocation2], 408
      %231 = vst.msk [vmem:[%s230] sm:$0xff] %vm226, 0.0
      %232 = vst.msk [vmem:[%s230 + $0x8] sm:$0xff] %vm226, 0.0
      %233 = vst.msk [vmem:[%s230 + $0x10] sm:$0xff] %vm226, 0.0
      %s234 = scalar_lea.vmem [#allocation2], 24
      %235 = vst.msk [vmem:[%s234 + $0x10] sm:$0xff] %vm226, 0.0
      %236 = vst.msk [vmem:[%s234 + $0x28] sm:$0xff] %vm226, 0.0
      %237 = vst.msk [vmem:[%s234 + $0x40] sm:$0xff] %vm226, 0.0
      %238 = vst.msk [vmem:[%s234 + $0x58] sm:$0xff] %vm226, 0.0
      %239 = vst.msk [vmem:[%s234 + $0x70] sm:$0xff] %vm226, 0.0
      %240 = vst.msk [vmem:[%s234 + $0x88] sm:$0xff] %vm226, 0.0
      %241 = vst.msk [vmem:[%s234 + $0xa0] sm:$0xff] %vm226, 0.0
      %242 = vst.msk [vmem:[%s234 + $0xb8] sm:$0xff] %vm226, 0.0
      %243 = vst.msk [vmem:[%s234 + $0xd0] sm:$0xff] %vm226, 0.0
      %244 = vst.msk [vmem:[%s234 + $0xe8] sm:$0xff] %vm226, 0.0
      %245 = vst.msk [vmem:[%s234 + $0x100] sm:$0xff] %vm226, 0.0
      %246 = vst.msk [vmem:[%s234 + $0x118] sm:$0xff] %vm226, 0.0
      %247 = vst.msk [vmem:[%s234 + $0x130] sm:$0xff] %vm226, 0.0
      %248 = vst.msk [vmem:[%s234 + $0x148] sm:$0xff] %vm226, 0.0
      %249 = vst.msk [vmem:[%s234 + $0x160] sm:$0xff] %vm226, 0.0
      %250 = vst.msk [vmem:[%s234 + $0x178] sm:$0xff] %vm226, 0.0
      %v251 = vld [vmem:[%s1] sm:$0xf]
      %v252 = vld [vmem:[%s1 + $0x4] sm:$0xf]
      %v253 = vld [vmem:[%s1 + $0x8] sm:$0xf]
      %v254 = vld [vmem:[%s1 + $0xc] sm:$0xf]
      %v255 = vld [vmem:[%s1 + $0x10] sm:$0xf]
      %v256 = vld [vmem:[%s1 + $0x14] sm:$0xf]
      %v257 = vld [vmem:[%s1 + $0x18] sm:$0xf]
      %v258 = vld [vmem:[%s1 + $0x1c] sm:$0xf]
      %v259 = vld [vmem:[%s1 + $0x20] sm:$0xf]
      %v260 = vld [vmem:[%s1 + $0x24] sm:$0xf]
      %v261 = vld [vmem:[%s1 + $0x28] sm:$0xf]
      %v262 = vld [vmem:[%s1 + $0x2c] sm:$0xf]
      %v263 = vld [vmem:[%s1 + $0x30] sm:$0xf]
      %v264 = vld [vmem:[%s1 + $0x34] sm:$0xf]
      %v265 = vld [vmem:[%s1 + $0x38] sm:$0xf]
      %v266 = vld [vmem:[%s1 + $0x3c] sm:$0xf]
      %v267 = vld [vmem:[%s2] sm:$0x1]
      %s268 = smul.u32 0, 2
      %s269 = smul.addr %s268, 4
      %s270 = scalar_lea.vmem %s219, %s269
      %v271 = vld [vmem:[%s270] sm:$0xf]
      %v272 = vld [vmem:[%s270 + $0x4] sm:$0xf]
      %v273 = vld [vmem:[%s270 + $0x8] sm:$0xf]
      %v274 = vld [vmem:[%s270 + $0xc] sm:$0xf]
      %v275 = vld [vmem:[%s270 + $0x10] sm:$0xf]
      %v276 = vld [vmem:[%s270 + $0x14] sm:$0xf]
      %v277 = vld [vmem:[%s270 + $0x18] sm:$0xf]
      %v278 = vld [vmem:[%s270 + $0x1c] sm:$0xf]
      %v279 = vld [vmem:[%s270 + $0x20] sm:$0xf]
      %v280 = vld [vmem:[%s270 + $0x24] sm:$0xf]
      %v281 = vld [vmem:[%s270 + $0x28] sm:$0xf]
      %v282 = vld [vmem:[%s270 + $0x2c] sm:$0xf]
      %v283 = vld [vmem:[%s270 + $0x30] sm:$0xf]
      %v284 = vld [vmem:[%s270 + $0x34] sm:$0xf]
      %v285 = vld [vmem:[%s270 + $0x38] sm:$0xf]
      %v286 = vld [vmem:[%s270 + $0x3c] sm:$0xf]
      %v288 = vlaneseq
      %v289 = vshrl.u32 %v288, 7
      %v290 = vsub.s32 0, %v289
      %v291 = vrot.slane %v267, %v290
      %v309 = vunpack.c.l.b16 %v271
      %v310 = vunpack.c.l.b16 %v272
      %v311 = vunpack.c.l.b16 %v273
      %v312 = vunpack.c.l.b16 %v274
      %v313 = vunpack.c.l.b16 %v275
      %v314 = vunpack.c.l.b16 %v276
      %v315 = vunpack.c.l.b16 %v277
      %v316 = vunpack.c.l.b16 %v278
      %v317 = vunpack.c.l.b16 %v279
      %v318 = vunpack.c.l.b16 %v280
      %v319 = vunpack.c.l.b16 %v281
      %v320 = vunpack.c.l.b16 %v282
      %v321 = vunpack.c.l.b16 %v283
      %v322 = vunpack.c.l.b16 %v284
      %v323 = vunpack.c.l.b16 %v285
      %v324 = vunpack.c.l.b16 %v286
      %v325 = vpack.c.b16 %v310, %v309
      %v326 = vpack.c.b16 %v312, %v311
      %v327 = vpack.c.b16 %v314, %v313
      %v328 = vpack.c.b16 %v316, %v315
      %v329 = vpack.c.b16 %v318, %v317
      %v330 = vpack.c.b16 %v320, %v319
      %v331 = vpack.c.b16 %v322, %v321
      %v332 = vpack.c.b16 %v324, %v323
      %v357 = vunpack.c.l.b16 %v251
      %v358 = vunpack.c.l.b16 %v252
      %v359 = vunpack.c.l.b16 %v253
      %v360 = vunpack.c.l.b16 %v254
      %v361 = vunpack.c.l.b16 %v255
      %v362 = vunpack.c.l.b16 %v256
      %v363 = vunpack.c.l.b16 %v257
      %v364 = vunpack.c.l.b16 %v258
      %v365 = vunpack.c.l.b16 %v259
      %v366 = vunpack.c.l.b16 %v260
      %v367 = vunpack.c.l.b16 %v261
      %v368 = vunpack.c.l.b16 %v262
      %v369 = vunpack.c.l.b16 %v263
      %v370 = vunpack.c.l.b16 %v264
      %v371 = vunpack.c.l.b16 %v265
      %v372 = vunpack.c.l.b16 %v266
      %v373 = vpack.c.b16 %v358, %v357
      %v374 = vpack.c.b16 %v360, %v359
      %v375 = vpack.c.b16 %v362, %v361
      %v376 = vpack.c.b16 %v364, %v363
      %v377 = vpack.c.b16 %v366, %v365
      %v378 = vpack.c.b16 %v368, %v367
      %v379 = vpack.c.b16 %v370, %v369
      %v380 = vpack.c.b16 %v372, %v371
      %389 = vmatprep.subr.bf16.mxu0 0
      %390 = vmatpush1.bf16.msra.mxu0 %v380
      %391 = vmatprep.subr.bf16.mxu0 0
      %392 = vmatpush1.bf16.msra.mxu0 %v379
      %393 = vmatprep.subr.bf16.mxu0 0
      %394 = vmatpush1.bf16.msra.mxu0 %v378
      %395 = vmatprep.subr.bf16.mxu0 0
      %396 = vmatpush1.bf16.msra.mxu0 %v377
      %397 = vmatprep.subr.bf16.mxu0 0
      %398 = vmatpush1.bf16.msra.mxu0 %v376
      %399 = vmatprep.subr.bf16.mxu0 0
      %400 = vmatpush1.bf16.msra.mxu0 %v375
      %401 = vmatprep.subr.bf16.mxu0 0
      %402 = vmatpush1.bf16.msra.mxu0 %v374
      %403 = vmatprep.subr.bf16.mxu0 0
      %404 = vmatpush1.bf16.msra.mxu0 %v373
      %405 = vmatprep.subr.bf16.mxu0 0
      %406 = vmatpush2.bf16.msra.mxu0 0
      %407 = vmatprep.subr.bf16.mxu0 0
      %408 = vmatpush2.bf16.msra.mxu0 0
      %409 = vmatprep.subr.bf16.mxu0 0
      %410 = vmatpush2.bf16.msra.mxu0 0
      %411 = vmatprep.subr.bf16.mxu0 0
      %412 = vmatpush2.bf16.msra.mxu0 0
      %413 = vmatprep.subr.bf16.mxu0 0
      %414 = vmatpush2.bf16.msra.mxu0 0
      %415 = vmatprep.subr.bf16.mxu0 0
      %416 = vmatpush2.bf16.msra.mxu0 0
      %417 = vmatprep.subr.bf16.mxu0 0
      %418 = vmatpush2.bf16.msra.mxu0 0
      %419 = vmatprep.subr.bf16.mxu0 0
      %420 = vmatpush2.bf16.msra.mxu0 0
      %421 = vmatprep.mubr.bf16.mxu0 0
      %422 = vmatmul.mubr.bf16.gmra.mxu0 %v325
      %v423 = vpop.f32.mrf.mxu0
      %v424 = vadd.f32 %v291, %v423
      %v425 = vpop.f32.mrf.mxu0
      %v426 = vpop.f32.mrf.mxu0
      %v427 = vadd.f32 %v291, %v426
      %v428 = vpop.f32.mrf.mxu0
      %429 = vmatprep.mubr.bf16.mxu0 0
      %430 = vmatmul.mubr.bf16.gmra.mxu0 %v326
      %v431 = vpop.f32.mrf.mxu0
      %v432 = vadd.f32 %v291, %v431
      %v433 = vpop.f32.mrf.mxu0
      %v434 = vpop.f32.mrf.mxu0
      %v435 = vadd.f32 %v291, %v434
      %v436 = vpop.f32.mrf.mxu0
      %437 = vmatprep.mubr.bf16.mxu0 0
      %438 = vmatmul.mubr.bf16.gmra.mxu0 %v327
      %v439 = vpop.f32.mrf.mxu0
      %v440 = vadd.f32 %v291, %v439
      %v441 = vpop.f32.mrf.mxu0
      %v442 = vpop.f32.mrf.mxu0
      %v443 = vadd.f32 %v291, %v442
      %v444 = vpop.f32.mrf.mxu0
      %445 = vmatprep.mubr.bf16.mxu0 0
      %446 = vmatmul.mubr.bf16.gmra.mxu0 %v328
      %v447 = vpop.f32.mrf.mxu0
      %v448 = vadd.f32 %v291, %v447
      %v449 = vpop.f32.mrf.mxu0
      %v450 = vpop.f32.mrf.mxu0
      %v451 = vadd.f32 %v291, %v450
      %v452 = vpop.f32.mrf.mxu0
      %453 = vmatprep.mubr.bf16.mxu0 0
      %454 = vmatmul.mubr.bf16.gmra.mxu0 %v329
      %v455 = vpop.f32.mrf.mxu0
      %v456 = vadd.f32 %v291, %v455
      %v457 = vpop.f32.mrf.mxu0
      %v458 = vpop.f32.mrf.mxu0
      %v459 = vadd.f32 %v291, %v458
      %v460 = vpop.f32.mrf.mxu0
      %461 = vmatprep.mubr.bf16.mxu0 0
      %462 = vmatmul.mubr.bf16.gmra.mxu0 %v330
      %v463 = vpop.f32.mrf.mxu0
      %v464 = vadd.f32 %v291, %v463
      %v465 = vpop.f32.mrf.mxu0
      %v466 = vpop.f32.mrf.mxu0
      %v467 = vadd.f32 %v291, %v466
      %v468 = vpop.f32.mrf.mxu0
      %469 = vmatprep.mubr.bf16.mxu0 0
      %470 = vmatmul.mubr.bf16.gmra.mxu0 %v331
      %v471 = vpop.f32.mrf.mxu0
      %v472 = vadd.f32 %v291, %v471
      %v473 = vpop.f32.mrf.mxu0
      %v474 = vpop.f32.mrf.mxu0
      %v475 = vadd.f32 %v291, %v474
      %v476 = vpop.f32.mrf.mxu0
      %477 = vmatprep.mubr.bf16.mxu0 0
      %478 = vmatmul.mubr.bf16.gmra.mxu0 %v332
      %v479 = vpop.f32.mrf.mxu0
      %v480 = vadd.f32 %v291, %v479
      %v481 = vpop.f32.mrf.mxu0
      %v482 = vpop.f32.mrf.mxu0
      %v483 = vadd.f32 %v291, %v482
      %v484 = vpop.f32.mrf.mxu0
      %485 = vdwg.mxu0
      %v486 = vmul.f32 %v424, 0.01
      %v487 = vmul.f32 %v427, 0.01
      %v488 = vmul.f32 %v432, 0.01
      %v489 = vmul.f32 %v435, 0.01
      %v490 = vmul.f32 %v440, 0.01
      %v491 = vmul.f32 %v443, 0.01
      %v492 = vmul.f32 %v448, 0.01
      %v493 = vmul.f32 %v451, 0.01
      %v494 = vmul.f32 %v456, 0.01
      %v495 = vmul.f32 %v459, 0.01
      %v496 = vmul.f32 %v464, 0.01
      %v497 = vmul.f32 %v467, 0.01
      %v498 = vmul.f32 %v472, 0.01
      %v499 = vmul.f32 %v475, 0.01
      %v500 = vmul.f32 %v480, 0.01
      %v501 = vmul.f32 %v483, 0.01
      %v502 = vmax.f32 %v424, %v486
      %v503 = vmax.f32 %v427, %v487
      %v504 = vmax.f32 %v432, %v488
      %v505 = vmax.f32 %v435, %v489
      %v506 = vmax.f32 %v440, %v490
      %v507 = vmax.f32 %v443, %v491
      %v508 = vmax.f32 %v448, %v492
      %v509 = vmax.f32 %v451, %v493
      %v510 = vmax.f32 %v456, %v494
      %v511 = vmax.f32 %v459, %v495
      %v512 = vmax.f32 %v464, %v496
      %v513 = vmax.f32 %v467, %v497
      %v514 = vmax.f32 %v472, %v498
      %v515 = vmax.f32 %v475, %v499
      %v516 = vmax.f32 %v480, %v500
      %v517 = vmax.f32 %v483, %v501
      %s518 = sadd.s32 0, 1
      %s519 = smul.u32 %s518, 24
      %s520 = scalar_lea.vmem [#allocation2], %s519
      %521 = vst.msk [vmem:[%s520] sm:$0xff] %vm226, %v502
      %522 = vst.msk [vmem:[%s520 + $0x8] sm:$0xff] %vm226, %v503
      %523 = vst.msk [vmem:[%s520 + $0x18] sm:$0xff] %vm226, %v504
      %524 = vst.msk [vmem:[%s520 + $0x20] sm:$0xff] %vm226, %v505
      %525 = vst.msk [vmem:[%s520 + $0x30] sm:$0xff] %vm226, %v506
      %526 = vst.msk [vmem:[%s520 + $0x38] sm:$0xff] %vm226, %v507
      %527 = vst.msk [vmem:[%s520 + $0x48] sm:$0xff] %vm226, %v508
      %528 = vst.msk [vmem:[%s520 + $0x50] sm:$0xff] %vm226, %v509
      %529 = vst.msk [vmem:[%s520 + $0x60] sm:$0xff] %vm226, %v510
      %530 = vst.msk [vmem:[%s520 + $0x68] sm:$0xff] %vm226, %v511
      %531 = vst.msk [vmem:[%s520 + $0x78] sm:$0xff] %vm226, %v512
      %532 = vst.msk [vmem:[%s520 + $0x80] sm:$0xff] %vm226, %v513
      %533 = vst.msk [vmem:[%s520 + $0x90] sm:$0xff] %vm226, %v514
      %534 = vst.msk [vmem:[%s520 + $0x98] sm:$0xff] %vm226, %v515
      %535 = vst.msk [vmem:[%s520 + $0xa8] sm:$0xff] %vm226, %v516
      %536 = vst.msk [vmem:[%s520 + $0xb0] sm:$0xff] %vm226, %v517
      %s537 = smul.u32 8, 2
      %s538 = smul.addr %s537, 4
      %s539 = scalar_lea.vmem %s219, %s538
      %v540 = vld [vmem:[%s539] sm:$0xf]
      %v541 = vld [vmem:[%s539 + $0x4] sm:$0xf]
      %v542 = vld [vmem:[%s539 + $0x8] sm:$0xf]
      %v543 = vld [vmem:[%s539 + $0xc] sm:$0xf]
      %v544 = vld [vmem:[%s539 + $0x10] sm:$0xf]
      %v545 = vld [vmem:[%s539 + $0x14] sm:$0xf]
      %v546 = vld [vmem:[%s539 + $0x18] sm:$0xf]
      %v547 = vld [vmem:[%s539 + $0x1c] sm:$0xf]
      %v548 = vld [vmem:[%s539 + $0x20] sm:$0xf]
      %v549 = vld [vmem:[%s539 + $0x24] sm:$0xf]
      %v550 = vld [vmem:[%s539 + $0x28] sm:$0xf]
      %v551 = vld [vmem:[%s539 + $0x2c] sm:$0xf]
      %v552 = vld [vmem:[%s539 + $0x30] sm:$0xf]
      %v553 = vld [vmem:[%s539 + $0x34] sm:$0xf]
      %v554 = vld [vmem:[%s539 + $0x38] sm:$0xf]
      %v555 = vld [vmem:[%s539 + $0x3c] sm:$0xf]
      %v572 = vunpack.c.l.b16 %v540
      %v573 = vunpack.c.l.b16 %v541
      %v574 = vunpack.c.l.b16 %v542
      %v575 = vunpack.c.l.b16 %v543
      %v576 = vunpack.c.l.b16 %v544
      %v577 = vunpack.c.l.b16 %v545
      %v578 = vunpack.c.l.b16 %v546
      %v579 = vunpack.c.l.b16 %v547
      %v580 = vunpack.c.l.b16 %v548
      %v581 = vunpack.c.l.b16 %v549
      %v582 = vunpack.c.l.b16 %v550
      %v583 = vunpack.c.l.b16 %v551
      %v584 = vunpack.c.l.b16 %v552
      %v585 = vunpack.c.l.b16 %v553
      %v586 = vunpack.c.l.b16 %v554
      %v587 = vunpack.c.l.b16 %v555
      %v588 = vpack.c.b16 %v573, %v572
      %v589 = vpack.c.b16 %v575, %v574
      %v590 = vpack.c.b16 %v577, %v576
      %v591 = vpack.c.b16 %v579, %v578
      %v592 = vpack.c.b16 %v581, %v580
      %v593 = vpack.c.b16 %v583, %v582
      %v594 = vpack.c.b16 %v585, %v584
      %v595 = vpack.c.b16 %v587, %v586
      %604 = vmatprep.subr.bf16.mxu0 0
      %605 = vmatpush1.bf16.msra.mxu0 %v380
      %606 = vmatprep.subr.bf16.mxu0 0
      %607 = vmatpush1.bf16.msra.mxu0 %v379
      %608 = vmatprep.subr.bf16.mxu0 0
      %609 = vmatpush1.bf16.msra.mxu0 %v378
      %610 = vmatprep.subr.bf16.mxu0 0
      %611 = vmatpush1.bf16.msra.mxu0 %v377
      %612 = vmatprep.subr.bf16.mxu0 0
      %613 = vmatpush1.bf16.msra.mxu0 %v376
      %614 = vmatprep.subr.bf16.mxu0 0
      %615 = vmatpush1.bf16.msra.mxu0 %v375
      %616 = vmatprep.subr.bf16.mxu0 0
      %617 = vmatpush1.bf16.msra.mxu0 %v374
      %618 = vmatprep.subr.bf16.mxu0 0
      %619 = vmatpush1.bf16.msra.mxu0 %v373
      %620 = vmatprep.subr.bf16.mxu0 0
      %621 = vmatpush2.bf16.msra.mxu0 0
      %622 = vmatprep.subr.bf16.mxu0 0
      %623 = vmatpush2.bf16.msra.mxu0 0
      %624 = vmatprep.subr.bf16.mxu0 0
      %625 = vmatpush2.bf16.msra.mxu0 0
      %626 = vmatprep.subr.bf16.mxu0 0
      %627 = vmatpush2.bf16.msra.mxu0 0
      %628 = vmatprep.subr.bf16.mxu0 0
      %629 = vmatpush2.bf16.msra.mxu0 0
      %630 = vmatprep.subr.bf16.mxu0 0
      %631 = vmatpush2.bf16.msra.mxu0 0
      %632 = vmatprep.subr.bf16.mxu0 0
      %633 = vmatpush2.bf16.msra.mxu0 0
      %634 = vmatprep.subr.bf16.mxu0 0
      %635 = vmatpush2.bf16.msra.mxu0 0
      %636 = vmatprep.mubr.bf16.mxu0 0
      %637 = vmatmul.mubr.bf16.gmra.mxu0 %v588
      %v638 = vpop.f32.mrf.mxu0
      %v639 = vadd.f32 %v291, %v638
      %v640 = vpop.f32.mrf.mxu0
      %v641 = vpop.f32.mrf.mxu0
      %v642 = vadd.f32 %v291, %v641
      %v643 = vpop.f32.mrf.mxu0
      %644 = vmatprep.mubr.bf16.mxu0 0
      %645 = vmatmul.mubr.bf16.gmra.mxu0 %v589
      %v646 = vpop.f32.mrf.mxu0
      %v647 = vadd.f32 %v291, %v646
      %v648 = vpop.f32.mrf.mxu0
      %v649 = vpop.f32.mrf.mxu0
      %v650 = vadd.f32 %v291, %v649
      %v651 = vpop.f32.mrf.mxu0
      %652 = vmatprep.mubr.bf16.mxu0 0
      %653 = vmatmul.mubr.bf16.gmra.mxu0 %v590
      %v654 = vpop.f32.mrf.mxu0
      %v655 = vadd.f32 %v291, %v654
      %v656 = vpop.f32.mrf.mxu0
      %v657 = vpop.f32.mrf.mxu0
      %v658 = vadd.f32 %v291, %v657
      %v659 = vpop.f32.mrf.mxu0
      %660 = vmatprep.mubr.bf16.mxu0 0
      %661 = vmatmul.mubr.bf16.gmra.mxu0 %v591
      %v662 = vpop.f32.mrf.mxu0
      %v663 = vadd.f32 %v291, %v662
      %v664 = vpop.f32.mrf.mxu0
      %v665 = vpop.f32.mrf.mxu0
      %v666 = vadd.f32 %v291, %v665
      %v667 = vpop.f32.mrf.mxu0
      %668 = vmatprep.mubr.bf16.mxu0 0
      %669 = vmatmul.mubr.bf16.gmra.mxu0 %v592
      %v670 = vpop.f32.mrf.mxu0
      %v671 = vadd.f32 %v291, %v670
      %v672 = vpop.f32.mrf.mxu0
      %v673 = vpop.f32.mrf.mxu0
      %v674 = vadd.f32 %v291, %v673
      %v675 = vpop.f32.mrf.mxu0
      %676 = vmatprep.mubr.bf16.mxu0 0
      %677 = vmatmul.mubr.bf16.gmra.mxu0 %v593
      %v678 = vpop.f32.mrf.mxu0
      %v679 = vadd.f32 %v291, %v678
      %v680 = vpop.f32.mrf.mxu0
      %v681 = vpop.f32.mrf.mxu0
      %v682 = vadd.f32 %v291, %v681
      %v683 = vpop.f32.mrf.mxu0
      %684 = vmatprep.mubr.bf16.mxu0 0
      %685 = vmatmul.mubr.bf16.gmra.mxu0 %v594
      %v686 = vpop.f32.mrf.mxu0
      %v687 = vadd.f32 %v291, %v686
      %v688 = vpop.f32.mrf.mxu0
      %v689 = vpop.f32.mrf.mxu0
      %v690 = vadd.f32 %v291, %v689
      %v691 = vpop.f32.mrf.mxu0
      %692 = vmatprep.mubr.bf16.mxu0 0
      %693 = vmatmul.mubr.bf16.gmra.mxu0 %v595
      %v694 = vpop.f32.mrf.mxu0
      %v695 = vadd.f32 %v291, %v694
      %v696 = vpop.f32.mrf.mxu0
      %v697 = vpop.f32.mrf.mxu0
      %v698 = vadd.f32 %v291, %v697
      %v699 = vpop.f32.mrf.mxu0
      %700 = vdwg.mxu0
      %v701 = vmul.f32 %v639, 0.01
      %v702 = vmul.f32 %v642, 0.01
      %v703 = vmul.f32 %v647, 0.01
      %v704 = vmul.f32 %v650, 0.01
      %v705 = vmul.f32 %v655, 0.01
      %v706 = vmul.f32 %v658, 0.01
      %v707 = vmul.f32 %v663, 0.01
      %v708 = vmul.f32 %v666, 0.01
      %v709 = vmul.f32 %v671, 0.01
      %v710 = vmul.f32 %v674, 0.01
      %v711 = vmul.f32 %v679, 0.01
      %v712 = vmul.f32 %v682, 0.01
      %v713 = vmul.f32 %v687, 0.01
      %v714 = vmul.f32 %v690, 0.01
      %v715 = vmul.f32 %v695, 0.01
      %v716 = vmul.f32 %v698, 0.01
      %v717 = vmax.f32 %v639, %v701
      %v718 = vmax.f32 %v642, %v702
      %v719 = vmax.f32 %v647, %v703
      %v720 = vmax.f32 %v650, %v704
      %v721 = vmax.f32 %v655, %v705
      %v722 = vmax.f32 %v658, %v706
      %v723 = vmax.f32 %v663, %v707
      %v724 = vmax.f32 %v666, %v708
      %v725 = vmax.f32 %v671, %v709
      %v726 = vmax.f32 %v674, %v710
      %v727 = vmax.f32 %v679, %v711
      %v728 = vmax.f32 %v682, %v712
      %v729 = vmax.f32 %v687, %v713
      %v730 = vmax.f32 %v690, %v714
      %v731 = vmax.f32 %v695, %v715
      %v732 = vmax.f32 %v698, %v716
      %s733 = sadd.s32 8, 1
      %s734 = smul.u32 %s733, 24
      %s735 = scalar_lea.vmem [#allocation2], %s734
      %736 = vst.msk [vmem:[%s735] sm:$0xff] %vm226, %v717
      %737 = vst.msk [vmem:[%s735 + $0x8] sm:$0xff] %vm226, %v718
      %738 = vst.msk [vmem:[%s735 + $0x18] sm:$0xff] %vm226, %v719
      %739 = vst.msk [vmem:[%s735 + $0x20] sm:$0xff] %vm226, %v720
      %740 = vst.msk [vmem:[%s735 + $0x30] sm:$0xff] %vm226, %v721
      %741 = vst.msk [vmem:[%s735 + $0x38] sm:$0xff] %vm226, %v722
      %742 = vst.msk [vmem:[%s735 + $0x48] sm:$0xff] %vm226, %v723
      %743 = vst.msk [vmem:[%s735 + $0x50] sm:$0xff] %vm226, %v724
      %744 = vst.msk [vmem:[%s735 + $0x60] sm:$0xff] %vm226, %v725
      %745 = vst.msk [vmem:[%s735 + $0x68] sm:$0xff] %vm226, %v726
      %746 = vst.msk [vmem:[%s735 + $0x78] sm:$0xff] %vm226, %v727
      %747 = vst.msk [vmem:[%s735 + $0x80] sm:$0xff] %vm226, %v728
      %748 = vst.msk [vmem:[%s735 + $0x90] sm:$0xff] %vm226, %v729
      %749 = vst.msk [vmem:[%s735 + $0x98] sm:$0xff] %vm226, %v730
      %750 = vst.msk [vmem:[%s735 + $0xa8] sm:$0xff] %vm226, %v731
      %751 = vst.msk [vmem:[%s735 + $0xb0] sm:$0xff] %vm226, %v732
      %v752 = vld [vmem:[%s4] sm:$0x1]
      %s753 = smul.u32 0, 24
      %s754 = scalar_lea.vmem [#allocation2], %s753
      %v755 = vld [vmem:[%s754] sm:$0xff]
      %v756 = vld [vmem:[%s754 + $0x8] sm:$0xff]
      %v757 = vld [vmem:[%s754 + $0x10] sm:$0xff]
      %v758 = vld [vmem:[%s754 + $0x18] sm:$0xff]
      %v759 = vld [vmem:[%s754 + $0x20] sm:$0xff]
      %v760 = vld [vmem:[%s754 + $0x28] sm:$0xff]
      %v761 = vld [vmem:[%s754 + $0x30] sm:$0xff]
      %v762 = vld [vmem:[%s754 + $0x38] sm:$0xff]
      %v763 = vld [vmem:[%s754 + $0x40] sm:$0xff]
      %v764 = vld [vmem:[%s754 + $0x48] sm:$0xff]
      %v765 = vld [vmem:[%s754 + $0x50] sm:$0xff]
      %v766 = vld [vmem:[%s754 + $0x58] sm:$0xff]
      %v767 = vld [vmem:[%s754 + $0x60] sm:$0xff]
      %v768 = vld [vmem:[%s754 + $0x68] sm:$0xff]
      %v769 = vld [vmem:[%s754 + $0x70] sm:$0xff]
      %v770 = vld [vmem:[%s754 + $0x78] sm:$0xff]
      %v771 = vld [vmem:[%s754 + $0x80] sm:$0xff]
      %v772 = vld [vmem:[%s754 + $0x88] sm:$0xff]
      %v773 = vld [vmem:[%s754 + $0x90] sm:$0xff]
      %v774 = vld [vmem:[%s754 + $0x98] sm:$0xff]
      %v775 = vld [vmem:[%s754 + $0xa0] sm:$0xff]
      %v776 = vld [vmem:[%s754 + $0xa8] sm:$0xff]
      %v777 = vld [vmem:[%s754 + $0xb0] sm:$0xff]
      %v778 = vld [vmem:[%s754 + $0xb8] sm:$0xff]
      %v779 = vld [vmem:[%s754 + $0xc0] sm:$0xff]
      %v780 = vld [vmem:[%s754 + $0xc8] sm:$0xff]
      %v781 = vld [vmem:[%s754 + $0xd0] sm:$0xff]
      %v782 = vld [vmem:[%s754 + $0xd8] sm:$0xff]
      %v783 = vld [vmem:[%s754 + $0xe0] sm:$0xff]
      %v784 = vld [vmem:[%s754 + $0xe8] sm:$0xff]
      %v785 = vrot.slane %v755, 7
      %v786 = vrot.slane %v758, 7
      %v787 = vrot.slane %v761, 7
      %v788 = vrot.slane %v764, 7
      %v789 = vrot.slane %v767, 7
      %v790 = vrot.slane %v770, 7
      %v791 = vrot.slane %v773, 7
      %v792 = vrot.slane %v776, 7
      %v793 = vrot.slane %v779, 7
      %v794 = vrot.slane %v782, 7
      %v795 = vrot.slane %v756, 7
      %v796 = vrot.slane %v759, 7
      %v797 = vrot.slane %v762, 7
      %v798 = vrot.slane %v765, 7
      %v799 = vrot.slane %v768, 7
      %v800 = vrot.slane %v771, 7
      %v801 = vrot.slane %v774, 7
      %v802 = vrot.slane %v777, 7
      %v803 = vrot.slane %v780, 7
      %v804 = vrot.slane %v783, 7
      %v805 = vrot.slane %v757, 7
      %v806 = vrot.slane %v760, 7
      %v807 = vrot.slane %v763, 7
      %v808 = vrot.slane %v766, 7
      %v809 = vrot.slane %v769, 7
      %v810 = vrot.slane %v772, 7
      %v811 = vrot.slane %v775, 7
      %v812 = vrot.slane %v778, 7
      %v813 = vrot.slane %v781, 7
      %v814 = vrot.slane %v784, 7
      %v815 = vlaneseq
      %v816 = vshrl.u32 %v815, 7
      %vm817 = vcmp.lt.s32.totalorder %v816, 1
      %v818 = vsel %vm817, %v785, %v795
      %v819 = vsel %vm817, %v786, %v796
      %v820 = vsel %vm817, %v787, %v797
      %v821 = vsel %vm817, %v788, %v798
      %v822 = vsel %vm817, %v789, %v799
      %v823 = vsel %vm817, %v790, %v800
      %v824 = vsel %vm817, %v791, %v801
      %v825 = vsel %vm817, %v792, %v802
      %v826 = vsel %vm817, %v793, %v803
      %v827 = vsel %vm817, %v794, %v804
      %v828 = vsel %vm817, %v805, %v785
      %v829 = vsel %vm817, %v806, %v786
      %v830 = vsel %vm817, %v807, %v787
      %v831 = vsel %vm817, %v808, %v788
      %v832 = vsel %vm817, %v809, %v789
      %v833 = vsel %vm817, %v810, %v790
      %v834 = vsel %vm817, %v811, %v791
      %v835 = vsel %vm817, %v812, %v792
      %v836 = vsel %vm817, %v813, %v793
      %v837 = vsel %vm817, %v814, %v794
      %v838 = vrot.slane %v755, 1
      %v839 = vrot.slane %v758, 1
      %v840 = vrot.slane %v761, 1
      %v841 = vrot.slane %v764, 1
      %v842 = vrot.slane %v767, 1
      %v843 = vrot.slane %v770, 1
      %v844 = vrot.slane %v773, 1
      %v845 = vrot.slane %v776, 1
      %v846 = vrot.slane %v779, 1
      %v847 = vrot.slane %v782, 1
      %v848 = vrot.slane %v756, 1
      %v849 = vrot.slane %v759, 1
      %v850 = vrot.slane %v762, 1
      %v851 = vrot.slane %v765, 1
      %v852 = vrot.slane %v768, 1
      %v853 = vrot.slane %v771, 1
      %v854 = vrot.slane %v774, 1
      %v855 = vrot.slane %v777, 1
      %v856 = vrot.slane %v780, 1
      %v857 = vrot.slane %v783, 1
      %v858 = vrot.slane %v757, 1
      %v859 = vrot.slane %v760, 1
      %v860 = vrot.slane %v763, 1
      %v861 = vrot.slane %v766, 1
      %v862 = vrot.slane %v769, 1
      %v863 = vrot.slane %v772, 1
      %v864 = vrot.slane %v775, 1
      %v865 = vrot.slane %v778, 1
      %v866 = vrot.slane %v781, 1
      %v867 = vrot.slane %v784, 1
      %vm868 = vcmp.lt.s32.totalorder %v816, 7
      %v869 = vsel %vm868, %v848, %v858
      %v870 = vsel %vm868, %v849, %v859
      %v871 = vsel %vm868, %v850, %v860
      %v872 = vsel %vm868, %v851, %v861
      %v873 = vsel %vm868, %v852, %v862
      %v874 = vsel %vm868, %v853, %v863
      %v875 = vsel %vm868, %v854, %v864
      %v876 = vsel %vm868, %v855, %v865
      %v877 = vsel %vm868, %v856, %v866
      %v878 = vsel %vm868, %v857, %v867
      %v879 = vsel %vm868, %v838, %v848
      %v880 = vsel %vm868, %v839, %v849
      %v881 = vsel %vm868, %v840, %v850
      %v882 = vsel %vm868, %v841, %v851
      %v883 = vsel %vm868, %v842, %v852
      %v884 = vsel %vm868, %v843, %v853
      %v885 = vsel %vm868, %v844, %v854
      %v886 = vsel %vm868, %v845, %v855
      %v887 = vsel %vm868, %v846, %v856
      %v888 = vsel %vm868, %v847, %v857
      %v889 = vpack.c.bf16 %v818, %v828
      %v890 = vpack.c.bf16 %v819, %v829
      %v891 = vpack.c.bf16 %v820, %v830
      %v892 = vpack.c.bf16 %v821, %v831
      %v893 = vpack.c.bf16 %v822, %v832
      %v894 = vpack.c.bf16 %v823, %v833
      %v895 = vpack.c.bf16 %v824, %v834
      %v896 = vpack.c.bf16 %v825, %v835
      %v897 = vpack.c.bf16 %v756, %v755
      %v898 = vpack.c.bf16 %v759, %v758
      %v899 = vpack.c.bf16 %v762, %v761
      %v900 = vpack.c.bf16 %v765, %v764
      %v901 = vpack.c.bf16 %v768, %v767
      %v902 = vpack.c.bf16 %v771, %v770
      %v903 = vpack.c.bf16 %v774, %v773
      %v904 = vpack.c.bf16 %v777, %v776
      %v905 = vpack.c.bf16 %v869, %v879
      %v906 = vpack.c.bf16 %v870, %v880
      %v907 = vpack.c.bf16 %v871, %v881
      %v908 = vpack.c.bf16 %v872, %v882
      %v909 = vpack.c.bf16 %v873, %v883
      %v910 = vpack.c.bf16 %v874, %v884
      %v911 = vpack.c.bf16 %v875, %v885
      %v912 = vpack.c.bf16 %v876, %v886
      %921 = vrot.lane.b32.xlu0 %v897, 64
      %v922 = vpop.permute.xlu0 %921
      %923 = vrot.lane.b32.xlu0 %v898, 64
      %v924 = vpop.permute.xlu0 %923
      %925 = vrot.lane.b32.xlu0 %v899, 64
      %v926 = vpop.permute.xlu0 %925
      %927 = vrot.lane.b32.xlu0 %v900, 64
      %v928 = vpop.permute.xlu0 %927
      %929 = vrot.lane.b32.xlu0 %v901, 64
      %v930 = vpop.permute.xlu0 %929
      %931 = vrot.lane.b32.xlu0 %v902, 64
      %v932 = vpop.permute.xlu0 %931
      %933 = vrot.lane.b32.xlu0 %v903, 64
      %v934 = vpop.permute.xlu0 %933
      %935 = vrot.lane.b32.xlu0 %v904, 64
      %v936 = vpop.permute.xlu0 %935
      %v939 = vsel %vm226, %v889, %v922
      %v943 = vsel %vm226, %v890, %v924
      %v947 = vsel %vm226, %v891, %v926
      %v951 = vsel %vm226, %v892, %v928
      %v955 = vsel %vm226, %v893, %v930
      %v959 = vsel %vm226, %v894, %v932
      %v963 = vsel %vm226, %v895, %v934
      %v967 = vsel %vm226, %v896, %v936
      %v969 = vld [vmem:[%s3] sm:$0xf]
      %v970 = vld [vmem:[%s3 + $0x4] sm:$0xf]
      %v971 = vld [vmem:[%s3 + $0x8] sm:$0xf]
      %v972 = vld [vmem:[%s3 + $0xc] sm:$0xf]
      %v973 = vld [vmem:[%s3 + $0x10] sm:$0xf]
      %v974 = vld [vmem:[%s3 + $0x14] sm:$0xf]
      %v975 = vld [vmem:[%s3 + $0x18] sm:$0xf]
      %v976 = vld [vmem:[%s3 + $0x1c] sm:$0xf]
      %v977 = vld [vmem:[%s3 + $0x20] sm:$0xf]
      %v978 = vld [vmem:[%s3 + $0x24] sm:$0xf]
      %v979 = vld [vmem:[%s3 + $0x28] sm:$0xf]
      %v980 = vld [vmem:[%s3 + $0x2c] sm:$0xf]
      %v981 = vld [vmem:[%s3 + $0x30] sm:$0xf]
      %v982 = vld [vmem:[%s3 + $0x34] sm:$0xf]
      %v983 = vld [vmem:[%s3 + $0x38] sm:$0xf]
      %v984 = vld [vmem:[%s3 + $0x3c] sm:$0xf]
      %v985 = vld [vmem:[%s3 + $0x40] sm:$0xf]
      %v986 = vld [vmem:[%s3 + $0x44] sm:$0xf]
      %v987 = vld [vmem:[%s3 + $0x48] sm:$0xf]
      %v988 = vld [vmem:[%s3 + $0x4c] sm:$0xf]
      %v989 = vld [vmem:[%s3 + $0x50] sm:$0xf]
      %v990 = vld [vmem:[%s3 + $0x54] sm:$0xf]
      %v991 = vld [vmem:[%s3 + $0x58] sm:$0xf]
      %v992 = vld [vmem:[%s3 + $0x5c] sm:$0xf]
      %v993 = vpack.c.bf16 %v826, %v836
      %v994 = vpack.c.bf16 %v780, %v779
      %v995 = vpack.c.bf16 %v877, %v887
      %997 = vrot.lane.b32.xlu0 %v994, 64
      %v998 = vpop.permute.xlu0 %997
      %v1001 = vsel %vm226, %v993, %v998
      %s1003 = scalar_lea.vmem %s3, 96
      %v1004 = vld [vmem:[%s1003] sm:$0xf]
      %v1005 = vld [vmem:[%s1003 + $0x4] sm:$0xf]
      %v1006 = vld [vmem:[%s1003 + $0x8] sm:$0xf]
      %v1007 = vld [vmem:[%s1003 + $0xc] sm:$0xf]
      %v1008 = vld [vmem:[%s1003 + $0x10] sm:$0xf]
      %v1009 = vld [vmem:[%s1003 + $0x14] sm:$0xf]
      %v1010 = vld [vmem:[%s1003 + $0x18] sm:$0xf]
      %v1011 = vld [vmem:[%s1003 + $0x1c] sm:$0xf]
      %v1012 = vld [vmem:[%s1003 + $0x20] sm:$0xf]
      %v1013 = vld [vmem:[%s1003 + $0x24] sm:$0xf]
      %v1014 = vld [vmem:[%s1003 + $0x28] sm:$0xf]
      %v1015 = vld [vmem:[%s1003 + $0x2c] sm:$0xf]
      %v1016 = vld [vmem:[%s1003 + $0x30] sm:$0xf]
      %v1017 = vld [vmem:[%s1003 + $0x34] sm:$0xf]
      %v1018 = vld [vmem:[%s1003 + $0x38] sm:$0xf]
      %v1019 = vld [vmem:[%s1003 + $0x3c] sm:$0xf]
      %v1020 = vld [vmem:[%s1003 + $0x40] sm:$0xf]
      %v1021 = vld [vmem:[%s1003 + $0x44] sm:$0xf]
      %v1022 = vld [vmem:[%s1003 + $0x48] sm:$0xf]
      %v1023 = vld [vmem:[%s1003 + $0x4c] sm:$0xf]
      %v1024 = vld [vmem:[%s1003 + $0x50] sm:$0xf]
      %v1025 = vld [vmem:[%s1003 + $0x54] sm:$0xf]
      %v1026 = vld [vmem:[%s1003 + $0x58] sm:$0xf]
      %v1027 = vld [vmem:[%s1003 + $0x5c] sm:$0xf]
      %v1052 = vunpack.c.l.b16 %v1004
      %v1053 = vunpack.c.l.b16 %v1005
      %v1054 = vunpack.c.l.b16 %v1006
      %v1055 = vunpack.c.l.b16 %v1007
      %v1056 = vunpack.c.l.b16 %v1008
      %v1057 = vunpack.c.l.b16 %v1009
      %v1058 = vunpack.c.l.b16 %v1010
      %v1059 = vunpack.c.l.b16 %v1011
      %v1060 = vunpack.c.l.b16 %v1012
      %v1061 = vunpack.c.l.b16 %v1013
      %v1062 = vunpack.c.l.b16 %v1014
      %v1063 = vunpack.c.l.b16 %v1015
      %v1064 = vunpack.c.l.b16 %v1016
      %v1065 = vunpack.c.l.b16 %v1017
      %v1066 = vunpack.c.l.b16 %v1018
      %v1067 = vunpack.c.l.b16 %v1019
      %v1068 = vunpack.c.l.b16 %v1020
      %v1069 = vunpack.c.l.b16 %v1021
      %v1070 = vunpack.c.l.b16 %v1022
      %v1071 = vunpack.c.l.b16 %v1023
      %v1072 = vunpack.c.l.b16 %v1024
      %v1073 = vunpack.c.l.b16 %v1025
      %v1074 = vunpack.c.l.b16 %v1026
      %v1075 = vunpack.c.l.b16 %v1027
      %v1076 = vpack.c.b16 %v1053, %v1052
      %v1077 = vpack.c.b16 %v1055, %v1054
      %v1078 = vpack.c.b16 %v1057, %v1056
      %v1079 = vpack.c.b16 %v1059, %v1058
      %v1080 = vpack.c.b16 %v1061, %v1060
      %v1081 = vpack.c.b16 %v1063, %v1062
      %v1082 = vpack.c.b16 %v1065, %v1064
      %v1083 = vpack.c.b16 %v1067, %v1066
      %v1084 = vpack.c.b16 %v1069, %v1068
      %v1085 = vpack.c.b16 %v1071, %v1070
      %v1086 = vpack.c.b16 %v1073, %v1072
      %v1087 = vpack.c.b16 %v1075, %v1074
      %v1101 = vsel %vm226, %v906, 0
      %v1104 = vsel %vm226, %v907, 0
      %v1107 = vsel %vm226, %v908, 0
      %v1110 = vsel %vm226, %v909, 0
      %v1113 = vsel %vm226, %v910, 0
      %v1116 = vsel %vm226, %v911, 0
      %v1119 = vsel %vm226, %v912, 0
      %v1122 = vsel %vm226, %v995, 0
      %1124 = vmatprep.subr.bf16.mxu0 0
      %1125 = vmatpush1.bf16.msra.mxu0 %v1083
      %1126 = vmatprep.subr.bf16.mxu0 0
      %1127 = vmatpush1.bf16.msra.mxu0 %v1082
      %1128 = vmatprep.subr.bf16.mxu0 0
      %1129 = vmatpush1.bf16.msra.mxu0 %v1081
      %1130 = vmatprep.subr.bf16.mxu0 0
      %1131 = vmatpush1.bf16.msra.mxu0 %v1080
      %1132 = vmatprep.subr.bf16.mxu0 0
      %1133 = vmatpush1.bf16.msra.mxu0 %v1079
      %1134 = vmatprep.subr.bf16.mxu0 0
      %1135 = vmatpush1.bf16.msra.mxu0 %v1078
      %1136 = vmatprep.subr.bf16.mxu0 0
      %1137 = vmatpush1.bf16.msra.mxu0 %v1077
      %1138 = vmatprep.subr.bf16.mxu0 0
      %1139 = vmatpush1.bf16.msra.mxu0 %v1076
      %1140 = vmatprep.subr.bf16.mxu0 0
      %1141 = vmatpush2.bf16.msra.mxu0 0
      %1142 = vmatprep.subr.bf16.mxu0 0
      %1143 = vmatpush2.bf16.msra.mxu0 0
      %1144 = vmatprep.subr.bf16.mxu0 0
      %1145 = vmatpush2.bf16.msra.mxu0 0
      %1146 = vmatprep.subr.bf16.mxu0 0
      %1147 = vmatpush2.bf16.msra.mxu0 0
      %1148 = vmatprep.subr.bf16.mxu0 0
      %1149 = vmatpush2.bf16.msra.mxu0 %v1087
      %1150 = vmatprep.subr.bf16.mxu0 0
      %1151 = vmatpush2.bf16.msra.mxu0 %v1086
      %1152 = vmatprep.subr.bf16.mxu0 0
      %1153 = vmatpush2.bf16.msra.mxu0 %v1085
      %1154 = vmatprep.subr.bf16.mxu0 0
      %1155 = vmatpush2.bf16.msra.mxu0 %v1084
      %1156 = vmatprep.mubr.bf16.mxu0 %v1101
      %1157 = vmatmul.mubr.bf16.gmra.mxu0 %v943
      %v1158 = vpop.f32.mrf.mxu0
      %v1159 = vadd.f32 0.0, %v1158
      %v1160 = vpop.f32.mrf.mxu0
      %v1161 = vpop.f32.mrf.mxu0
      %v1162 = vadd.f32 0.0, %v1161
      %v1163 = vpop.f32.mrf.mxu0
      %1164 = vmatprep.mubr.bf16.mxu0 %v1104
      %1165 = vmatmul.mubr.bf16.gmra.mxu0 %v947
      %v1166 = vpop.f32.mrf.mxu0
      %v1167 = vadd.f32 0.0, %v1166
      %v1168 = vpop.f32.mrf.mxu0
      %v1169 = vpop.f32.mrf.mxu0
      %v1170 = vadd.f32 0.0, %v1169
      %v1171 = vpop.f32.mrf.mxu0
      %1172 = vmatprep.mubr.bf16.mxu0 %v1107
      %1173 = vmatmul.mubr.bf16.gmra.mxu0 %v951
      %v1174 = vpop.f32.mrf.mxu0
      %v1175 = vadd.f32 0.0, %v1174
      %v1176 = vpop.f32.mrf.mxu0
      %v1177 = vpop.f32.mrf.mxu0
      %v1178 = vadd.f32 0.0, %v1177
      %v1179 = vpop.f32.mrf.mxu0
      %1180 = vmatprep.mubr.bf16.mxu0 %v1110
      %1181 = vmatmul.mubr.bf16.gmra.mxu0 %v955
      %v1182 = vpop.f32.mrf.mxu0
      %v1183 = vadd.f32 0.0, %v1182
      %v1184 = vpop.f32.mrf.mxu0
      %v1185 = vpop.f32.mrf.mxu0
      %v1186 = vadd.f32 0.0, %v1185
      %v1187 = vpop.f32.mrf.mxu0
      %1188 = vmatprep.mubr.bf16.mxu0 %v1113
      %1189 = vmatmul.mubr.bf16.gmra.mxu0 %v959
      %v1190 = vpop.f32.mrf.mxu0
      %v1191 = vadd.f32 0.0, %v1190
      %v1192 = vpop.f32.mrf.mxu0
      %v1193 = vpop.f32.mrf.mxu0
      %v1194 = vadd.f32 0.0, %v1193
      %v1195 = vpop.f32.mrf.mxu0
      %1196 = vmatprep.mubr.bf16.mxu0 %v1116
      %1197 = vmatmul.mubr.bf16.gmra.mxu0 %v963
      %v1198 = vpop.f32.mrf.mxu0
      %v1199 = vadd.f32 0.0, %v1198
      %v1200 = vpop.f32.mrf.mxu0
      %v1201 = vpop.f32.mrf.mxu0
      %v1202 = vadd.f32 0.0, %v1201
      %v1203 = vpop.f32.mrf.mxu0
      %1204 = vmatprep.mubr.bf16.mxu0 %v1119
      %1205 = vmatmul.mubr.bf16.gmra.mxu0 %v967
      %v1206 = vpop.f32.mrf.mxu0
      %v1207 = vadd.f32 0.0, %v1206
      %v1208 = vpop.f32.mrf.mxu0
      %v1209 = vpop.f32.mrf.mxu0
      %v1210 = vadd.f32 0.0, %v1209
      %v1211 = vpop.f32.mrf.mxu0
      %1212 = vmatprep.mubr.bf16.mxu0 %v1122
      %1213 = vmatmul.mubr.bf16.gmra.mxu0 %v1001
      %v1214 = vpop.f32.mrf.mxu0
      %v1215 = vadd.f32 0.0, %v1214
      %v1216 = vpop.f32.mrf.mxu0
      %v1217 = vpop.f32.mrf.mxu0
      %v1218 = vadd.f32 0.0, %v1217
      %v1219 = vpop.f32.mrf.mxu0
      %1220 = vdwg.mxu0
      %v1245 = vunpack.c.l.b16 %v969
      %v1246 = vunpack.c.l.b16 %v970
      %v1247 = vunpack.c.l.b16 %v971
      %v1248 = vunpack.c.l.b16 %v972
      %v1249 = vunpack.c.l.b16 %v973
      %v1250 = vunpack.c.l.b16 %v974
      %v1251 = vunpack.c.l.b16 %v975
      %v1252 = vunpack.c.l.b16 %v976
      %v1253 = vunpack.c.l.b16 %v977
      %v1254 = vunpack.c.l.b16 %v978
      %v1255 = vunpack.c.l.b16 %v979
      %v1256 = vunpack.c.l.b16 %v980
      %v1257 = vunpack.c.l.b16 %v981
      %v1258 = vunpack.c.l.b16 %v982
      %v1259 = vunpack.c.l.b16 %v983
      %v1260 = vunpack.c.l.b16 %v984
      %v1261 = vunpack.c.l.b16 %v985
      %v1262 = vunpack.c.l.b16 %v986
      %v1263 = vunpack.c.l.b16 %v987
      %v1264 = vunpack.c.l.b16 %v988
      %v1265 = vunpack.c.l.b16 %v989
      %v1266 = vunpack.c.l.b16 %v990
      %v1267 = vunpack.c.l.b16 %v991
      %v1268 = vunpack.c.l.b16 %v992
      %v1269 = vpack.c.b16 %v1246, %v1245
      %v1270 = vpack.c.b16 %v1248, %v1247
      %v1271 = vpack.c.b16 %v1250, %v1249
      %v1272 = vpack.c.b16 %v1252, %v1251
      %v1273 = vpack.c.b16 %v1254, %v1253
      %v1274 = vpack.c.b16 %v1256, %v1255
      %v1275 = vpack.c.b16 %v1258, %v1257
      %v1276 = vpack.c.b16 %v1260, %v1259
      %v1277 = vpack.c.b16 %v1262, %v1261
      %v1278 = vpack.c.b16 %v1264, %v1263
      %v1279 = vpack.c.b16 %v1266, %v1265
      %v1280 = vpack.c.b16 %v1268, %v1267
      %v1294 = vsel %vm226, %v905, 0
      %1296 = vmatprep.subr.bf16.mxu0 0
      %1297 = vmatpush1.bf16.msra.mxu0 %v1276
      %1298 = vmatprep.subr.bf16.mxu0 0
      %1299 = vmatpush1.bf16.msra.mxu0 %v1275
      %1300 = vmatprep.subr.bf16.mxu0 0
      %1301 = vmatpush1.bf16.msra.mxu0 %v1274
      %1302 = vmatprep.subr.bf16.mxu0 0
      %1303 = vmatpush1.bf16.msra.mxu0 %v1273
      %1304 = vmatprep.subr.bf16.mxu0 0
      %1305 = vmatpush1.bf16.msra.mxu0 %v1272
      %1306 = vmatprep.subr.bf16.mxu0 0
      %1307 = vmatpush1.bf16.msra.mxu0 %v1271
      %1308 = vmatprep.subr.bf16.mxu0 0
      %1309 = vmatpush1.bf16.msra.mxu0 %v1270
      %1310 = vmatprep.subr.bf16.mxu0 0
      %1311 = vmatpush1.bf16.msra.mxu0 %v1269
      %1312 = vmatprep.subr.bf16.mxu0 0
      %1313 = vmatpush2.bf16.msra.mxu0 0
      %1314 = vmatprep.subr.bf16.mxu0 0
      %1315 = vmatpush2.bf16.msra.mxu0 0
      %1316 = vmatprep.subr.bf16.mxu0 0
      %1317 = vmatpush2.bf16.msra.mxu0 0
      %1318 = vmatprep.subr.bf16.mxu0 0
      %1319 = vmatpush2.bf16.msra.mxu0 0
      %1320 = vmatprep.subr.bf16.mxu0 0
      %1321 = vmatpush2.bf16.msra.mxu0 %v1280
      %1322 = vmatprep.subr.bf16.mxu0 0
      %1323 = vmatpush2.bf16.msra.mxu0 %v1279
      %1324 = vmatprep.subr.bf16.mxu0 0
      %1325 = vmatpush2.bf16.msra.mxu0 %v1278
      %1326 = vmatprep.subr.bf16.mxu0 0
      %1327 = vmatpush2.bf16.msra.mxu0 %v1277
      %1328 = vmatprep.mubr.bf16.mxu0 %v1294
      %1329 = vmatmul.mubr.bf16.gmra.mxu0 %v939
      %v1330 = vpop.f32.mrf.mxu0
      %v1331 = vadd.f32 %v1159, %v1330
      %v1332 = vpop.f32.mrf.mxu0
      %v1333 = vpop.f32.mrf.mxu0
      %v1334 = vadd.f32 %v1162, %v1333
      %v1335 = vpop.f32.mrf.mxu0
      %1336 = vmatprep.mubr.bf16.mxu0 %v1101
      %1337 = vmatmul.mubr.bf16.gmra.mxu0 %v943
      %v1338 = vpop.f32.mrf.mxu0
      %v1339 = vadd.f32 %v1167, %v1338
      %v1340 = vpop.f32.mrf.mxu0
      %v1341 = vpop.f32.mrf.mxu0
      %v1342 = vadd.f32 %v1170, %v1341
      %v1343 = vpop.f32.mrf.mxu0
      %1344 = vmatprep.mubr.bf16.mxu0 %v1104
      %1345 = vmatmul.mubr.bf16.gmra.mxu0 %v947
      %v1346 = vpop.f32.mrf.mxu0
      %v1347 = vadd.f32 %v1175, %v1346
      %v1348 = vpop.f32.mrf.mxu0
      %v1349 = vpop.f32.mrf.mxu0
      %v1350 = vadd.f32 %v1178, %v1349
      %v1351 = vpop.f32.mrf.mxu0
      %1352 = vmatprep.mubr.bf16.mxu0 %v1107
      %1353 = vmatmul.mubr.bf16.gmra.mxu0 %v951
      %v1354 = vpop.f32.mrf.mxu0
      %v1355 = vadd.f32 %v1183, %v1354
      %v1356 = vpop.f32.mrf.mxu0
      %v1357 = vpop.f32.mrf.mxu0
      %v1358 = vadd.f32 %v1186, %v1357
      %v1359 = vpop.f32.mrf.mxu0
      %1360 = vmatprep.mubr.bf16.mxu0 %v1110
      %1361 = vmatmul.mubr.bf16.gmra.mxu0 %v955
      %v1362 = vpop.f32.mrf.mxu0
      %v1363 = vadd.f32 %v1191, %v1362
      %v1364 = vpop.f32.mrf.mxu0
      %v1365 = vpop.f32.mrf.mxu0
      %v1366 = vadd.f32 %v1194, %v1365
      %v1367 = vpop.f32.mrf.mxu0
      %1368 = vmatprep.mubr.bf16.mxu0 %v1113
      %1369 = vmatmul.mubr.bf16.gmra.mxu0 %v959
      %v1370 = vpop.f32.mrf.mxu0
      %v1371 = vadd.f32 %v1199, %v1370
      %v1372 = vpop.f32.mrf.mxu0
      %v1373 = vpop.f32.mrf.mxu0
      %v1374 = vadd.f32 %v1202, %v1373
      %v1375 = vpop.f32.mrf.mxu0
      %1376 = vmatprep.mubr.bf16.mxu0 %v1116
      %1377 = vmatmul.mubr.bf16.gmra.mxu0 %v963
      %v1378 = vpop.f32.mrf.mxu0
      %v1379 = vadd.f32 %v1207, %v1378
      %v1380 = vpop.f32.mrf.mxu0
      %v1381 = vpop.f32.mrf.mxu0
      %v1382 = vadd.f32 %v1210, %v1381
      %v1383 = vpop.f32.mrf.mxu0
      %1384 = vmatprep.mubr.bf16.mxu0 %v1119
      %1385 = vmatmul.mubr.bf16.gmra.mxu0 %v967
      %v1386 = vpop.f32.mrf.mxu0
      %v1387 = vadd.f32 %v1215, %v1386
      %v1388 = vpop.f32.mrf.mxu0
      %v1389 = vpop.f32.mrf.mxu0
      %v1390 = vadd.f32 %v1218, %v1389
      %v1391 = vpop.f32.mrf.mxu0
      %1392 = vdwg.mxu0
      %v1393 = vpack.c.bf16 %v827, %v837
      %v1394 = vpack.c.bf16 %v783, %v782
      %v1395 = vpack.c.bf16 %v878, %v888
      %1397 = vrot.lane.b32.xlu0 %v1394, 64
      %v1398 = vpop.permute.xlu0 %1397
      %v1401 = vsel %vm226, %v1393, %v1398
      %s1403 = scalar_lea.vmem %s3, 192
      %v1404 = vld [vmem:[%s1403] sm:$0xf]
      %v1405 = vld [vmem:[%s1403 + $0x4] sm:$0xf]
      %v1406 = vld [vmem:[%s1403 + $0x8] sm:$0xf]
      %v1407 = vld [vmem:[%s1403 + $0xc] sm:$0xf]
      %v1408 = vld [vmem:[%s1403 + $0x10] sm:$0xf]
      %v1409 = vld [vmem:[%s1403 + $0x14] sm:$0xf]
      %v1410 = vld [vmem:[%s1403 + $0x18] sm:$0xf]
      %v1411 = vld [vmem:[%s1403 + $0x1c] sm:$0xf]
      %v1412 = vld [vmem:[%s1403 + $0x20] sm:$0xf]
      %v1413 = vld [vmem:[%s1403 + $0x24] sm:$0xf]
      %v1414 = vld [vmem:[%s1403 + $0x28] sm:$0xf]
      %v1415 = vld [vmem:[%s1403 + $0x2c] sm:$0xf]
      %v1416 = vld [vmem:[%s1403 + $0x30] sm:$0xf]
      %v1417 = vld [vmem:[%s1403 + $0x34] sm:$0xf]
      %v1418 = vld [vmem:[%s1403 + $0x38] sm:$0xf]
      %v1419 = vld [vmem:[%s1403 + $0x3c] sm:$0xf]
      %v1420 = vld [vmem:[%s1403 + $0x40] sm:$0xf]
      %v1421 = vld [vmem:[%s1403 + $0x44] sm:$0xf]
      %v1422 = vld [vmem:[%s1403 + $0x48] sm:$0xf]
      %v1423 = vld [vmem:[%s1403 + $0x4c] sm:$0xf]
      %v1424 = vld [vmem:[%s1403 + $0x50] sm:$0xf]
      %v1425 = vld [vmem:[%s1403 + $0x54] sm:$0xf]
      %v1426 = vld [vmem:[%s1403 + $0x58] sm:$0xf]
      %v1427 = vld [vmem:[%s1403 + $0x5c] sm:$0xf]
      %v1452 = vunpack.c.l.b16 %v1404
      %v1453 = vunpack.c.l.b16 %v1405
      %v1454 = vunpack.c.l.b16 %v1406
      %v1455 = vunpack.c.l.b16 %v1407
      %v1456 = vunpack.c.l.b16 %v1408
      %v1457 = vunpack.c.l.b16 %v1409
      %v1458 = vunpack.c.l.b16 %v1410
      %v1459 = vunpack.c.l.b16 %v1411
      %v1460 = vunpack.c.l.b16 %v1412
      %v1461 = vunpack.c.l.b16 %v1413
      %v1462 = vunpack.c.l.b16 %v1414
      %v1463 = vunpack.c.l.b16 %v1415
      %v1464 = vunpack.c.l.b16 %v1416
      %v1465 = vunpack.c.l.b16 %v1417
      %v1466 = vunpack.c.l.b16 %v1418
      %v1467 = vunpack.c.l.b16 %v1419
      %v1468 = vunpack.c.l.b16 %v1420
      %v1469 = vunpack.c.l.b16 %v1421
      %v1470 = vunpack.c.l.b16 %v1422
      %v1471 = vunpack.c.l.b16 %v1423
      %v1472 = vunpack.c.l.b16 %v1424
      %v1473 = vunpack.c.l.b16 %v1425
      %v1474 = vunpack.c.l.b16 %v1426
      %v1475 = vunpack.c.l.b16 %v1427
      %v1476 = vpack.c.b16 %v1453, %v1452
      %v1477 = vpack.c.b16 %v1455, %v1454
      %v1478 = vpack.c.b16 %v1457, %v1456
      %v1479 = vpack.c.b16 %v1459, %v1458
      %v1480 = vpack.c.b16 %v1461, %v1460
      %v1481 = vpack.c.b16 %v1463, %v1462
      %v1482 = vpack.c.b16 %v1465, %v1464
      %v1483 = vpack.c.b16 %v1467, %v1466
      %v1484 = vpack.c.b16 %v1469, %v1468
      %v1485 = vpack.c.b16 %v1471, %v1470
      %v1486 = vpack.c.b16 %v1473, %v1472
      %v1487 = vpack.c.b16 %v1475, %v1474
      %v1501 = vsel %vm226, %v1395, 0
      %1503 = vmatprep.subr.bf16.mxu0 0
      %1504 = vmatpush1.bf16.msra.mxu0 %v1483
      %1505 = vmatprep.subr.bf16.mxu0 0
      %1506 = vmatpush1.bf16.msra.mxu0 %v1482
      %1507 = vmatprep.subr.bf16.mxu0 0
      %1508 = vmatpush1.bf16.msra.mxu0 %v1481
      %1509 = vmatprep.subr.bf16.mxu0 0
      %1510 = vmatpush1.bf16.msra.mxu0 %v1480
      %1511 = vmatprep.subr.bf16.mxu0 0
      %1512 = vmatpush1.bf16.msra.mxu0 %v1479
      %1513 = vmatprep.subr.bf16.mxu0 0
      %1514 = vmatpush1.bf16.msra.mxu0 %v1478
      %1515 = vmatprep.subr.bf16.mxu0 0
      %1516 = vmatpush1.bf16.msra.mxu0 %v1477
      %1517 = vmatprep.subr.bf16.mxu0 0
      %1518 = vmatpush1.bf16.msra.mxu0 %v1476
      %1519 = vmatprep.subr.bf16.mxu0 0
      %1520 = vmatpush2.bf16.msra.mxu0 0
      %1521 = vmatprep.subr.bf16.mxu0 0
      %1522 = vmatpush2.bf16.msra.mxu0 0
      %1523 = vmatprep.subr.bf16.mxu0 0
      %1524 = vmatpush2.bf16.msra.mxu0 0
      %1525 = vmatprep.subr.bf16.mxu0 0
      %1526 = vmatpush2.bf16.msra.mxu0 0
      %1527 = vmatprep.subr.bf16.mxu0 0
      %1528 = vmatpush2.bf16.msra.mxu0 %v1487
      %1529 = vmatprep.subr.bf16.mxu0 0
      %1530 = vmatpush2.bf16.msra.mxu0 %v1486
      %1531 = vmatprep.subr.bf16.mxu0 0
      %1532 = vmatpush2.bf16.msra.mxu0 %v1485
      %1533 = vmatprep.subr.bf16.mxu0 0
      %1534 = vmatpush2.bf16.msra.mxu0 %v1484
      %1535 = vmatprep.mubr.bf16.mxu0 %v1104
      %1536 = vmatmul.mubr.bf16.gmra.mxu0 %v947
      %v1537 = vpop.f32.mrf.mxu0
      %v1538 = vadd.f32 0.0, %v1537
      %v1539 = vpop.f32.mrf.mxu0
      %v1540 = vpop.f32.mrf.mxu0
      %v1541 = vadd.f32 0.0, %v1540
      %v1542 = vpop.f32.mrf.mxu0
      %1543 = vmatprep.mubr.bf16.mxu0 %v1107
      %1544 = vmatmul.mubr.bf16.gmra.mxu0 %v951
      %v1545 = vpop.f32.mrf.mxu0
      %v1546 = vadd.f32 0.0, %v1545
      %v1547 = vpop.f32.mrf.mxu0
      %v1548 = vpop.f32.mrf.mxu0
      %v1549 = vadd.f32 0.0, %v1548
      %v1550 = vpop.f32.mrf.mxu0
      %1551 = vmatprep.mubr.bf16.mxu0 %v1110
      %1552 = vmatmul.mubr.bf16.gmra.mxu0 %v955
      %v1553 = vpop.f32.mrf.mxu0
      %v1554 = vadd.f32 0.0, %v1553
      %v1555 = vpop.f32.mrf.mxu0
      %v1556 = vpop.f32.mrf.mxu0
      %v1557 = vadd.f32 0.0, %v1556
      %v1558 = vpop.f32.mrf.mxu0
      %1559 = vmatprep.mubr.bf16.mxu0 %v1113
      %1560 = vmatmul.mubr.bf16.gmra.mxu0 %v959
      %v1561 = vpop.f32.mrf.mxu0
      %v1562 = vadd.f32 0.0, %v1561
      %v1563 = vpop.f32.mrf.mxu0
      %v1564 = vpop.f32.mrf.mxu0
      %v1565 = vadd.f32 0.0, %v1564
      %v1566 = vpop.f32.mrf.mxu0
      %1567 = vmatprep.mubr.bf16.mxu0 %v1116
      %1568 = vmatmul.mubr.bf16.gmra.mxu0 %v963
      %v1569 = vpop.f32.mrf.mxu0
      %v1570 = vadd.f32 0.0, %v1569
      %v1571 = vpop.f32.mrf.mxu0
      %v1572 = vpop.f32.mrf.mxu0
      %v1573 = vadd.f32 0.0, %v1572
      %v1574 = vpop.f32.mrf.mxu0
      %1575 = vmatprep.mubr.bf16.mxu0 %v1119
      %1576 = vmatmul.mubr.bf16.gmra.mxu0 %v967
      %v1577 = vpop.f32.mrf.mxu0
      %v1578 = vadd.f32 0.0, %v1577
      %v1579 = vpop.f32.mrf.mxu0
      %v1580 = vpop.f32.mrf.mxu0
      %v1581 = vadd.f32 0.0, %v1580
      %v1582 = vpop.f32.mrf.mxu0
      %1583 = vmatprep.mubr.bf16.mxu0 %v1122
      %1584 = vmatmul.mubr.bf16.gmra.mxu0 %v1001
      %v1585 = vpop.f32.mrf.mxu0
      %v1586 = vadd.f32 0.0, %v1585
      %v1587 = vpop.f32.mrf.mxu0
      %v1588 = vpop.f32.mrf.mxu0
      %v1589 = vadd.f32 0.0, %v1588
      %v1590 = vpop.f32.mrf.mxu0
      %1591 = vmatprep.mubr.bf16.mxu0 %v1501
      %1592 = vmatmul.mubr.bf16.gmra.mxu0 %v1401
      %v1593 = vpop.f32.mrf.mxu0
      %v1594 = vadd.f32 0.0, %v1593
      %v1595 = vpop.f32.mrf.mxu0
      %v1596 = vpop.f32.mrf.mxu0
      %v1597 = vadd.f32 0.0, %v1596
      %v1598 = vpop.f32.mrf.mxu0
      %1599 = vdwg.mxu0
      %v1600 = vadd.f32 %v1331, %v1538
      %v1601 = vadd.f32 %v1334, %v1541
      %v1602 = vadd.f32 %v1339, %v1546
      %v1603 = vadd.f32 %v1342, %v1549
      %v1604 = vadd.f32 %v1347, %v1554
      %v1605 = vadd.f32 %v1350, %v1557
      %v1606 = vadd.f32 %v1355, %v1562
      %v1607 = vadd.f32 %v1358, %v1565
      %v1608 = vadd.f32 %v1363, %v1570
      %v1609 = vadd.f32 %v1366, %v1573
      %v1610 = vadd.f32 %v1371, %v1578
      %v1611 = vadd.f32 %v1374, %v1581
      %v1612 = vadd.f32 %v1379, %v1586
      %v1613 = vadd.f32 %v1382, %v1589
      %v1614 = vadd.f32 %v1387, %v1594
      %v1615 = vadd.f32 %v1390, %v1597
      %v1617 = vlaneseq
      %v1618 = vshrl.u32 %v1617, 7
      %v1619 = vsub.s32 0, %v1618
      %v1620 = vrot.slane %v752, %v1619
      %v1622 = vadd.f32 %v1600, %v1620
      %v1623 = vadd.f32 %v1601, %v1620
      %v1624 = vadd.f32 %v1602, %v1620
      %v1625 = vadd.f32 %v1603, %v1620
      %v1626 = vadd.f32 %v1604, %v1620
      %v1627 = vadd.f32 %v1605, %v1620
      %v1628 = vadd.f32 %v1606, %v1620
      %v1629 = vadd.f32 %v1607, %v1620
      %v1630 = vadd.f32 %v1608, %v1620
      %v1631 = vadd.f32 %v1609, %v1620
      %v1632 = vadd.f32 %v1610, %v1620
      %v1633 = vadd.f32 %v1611, %v1620
      %v1634 = vadd.f32 %v1612, %v1620
      %v1635 = vadd.f32 %v1613, %v1620
      %v1636 = vadd.f32 %v1614, %v1620
      %v1637 = vadd.f32 %v1615, %v1620
      %v1638 = vmul.f32 %v1622, 0.01
      %v1639 = vmul.f32 %v1623, 0.01
      %v1640 = vmul.f32 %v1624, 0.01
      %v1641 = vmul.f32 %v1625, 0.01
      %v1642 = vmul.f32 %v1626, 0.01
      %v1643 = vmul.f32 %v1627, 0.01
      %v1644 = vmul.f32 %v1628, 0.01
      %v1645 = vmul.f32 %v1629, 0.01
      %v1646 = vmul.f32 %v1630, 0.01
      %v1647 = vmul.f32 %v1631, 0.01
      %v1648 = vmul.f32 %v1632, 0.01
      %v1649 = vmul.f32 %v1633, 0.01
      %v1650 = vmul.f32 %v1634, 0.01
      %v1651 = vmul.f32 %v1635, 0.01
      %v1652 = vmul.f32 %v1636, 0.01
      %v1653 = vmul.f32 %v1637, 0.01
      %v1654 = vmax.f32 %v1622, %v1638
      %v1655 = vmax.f32 %v1623, %v1639
      %v1656 = vmax.f32 %v1624, %v1640
      %v1657 = vmax.f32 %v1625, %v1641
      %v1658 = vmax.f32 %v1626, %v1642
      %v1659 = vmax.f32 %v1627, %v1643
      %v1660 = vmax.f32 %v1628, %v1644
      %v1661 = vmax.f32 %v1629, %v1645
      %v1662 = vmax.f32 %v1630, %v1646
      %v1663 = vmax.f32 %v1631, %v1647
      %v1664 = vmax.f32 %v1632, %v1648
      %v1665 = vmax.f32 %v1633, %v1649
      %v1666 = vmax.f32 %v1634, %v1650
      %v1667 = vmax.f32 %v1635, %v1651
      %v1668 = vmax.f32 %v1636, %v1652
      %v1669 = vmax.f32 %v1637, %v1653
      %v1670 = vld [vmem:[%s270] sm:$0xf]
      %v1671 = vld [vmem:[%s270 + $0x4] sm:$0xf]
      %v1672 = vld [vmem:[%s270 + $0x8] sm:$0xf]
      %v1673 = vld [vmem:[%s270 + $0xc] sm:$0xf]
      %v1674 = vld [vmem:[%s270 + $0x10] sm:$0xf]
      %v1675 = vld [vmem:[%s270 + $0x14] sm:$0xf]
      %v1676 = vld [vmem:[%s270 + $0x18] sm:$0xf]
      %v1677 = vld [vmem:[%s270 + $0x1c] sm:$0xf]
      %v1678 = vld [vmem:[%s270 + $0x20] sm:$0xf]
      %v1679 = vld [vmem:[%s270 + $0x24] sm:$0xf]
      %v1680 = vld [vmem:[%s270 + $0x28] sm:$0xf]
      %v1681 = vld [vmem:[%s270 + $0x2c] sm:$0xf]
      %v1682 = vld [vmem:[%s270 + $0x30] sm:$0xf]
      %v1683 = vld [vmem:[%s270 + $0x34] sm:$0xf]
      %v1684 = vld [vmem:[%s270 + $0x38] sm:$0xf]
      %v1685 = vld [vmem:[%s270 + $0x3c] sm:$0xf]
      %v1686 = vunpack.c.l.bf16 %v1670
      %v1687 = vunpack.c.l.bf16 %v1671
      %v1688 = vunpack.c.l.bf16 %v1672
      %v1689 = vunpack.c.l.bf16 %v1673
      %v1690 = vunpack.c.l.bf16 %v1674
      %v1691 = vunpack.c.l.bf16 %v1675
      %v1692 = vunpack.c.l.bf16 %v1676
      %v1693 = vunpack.c.l.bf16 %v1677
      %v1694 = vunpack.c.l.bf16 %v1678
      %v1695 = vunpack.c.l.bf16 %v1679
      %v1696 = vunpack.c.l.bf16 %v1680
      %v1697 = vunpack.c.l.bf16 %v1681
      %v1698 = vunpack.c.l.bf16 %v1682
      %v1699 = vunpack.c.l.bf16 %v1683
      %v1700 = vunpack.c.l.bf16 %v1684
      %v1701 = vunpack.c.l.bf16 %v1685
      %v1702 = vadd.f32 %v1654, %v1686
      %v1703 = vadd.f32 %v1655, %v1687
      %v1704 = vadd.f32 %v1656, %v1688
      %v1705 = vadd.f32 %v1657, %v1689
      %v1706 = vadd.f32 %v1658, %v1690
      %v1707 = vadd.f32 %v1659, %v1691
      %v1708 = vadd.f32 %v1660, %v1692
      %v1709 = vadd.f32 %v1661, %v1693
      %v1710 = vadd.f32 %v1662, %v1694
      %v1711 = vadd.f32 %v1663, %v1695
      %v1712 = vadd.f32 %v1664, %v1696
      %v1713 = vadd.f32 %v1665, %v1697
      %v1714 = vadd.f32 %v1666, %v1698
      %v1715 = vadd.f32 %v1667, %v1699
      %v1716 = vadd.f32 %v1668, %v1700
      %v1717 = vadd.f32 %v1669, %v1701
      %v1718 = vpack.c.bf16 %v1703, %v1702
      %v1719 = vpack.c.bf16 %v1705, %v1704
      %v1720 = vpack.c.bf16 %v1707, %v1706
      %v1721 = vpack.c.bf16 %v1709, %v1708
      %v1722 = vpack.c.bf16 %v1711, %v1710
      %v1723 = vpack.c.bf16 %v1713, %v1712
      %v1724 = vpack.c.bf16 %v1715, %v1714
      %v1725 = vpack.c.bf16 %v1717, %v1716
      %v1734 = vunpack.c.l.b16 %v1718
      %v1735 = vunpack.c.h.b16 %v1718
      %v1736 = vunpack.c.l.b16 %v1719
      %v1737 = vunpack.c.h.b16 %v1719
      %v1738 = vunpack.c.l.b16 %v1720
      %v1739 = vunpack.c.h.b16 %v1720
      %v1740 = vunpack.c.l.b16 %v1721
      %v1741 = vunpack.c.h.b16 %v1721
      %v1742 = vunpack.c.l.b16 %v1722
      %v1743 = vunpack.c.h.b16 %v1722
      %v1744 = vunpack.c.l.b16 %v1723
      %v1745 = vunpack.c.h.b16 %v1723
      %v1746 = vunpack.c.l.b16 %v1724
      %v1747 = vunpack.c.h.b16 %v1724
      %v1748 = vunpack.c.l.b16 %v1725
      %v1749 = vunpack.c.h.b16 %v1725
      %v1750 = vpack.c.b16 %v1734, %v1734
      %v1751 = vpack.c.b16 %v1735, %v1735
      %v1752 = vpack.c.b16 %v1736, %v1736
      %v1753 = vpack.c.b16 %v1737, %v1737
      %v1754 = vpack.c.b16 %v1738, %v1738
      %v1755 = vpack.c.b16 %v1739, %v1739
      %v1756 = vpack.c.b16 %v1740, %v1740
      %v1757 = vpack.c.b16 %v1741, %v1741
      %v1758 = vpack.c.b16 %v1742, %v1742
      %v1759 = vpack.c.b16 %v1743, %v1743
      %v1760 = vpack.c.b16 %v1744, %v1744
      %v1761 = vpack.c.b16 %v1745, %v1745
      %v1762 = vpack.c.b16 %v1746, %v1746
      %v1763 = vpack.c.b16 %v1747, %v1747
      %v1764 = vpack.c.b16 %v1748, %v1748
      %v1765 = vpack.c.b16 %v1749, %v1749
      %s1782 = smul.addr %s268, 4
      %s1783 = scalar_lea.vmem %s224, %s1782
      %1784 = vst [vmem:[%s1783] sm:$0xf] %v1750
      %1785 = vst [vmem:[%s1783 + $0x4] sm:$0xf] %v1751
      %1786 = vst [vmem:[%s1783 + $0x8] sm:$0xf] %v1752
      %1787 = vst [vmem:[%s1783 + $0xc] sm:$0xf] %v1753
      %1788 = vst [vmem:[%s1783 + $0x10] sm:$0xf] %v1754
      %1789 = vst [vmem:[%s1783 + $0x14] sm:$0xf] %v1755
      %1790 = vst [vmem:[%s1783 + $0x18] sm:$0xf] %v1756
      %1791 = vst [vmem:[%s1783 + $0x1c] sm:$0xf] %v1757
      %1792 = vst [vmem:[%s1783 + $0x20] sm:$0xf] %v1758
      %1793 = vst [vmem:[%s1783 + $0x24] sm:$0xf] %v1759
      %1794 = vst [vmem:[%s1783 + $0x28] sm:$0xf] %v1760
      %1795 = vst [vmem:[%s1783 + $0x2c] sm:$0xf] %v1761
      %1796 = vst [vmem:[%s1783 + $0x30] sm:$0xf] %v1762
      %1797 = vst [vmem:[%s1783 + $0x34] sm:$0xf] %v1763
      %1798 = vst [vmem:[%s1783 + $0x38] sm:$0xf] %v1764
      %1799 = vst [vmem:[%s1783 + $0x3c] sm:$0xf] %v1765
      %s1800 = smul.u32 8, 24
      %s1801 = scalar_lea.vmem [#allocation2], %s1800
      %v1802 = vld [vmem:[%s1801] sm:$0xff]
      %v1803 = vld [vmem:[%s1801 + $0x8] sm:$0xff]
      %v1804 = vld [vmem:[%s1801 + $0x10] sm:$0xff]
      %v1805 = vld [vmem:[%s1801 + $0x18] sm:$0xff]
      %v1806 = vld [vmem:[%s1801 + $0x20] sm:$0xff]
      %v1807 = vld [vmem:[%s1801 + $0x28] sm:$0xff]
      %v1808 = vld [vmem:[%s1801 + $0x30] sm:$0xff]
      %v1809 = vld [vmem:[%s1801 + $0x38] sm:$0xff]
      %v1810 = vld [vmem:[%s1801 + $0x40] sm:$0xff]
      %v1811 = vld [vmem:[%s1801 + $0x48] sm:$0xff]
      %v1812 = vld [vmem:[%s1801 + $0x50] sm:$0xff]
      %v1813 = vld [vmem:[%s1801 + $0x58] sm:$0xff]
      %v1814 = vld [vmem:[%s1801 + $0x60] sm:$0xff]
      %v1815 = vld [vmem:[%s1801 + $0x68] sm:$0xff]
      %v1816 = vld [vmem:[%s1801 + $0x70] sm:$0xff]
      %v1817 = vld [vmem:[%s1801 + $0x78] sm:$0xff]
      %v1818 = vld [vmem:[%s1801 + $0x80] sm:$0xff]
      %v1819 = vld [vmem:[%s1801 + $0x88] sm:$0xff]
      %v1820 = vld [vmem:[%s1801 + $0x90] sm:$0xff]
      %v1821 = vld [vmem:[%s1801 + $0x98] sm:$0xff]
      %v1822 = vld [vmem:[%s1801 + $0xa0] sm:$0xff]
      %v1823 = vld [vmem:[%s1801 + $0xa8] sm:$0xff]
      %v1824 = vld [vmem:[%s1801 + $0xb0] sm:$0xff]
      %v1825 = vld [vmem:[%s1801 + $0xb8] sm:$0xff]
      %v1826 = vld [vmem:[%s1801 + $0xc0] sm:$0xff]
      %v1827 = vld [vmem:[%s1801 + $0xc8] sm:$0xff]
      %v1828 = vld [vmem:[%s1801 + $0xd0] sm:$0xff]
      %v1829 = vld [vmem:[%s1801 + $0xd8] sm:$0xff]
      %v1830 = vld [vmem:[%s1801 + $0xe0] sm:$0xff]
      %v1831 = vld [vmem:[%s1801 + $0xe8] sm:$0xff]
      %v1832 = vrot.slane %v1802, 7
      %v1833 = vrot.slane %v1805, 7
      %v1834 = vrot.slane %v1808, 7
      %v1835 = vrot.slane %v1811, 7
      %v1836 = vrot.slane %v1814, 7
      %v1837 = vrot.slane %v1817, 7
      %v1838 = vrot.slane %v1820, 7
      %v1839 = vrot.slane %v1823, 7
      %v1840 = vrot.slane %v1826, 7
      %v1841 = vrot.slane %v1829, 7
      %v1842 = vrot.slane %v1803, 7
      %v1843 = vrot.slane %v1806, 7
      %v1844 = vrot.slane %v1809, 7
      %v1845 = vrot.slane %v1812, 7
      %v1846 = vrot.slane %v1815, 7
      %v1847 = vrot.slane %v1818, 7
      %v1848 = vrot.slane %v1821, 7
      %v1849 = vrot.slane %v1824, 7
      %v1850 = vrot.slane %v1827, 7
      %v1851 = vrot.slane %v1830, 7
      %v1852 = vrot.slane %v1804, 7
      %v1853 = vrot.slane %v1807, 7
      %v1854 = vrot.slane %v1810, 7
      %v1855 = vrot.slane %v1813, 7
      %v1856 = vrot.slane %v1816, 7
      %v1857 = vrot.slane %v1819, 7
      %v1858 = vrot.slane %v1822, 7
      %v1859 = vrot.slane %v1825, 7
      %v1860 = vrot.slane %v1828, 7
      %v1861 = vrot.slane %v1831, 7
      %v1862 = vsel %vm817, %v1832, %v1842
      %v1863 = vsel %vm817, %v1833, %v1843
      %v1864 = vsel %vm817, %v1834, %v1844
      %v1865 = vsel %vm817, %v1835, %v1845
      %v1866 = vsel %vm817, %v1836, %v1846
      %v1867 = vsel %vm817, %v1837, %v1847
      %v1868 = vsel %vm817, %v1838, %v1848
      %v1869 = vsel %vm817, %v1839, %v1849
      %v1870 = vsel %vm817, %v1840, %v1850
      %v1871 = vsel %vm817, %v1841, %v1851
      %v1872 = vsel %vm817, %v1852, %v1832
      %v1873 = vsel %vm817, %v1853, %v1833
      %v1874 = vsel %vm817, %v1854, %v1834
      %v1875 = vsel %vm817, %v1855, %v1835
      %v1876 = vsel %vm817, %v1856, %v1836
      %v1877 = vsel %vm817, %v1857, %v1837
      %v1878 = vsel %vm817, %v1858, %v1838
      %v1879 = vsel %vm817, %v1859, %v1839
      %v1880 = vsel %vm817, %v1860, %v1840
      %v1881 = vsel %vm817, %v1861, %v1841
      %v1882 = vrot.slane %v1802, 1
      %v1883 = vrot.slane %v1805, 1
      %v1884 = vrot.slane %v1808, 1
      %v1885 = vrot.slane %v1811, 1
      %v1886 = vrot.slane %v1814, 1
      %v1887 = vrot.slane %v1817, 1
      %v1888 = vrot.slane %v1820, 1
      %v1889 = vrot.slane %v1823, 1
      %v1890 = vrot.slane %v1826, 1
      %v1891 = vrot.slane %v1829, 1
      %v1892 = vrot.slane %v1803, 1
      %v1893 = vrot.slane %v1806, 1
      %v1894 = vrot.slane %v1809, 1
      %v1895 = vrot.slane %v1812, 1
      %v1896 = vrot.slane %v1815, 1
      %v1897 = vrot.slane %v1818, 1
      %v1898 = vrot.slane %v1821, 1
      %v1899 = vrot.slane %v1824, 1
      %v1900 = vrot.slane %v1827, 1
      %v1901 = vrot.slane %v1830, 1
      %v1902 = vrot.slane %v1804, 1
      %v1903 = vrot.slane %v1807, 1
      %v1904 = vrot.slane %v1810, 1
      %v1905 = vrot.slane %v1813, 1
      %v1906 = vrot.slane %v1816, 1
      %v1907 = vrot.slane %v1819, 1
      %v1908 = vrot.slane %v1822, 1
      %v1909 = vrot.slane %v1825, 1
      %v1910 = vrot.slane %v1828, 1
      %v1911 = vrot.slane %v1831, 1
      %v1912 = vsel %vm868, %v1892, %v1902
      %v1913 = vsel %vm868, %v1893, %v1903
      %v1914 = vsel %vm868, %v1894, %v1904
      %v1915 = vsel %vm868, %v1895, %v1905
      %v1916 = vsel %vm868, %v1896, %v1906
      %v1917 = vsel %vm868, %v1897, %v1907
      %v1918 = vsel %vm868, %v1898, %v1908
      %v1919 = vsel %vm868, %v1899, %v1909
      %v1920 = vsel %vm868, %v1900, %v1910
      %v1921 = vsel %vm868, %v1901, %v1911
      %v1922 = vsel %vm868, %v1882, %v1892
      %v1923 = vsel %vm868, %v1883, %v1893
      %v1924 = vsel %vm868, %v1884, %v1894
      %v1925 = vsel %vm868, %v1885, %v1895
      %v1926 = vsel %vm868, %v1886, %v1896
      %v1927 = vsel %vm868, %v1887, %v1897
      %v1928 = vsel %vm868, %v1888, %v1898
      %v1929 = vsel %vm868, %v1889, %v1899
      %v1930 = vsel %vm868, %v1890, %v1900
      %v1931 = vsel %vm868, %v1891, %v1901
      %v1932 = vpack.c.bf16 %v1862, %v1872
      %v1933 = vpack.c.bf16 %v1863, %v1873
      %v1934 = vpack.c.bf16 %v1864, %v1874
      %v1935 = vpack.c.bf16 %v1865, %v1875
      %v1936 = vpack.c.bf16 %v1866, %v1876
      %v1937 = vpack.c.bf16 %v1867, %v1877
      %v1938 = vpack.c.bf16 %v1868, %v1878
      %v1939 = vpack.c.bf16 %v1869, %v1879
      %v1940 = vpack.c.bf16 %v1803, %v1802
      %v1941 = vpack.c.bf16 %v1806, %v1805
      %v1942 = vpack.c.bf16 %v1809, %v1808
      %v1943 = vpack.c.bf16 %v1812, %v1811
      %v1944 = vpack.c.bf16 %v1815, %v1814
      %v1945 = vpack.c.bf16 %v1818, %v1817
      %v1946 = vpack.c.bf16 %v1821, %v1820
      %v1947 = vpack.c.bf16 %v1824, %v1823
      %v1948 = vpack.c.bf16 %v1912, %v1922
      %v1949 = vpack.c.bf16 %v1913, %v1923
      %v1950 = vpack.c.bf16 %v1914, %v1924
      %v1951 = vpack.c.bf16 %v1915, %v1925
      %v1952 = vpack.c.bf16 %v1916, %v1926
      %v1953 = vpack.c.bf16 %v1917, %v1927
      %v1954 = vpack.c.bf16 %v1918, %v1928
      %v1955 = vpack.c.bf16 %v1919, %v1929
      %1964 = vrot.lane.b32.xlu0 %v1940, 64
      %v1965 = vpop.permute.xlu0 %1964
      %1966 = vrot.lane.b32.xlu0 %v1941, 64
      %v1967 = vpop.permute.xlu0 %1966
      %1968 = vrot.lane.b32.xlu0 %v1942, 64
      %v1969 = vpop.permute.xlu0 %1968
      %1970 = vrot.lane.b32.xlu0 %v1943, 64
      %v1971 = vpop.permute.xlu0 %1970
      %1972 = vrot.lane.b32.xlu0 %v1944, 64
      %v1973 = vpop.permute.xlu0 %1972
      %1974 = vrot.lane.b32.xlu0 %v1945, 64
      %v1975 = vpop.permute.xlu0 %1974
      %1976 = vrot.lane.b32.xlu0 %v1946, 64
      %v1977 = vpop.permute.xlu0 %1976
      %1978 = vrot.lane.b32.xlu0 %v1947, 64
      %v1979 = vpop.permute.xlu0 %1978
      %v1982 = vsel %vm226, %v1932, %v1965
      %v1986 = vsel %vm226, %v1933, %v1967
      %v1990 = vsel %vm226, %v1934, %v1969
      %v1994 = vsel %vm226, %v1935, %v1971
      %v1998 = vsel %vm226, %v1936, %v1973
      %v2002 = vsel %vm226, %v1937, %v1975
      %v2006 = vsel %vm226, %v1938, %v1977
      %v2010 = vsel %vm226, %v1939, %v1979
      %v2012 = vld [vmem:[%s3] sm:$0xf]
      %v2013 = vld [vmem:[%s3 + $0x4] sm:$0xf]
      %v2014 = vld [vmem:[%s3 + $0x8] sm:$0xf]
      %v2015 = vld [vmem:[%s3 + $0xc] sm:$0xf]
      %v2016 = vld [vmem:[%s3 + $0x10] sm:$0xf]
      %v2017 = vld [vmem:[%s3 + $0x14] sm:$0xf]
      %v2018 = vld [vmem:[%s3 + $0x18] sm:$0xf]
      %v2019 = vld [vmem:[%s3 + $0x1c] sm:$0xf]
      %v2020 = vld [vmem:[%s3 + $0x20] sm:$0xf]
      %v2021 = vld [vmem:[%s3 + $0x24] sm:$0xf]
      %v2022 = vld [vmem:[%s3 + $0x28] sm:$0xf]
      %v2023 = vld [vmem:[%s3 + $0x2c] sm:$0xf]
      %v2024 = vld [vmem:[%s3 + $0x30] sm:$0xf]
      %v2025 = vld [vmem:[%s3 + $0x34] sm:$0xf]
      %v2026 = vld [vmem:[%s3 + $0x38] sm:$0xf]
      %v2027 = vld [vmem:[%s3 + $0x3c] sm:$0xf]
      %v2028 = vld [vmem:[%s3 + $0x40] sm:$0xf]
      %v2029 = vld [vmem:[%s3 + $0x44] sm:$0xf]
      %v2030 = vld [vmem:[%s3 + $0x48] sm:$0xf]
      %v2031 = vld [vmem:[%s3 + $0x4c] sm:$0xf]
      %v2032 = vld [vmem:[%s3 + $0x50] sm:$0xf]
      %v2033 = vld [vmem:[%s3 + $0x54] sm:$0xf]
      %v2034 = vld [vmem:[%s3 + $0x58] sm:$0xf]
      %v2035 = vld [vmem:[%s3 + $0x5c] sm:$0xf]
      %v2036 = vpack.c.bf16 %v1870, %v1880
      %v2037 = vpack.c.bf16 %v1827, %v1826
      %v2038 = vpack.c.bf16 %v1920, %v1930
      %2040 = vrot.lane.b32.xlu0 %v2037, 64
      %v2041 = vpop.permute.xlu0 %2040
      %v2044 = vsel %vm226, %v2036, %v2041
      %v2046 = vld [vmem:[%s1003] sm:$0xf]
      %v2047 = vld [vmem:[%s1003 + $0x4] sm:$0xf]
      %v2048 = vld [vmem:[%s1003 + $0x8] sm:$0xf]
      %v2049 = vld [vmem:[%s1003 + $0xc] sm:$0xf]
      %v2050 = vld [vmem:[%s1003 + $0x10] sm:$0xf]
      %v2051 = vld [vmem:[%s1003 + $0x14] sm:$0xf]
      %v2052 = vld [vmem:[%s1003 + $0x18] sm:$0xf]
      %v2053 = vld [vmem:[%s1003 + $0x1c] sm:$0xf]
      %v2054 = vld [vmem:[%s1003 + $0x20] sm:$0xf]
      %v2055 = vld [vmem:[%s1003 + $0x24] sm:$0xf]
      %v2056 = vld [vmem:[%s1003 + $0x28] sm:$0xf]
      %v2057 = vld [vmem:[%s1003 + $0x2c] sm:$0xf]
      %v2058 = vld [vmem:[%s1003 + $0x30] sm:$0xf]
      %v2059 = vld [vmem:[%s1003 + $0x34] sm:$0xf]
      %v2060 = vld [vmem:[%s1003 + $0x38] sm:$0xf]
      %v2061 = vld [vmem:[%s1003 + $0x3c] sm:$0xf]
      %v2062 = vld [vmem:[%s1003 + $0x40] sm:$0xf]
      %v2063 = vld [vmem:[%s1003 + $0x44] sm:$0xf]
      %v2064 = vld [vmem:[%s1003 + $0x48] sm:$0xf]
      %v2065 = vld [vmem:[%s1003 + $0x4c] sm:$0xf]
      %v2066 = vld [vmem:[%s1003 + $0x50] sm:$0xf]
      %v2067 = vld [vmem:[%s1003 + $0x54] sm:$0xf]
      %v2068 = vld [vmem:[%s1003 + $0x58] sm:$0xf]
      %v2069 = vld [vmem:[%s1003 + $0x5c] sm:$0xf]
      %v2094 = vunpack.c.l.b16 %v2046
      %v2095 = vunpack.c.l.b16 %v2047
      %v2096 = vunpack.c.l.b16 %v2048
      %v2097 = vunpack.c.l.b16 %v2049
      %v2098 = vunpack.c.l.b16 %v2050
      %v2099 = vunpack.c.l.b16 %v2051
      %v2100 = vunpack.c.l.b16 %v2052
      %v2101 = vunpack.c.l.b16 %v2053
      %v2102 = vunpack.c.l.b16 %v2054
      %v2103 = vunpack.c.l.b16 %v2055
      %v2104 = vunpack.c.l.b16 %v2056
      %v2105 = vunpack.c.l.b16 %v2057
      %v2106 = vunpack.c.l.b16 %v2058
      %v2107 = vunpack.c.l.b16 %v2059
      %v2108 = vunpack.c.l.b16 %v2060
      %v2109 = vunpack.c.l.b16 %v2061
      %v2110 = vunpack.c.l.b16 %v2062
      %v2111 = vunpack.c.l.b16 %v2063
      %v2112 = vunpack.c.l.b16 %v2064
      %v2113 = vunpack.c.l.b16 %v2065
      %v2114 = vunpack.c.l.b16 %v2066
      %v2115 = vunpack.c.l.b16 %v2067
      %v2116 = vunpack.c.l.b16 %v2068
      %v2117 = vunpack.c.l.b16 %v2069
      %v2118 = vpack.c.b16 %v2095, %v2094
      %v2119 = vpack.c.b16 %v2097, %v2096
      %v2120 = vpack.c.b16 %v2099, %v2098
      %v2121 = vpack.c.b16 %v2101, %v2100
      %v2122 = vpack.c.b16 %v2103, %v2102
      %v2123 = vpack.c.b16 %v2105, %v2104
      %v2124 = vpack.c.b16 %v2107, %v2106
      %v2125 = vpack.c.b16 %v2109, %v2108
      %v2126 = vpack.c.b16 %v2111, %v2110
      %v2127 = vpack.c.b16 %v2113, %v2112
      %v2128 = vpack.c.b16 %v2115, %v2114
      %v2129 = vpack.c.b16 %v2117, %v2116
      %v2143 = vsel %vm226, %v1949, 0
      %v2146 = vsel %vm226, %v1950, 0
      %v2149 = vsel %vm226, %v1951, 0
      %v2152 = vsel %vm226, %v1952, 0
      %v2155 = vsel %vm226, %v1953, 0
      %v2158 = vsel %vm226, %v1954, 0
      %v2161 = vsel %vm226, %v1955, 0
      %v2164 = vsel %vm226, %v2038, 0
      %2166 = vmatprep.subr.bf16.mxu0 0
      %2167 = vmatpush1.bf16.msra.mxu0 %v2125
      %2168 = vmatprep.subr.bf16.mxu0 0
      %2169 = vmatpush1.bf16.msra.mxu0 %v2124
      %2170 = vmatprep.subr.bf16.mxu0 0
      %2171 = vmatpush1.bf16.msra.mxu0 %v2123
      %2172 = vmatprep.subr.bf16.mxu0 0
      %2173 = vmatpush1.bf16.msra.mxu0 %v2122
      %2174 = vmatprep.subr.bf16.mxu0 0
      %2175 = vmatpush1.bf16.msra.mxu0 %v2121
      %2176 = vmatprep.subr.bf16.mxu0 0
      %2177 = vmatpush1.bf16.msra.mxu0 %v2120
      %2178 = vmatprep.subr.bf16.mxu0 0
      %2179 = vmatpush1.bf16.msra.mxu0 %v2119
      %2180 = vmatprep.subr.bf16.mxu0 0
      %2181 = vmatpush1.bf16.msra.mxu0 %v2118
      %2182 = vmatprep.subr.bf16.mxu0 0
      %2183 = vmatpush2.bf16.msra.mxu0 0
      %2184 = vmatprep.subr.bf16.mxu0 0
      %2185 = vmatpush2.bf16.msra.mxu0 0
      %2186 = vmatprep.subr.bf16.mxu0 0
      %2187 = vmatpush2.bf16.msra.mxu0 0
      %2188 = vmatprep.subr.bf16.mxu0 0
      %2189 = vmatpush2.bf16.msra.mxu0 0
      %2190 = vmatprep.subr.bf16.mxu0 0
      %2191 = vmatpush2.bf16.msra.mxu0 %v2129
      %2192 = vmatprep.subr.bf16.mxu0 0
      %2193 = vmatpush2.bf16.msra.mxu0 %v2128
      %2194 = vmatprep.subr.bf16.mxu0 0
      %2195 = vmatpush2.bf16.msra.mxu0 %v2127
      %2196 = vmatprep.subr.bf16.mxu0 0
      %2197 = vmatpush2.bf16.msra.mxu0 %v2126
      %2198 = vmatprep.mubr.bf16.mxu0 %v2143
      %2199 = vmatmul.mubr.bf16.gmra.mxu0 %v1986
      %v2200 = vpop.f32.mrf.mxu0
      %v2201 = vadd.f32 0.0, %v2200
      %v2202 = vpop.f32.mrf.mxu0
      %v2203 = vpop.f32.mrf.mxu0
      %v2204 = vadd.f32 0.0, %v2203
      %v2205 = vpop.f32.mrf.mxu0
      %2206 = vmatprep.mubr.bf16.mxu0 %v2146
      %2207 = vmatmul.mubr.bf16.gmra.mxu0 %v1990
      %v2208 = vpop.f32.mrf.mxu0
      %v2209 = vadd.f32 0.0, %v2208
      %v2210 = vpop.f32.mrf.mxu0
      %v2211 = vpop.f32.mrf.mxu0
      %v2212 = vadd.f32 0.0, %v2211
      %v2213 = vpop.f32.mrf.mxu0
      %2214 = vmatprep.mubr.bf16.mxu0 %v2149
      %2215 = vmatmul.mubr.bf16.gmra.mxu0 %v1994
      %v2216 = vpop.f32.mrf.mxu0
      %v2217 = vadd.f32 0.0, %v2216
      %v2218 = vpop.f32.mrf.mxu0
      %v2219 = vpop.f32.mrf.mxu0
      %v2220 = vadd.f32 0.0, %v2219
      %v2221 = vpop.f32.mrf.mxu0
      %2222 = vmatprep.mubr.bf16.mxu0 %v2152
      %2223 = vmatmul.mubr.bf16.gmra.mxu0 %v1998
      %v2224 = vpop.f32.mrf.mxu0
      %v2225 = vadd.f32 0.0, %v2224
      %v2226 = vpop.f32.mrf.mxu0
      %v2227 = vpop.f32.mrf.mxu0
      %v2228 = vadd.f32 0.0, %v2227
      %v2229 = vpop.f32.mrf.mxu0
      %2230 = vmatprep.mubr.bf16.mxu0 %v2155
      %2231 = vmatmul.mubr.bf16.gmra.mxu0 %v2002
      %v2232 = vpop.f32.mrf.mxu0
      %v2233 = vadd.f32 0.0, %v2232
      %v2234 = vpop.f32.mrf.mxu0
      %v2235 = vpop.f32.mrf.mxu0
      %v2236 = vadd.f32 0.0, %v2235
      %v2237 = vpop.f32.mrf.mxu0
      %2238 = vmatprep.mubr.bf16.mxu0 %v2158
      %2239 = vmatmul.mubr.bf16.gmra.mxu0 %v2006
      %v2240 = vpop.f32.mrf.mxu0
      %v2241 = vadd.f32 0.0, %v2240
      %v2242 = vpop.f32.mrf.mxu0
      %v2243 = vpop.f32.mrf.mxu0
      %v2244 = vadd.f32 0.0, %v2243
      %v2245 = vpop.f32.mrf.mxu0
      %2246 = vmatprep.mubr.bf16.mxu0 %v2161
      %2247 = vmatmul.mubr.bf16.gmra.mxu0 %v2010
      %v2248 = vpop.f32.mrf.mxu0
      %v2249 = vadd.f32 0.0, %v2248
      %v2250 = vpop.f32.mrf.mxu0
      %v2251 = vpop.f32.mrf.mxu0
      %v2252 = vadd.f32 0.0, %v2251
      %v2253 = vpop.f32.mrf.mxu0
      %2254 = vmatprep.mubr.bf16.mxu0 %v2164
      %2255 = vmatmul.mubr.bf16.gmra.mxu0 %v2044
      %v2256 = vpop.f32.mrf.mxu0
      %v2257 = vadd.f32 0.0, %v2256
      %v2258 = vpop.f32.mrf.mxu0
      %v2259 = vpop.f32.mrf.mxu0
      %v2260 = vadd.f32 0.0, %v2259
      %v2261 = vpop.f32.mrf.mxu0
      %2262 = vdwg.mxu0
      %v2287 = vunpack.c.l.b16 %v2012
      %v2288 = vunpack.c.l.b16 %v2013
      %v2289 = vunpack.c.l.b16 %v2014
      %v2290 = vunpack.c.l.b16 %v2015
      %v2291 = vunpack.c.l.b16 %v2016
      %v2292 = vunpack.c.l.b16 %v2017
      %v2293 = vunpack.c.l.b16 %v2018
      %v2294 = vunpack.c.l.b16 %v2019
      %v2295 = vunpack.c.l.b16 %v2020
      %v2296 = vunpack.c.l.b16 %v2021
      %v2297 = vunpack.c.l.b16 %v2022
      %v2298 = vunpack.c.l.b16 %v2023
      %v2299 = vunpack.c.l.b16 %v2024
      %v2300 = vunpack.c.l.b16 %v2025
      %v2301 = vunpack.c.l.b16 %v2026
      %v2302 = vunpack.c.l.b16 %v2027
      %v2303 = vunpack.c.l.b16 %v2028
      %v2304 = vunpack.c.l.b16 %v2029
      %v2305 = vunpack.c.l.b16 %v2030
      %v2306 = vunpack.c.l.b16 %v2031
      %v2307 = vunpack.c.l.b16 %v2032
      %v2308 = vunpack.c.l.b16 %v2033
      %v2309 = vunpack.c.l.b16 %v2034
      %v2310 = vunpack.c.l.b16 %v2035
      %v2311 = vpack.c.b16 %v2288, %v2287
      %v2312 = vpack.c.b16 %v2290, %v2289
      %v2313 = vpack.c.b16 %v2292, %v2291
      %v2314 = vpack.c.b16 %v2294, %v2293
      %v2315 = vpack.c.b16 %v2296, %v2295
      %v2316 = vpack.c.b16 %v2298, %v2297
      %v2317 = vpack.c.b16 %v2300, %v2299
      %v2318 = vpack.c.b16 %v2302, %v2301
      %v2319 = vpack.c.b16 %v2304, %v2303
      %v2320 = vpack.c.b16 %v2306, %v2305
      %v2321 = vpack.c.b16 %v2308, %v2307
      %v2322 = vpack.c.b16 %v2310, %v2309
      %v2336 = vsel %vm226, %v1948, 0
      %2338 = vmatprep.subr.bf16.mxu0 0
      %2339 = vmatpush1.bf16.msra.mxu0 %v2318
      %2340 = vmatprep.subr.bf16.mxu0 0
      %2341 = vmatpush1.bf16.msra.mxu0 %v2317
      %2342 = vmatprep.subr.bf16.mxu0 0
      %2343 = vmatpush1.bf16.msra.mxu0 %v2316
      %2344 = vmatprep.subr.bf16.mxu0 0
      %2345 = vmatpush1.bf16.msra.mxu0 %v2315
      %2346 = vmatprep.subr.bf16.mxu0 0
      %2347 = vmatpush1.bf16.msra.mxu0 %v2314
      %2348 = vmatprep.subr.bf16.mxu0 0
      %2349 = vmatpush1.bf16.msra.mxu0 %v2313
      %2350 = vmatprep.subr.bf16.mxu0 0
      %2351 = vmatpush1.bf16.msra.mxu0 %v2312
      %2352 = vmatprep.subr.bf16.mxu0 0
      %2353 = vmatpush1.bf16.msra.mxu0 %v2311
      %2354 = vmatprep.subr.bf16.mxu0 0
      %2355 = vmatpush2.bf16.msra.mxu0 0
      %2356 = vmatprep.subr.bf16.mxu0 0
      %2357 = vmatpush2.bf16.msra.mxu0 0
      %2358 = vmatprep.subr.bf16.mxu0 0
      %2359 = vmatpush2.bf16.msra.mxu0 0
      %2360 = vmatprep.subr.bf16.mxu0 0
      %2361 = vmatpush2.bf16.msra.mxu0 0
      %2362 = vmatprep.subr.bf16.mxu0 0
      %2363 = vmatpush2.bf16.msra.mxu0 %v2322
      %2364 = vmatprep.subr.bf16.mxu0 0
      %2365 = vmatpush2.bf16.msra.mxu0 %v2321
      %2366 = vmatprep.subr.bf16.mxu0 0
      %2367 = vmatpush2.bf16.msra.mxu0 %v2320
      %2368 = vmatprep.subr.bf16.mxu0 0
      %2369 = vmatpush2.bf16.msra.mxu0 %v2319
      %2370 = vmatprep.mubr.bf16.mxu0 %v2336
      %2371 = vmatmul.mubr.bf16.gmra.mxu0 %v1982
      %v2372 = vpop.f32.mrf.mxu0
      %v2373 = vadd.f32 %v2201, %v2372
      %v2374 = vpop.f32.mrf.mxu0
      %v2375 = vpop.f32.mrf.mxu0
      %v2376 = vadd.f32 %v2204, %v2375
      %v2377 = vpop.f32.mrf.mxu0
      %2378 = vmatprep.mubr.bf16.mxu0 %v2143
      %2379 = vmatmul.mubr.bf16.gmra.mxu0 %v1986
      %v2380 = vpop.f32.mrf.mxu0
      %v2381 = vadd.f32 %v2209, %v2380
      %v2382 = vpop.f32.mrf.mxu0
      %v2383 = vpop.f32.mrf.mxu0
      %v2384 = vadd.f32 %v2212, %v2383
      %v2385 = vpop.f32.mrf.mxu0
      %2386 = vmatprep.mubr.bf16.mxu0 %v2146
      %2387 = vmatmul.mubr.bf16.gmra.mxu0 %v1990
      %v2388 = vpop.f32.mrf.mxu0
      %v2389 = vadd.f32 %v2217, %v2388
      %v2390 = vpop.f32.mrf.mxu0
      %v2391 = vpop.f32.mrf.mxu0
      %v2392 = vadd.f32 %v2220, %v2391
      %v2393 = vpop.f32.mrf.mxu0
      %2394 = vmatprep.mubr.bf16.mxu0 %v2149
      %2395 = vmatmul.mubr.bf16.gmra.mxu0 %v1994
      %v2396 = vpop.f32.mrf.mxu0
      %v2397 = vadd.f32 %v2225, %v2396
      %v2398 = vpop.f32.mrf.mxu0
      %v2399 = vpop.f32.mrf.mxu0
      %v2400 = vadd.f32 %v2228, %v2399
      %v2401 = vpop.f32.mrf.mxu0
      %2402 = vmatprep.mubr.bf16.mxu0 %v2152
      %2403 = vmatmul.mubr.bf16.gmra.mxu0 %v1998
      %v2404 = vpop.f32.mrf.mxu0
      %v2405 = vadd.f32 %v2233, %v2404
      %v2406 = vpop.f32.mrf.mxu0
      %v2407 = vpop.f32.mrf.mxu0
      %v2408 = vadd.f32 %v2236, %v2407
      %v2409 = vpop.f32.mrf.mxu0
      %2410 = vmatprep.mubr.bf16.mxu0 %v2155
      %2411 = vmatmul.mubr.bf16.gmra.mxu0 %v2002
      %v2412 = vpop.f32.mrf.mxu0
      %v2413 = vadd.f32 %v2241, %v2412
      %v2414 = vpop.f32.mrf.mxu0
      %v2415 = vpop.f32.mrf.mxu0
      %v2416 = vadd.f32 %v2244, %v2415
      %v2417 = vpop.f32.mrf.mxu0
      %2418 = vmatprep.mubr.bf16.mxu0 %v2158
      %2419 = vmatmul.mubr.bf16.gmra.mxu0 %v2006
      %v2420 = vpop.f32.mrf.mxu0
      %v2421 = vadd.f32 %v2249, %v2420
      %v2422 = vpop.f32.mrf.mxu0
      %v2423 = vpop.f32.mrf.mxu0
      %v2424 = vadd.f32 %v2252, %v2423
      %v2425 = vpop.f32.mrf.mxu0
      %2426 = vmatprep.mubr.bf16.mxu0 %v2161
      %2427 = vmatmul.mubr.bf16.gmra.mxu0 %v2010
      %v2428 = vpop.f32.mrf.mxu0
      %v2429 = vadd.f32 %v2257, %v2428
      %v2430 = vpop.f32.mrf.mxu0
      %v2431 = vpop.f32.mrf.mxu0
      %v2432 = vadd.f32 %v2260, %v2431
      %v2433 = vpop.f32.mrf.mxu0
      %2434 = vdwg.mxu0
      %v2435 = vpack.c.bf16 %v1871, %v1881
      %v2436 = vpack.c.bf16 %v1830, %v1829
      %v2437 = vpack.c.bf16 %v1921, %v1931
      %2439 = vrot.lane.b32.xlu0 %v2436, 64
      %v2440 = vpop.permute.xlu0 %2439
      %v2443 = vsel %vm226, %v2435, %v2440
      %v2445 = vld [vmem:[%s1403] sm:$0xf]
      %v2446 = vld [vmem:[%s1403 + $0x4] sm:$0xf]
      %v2447 = vld [vmem:[%s1403 + $0x8] sm:$0xf]
      %v2448 = vld [vmem:[%s1403 + $0xc] sm:$0xf]
      %v2449 = vld [vmem:[%s1403 + $0x10] sm:$0xf]
      %v2450 = vld [vmem:[%s1403 + $0x14] sm:$0xf]
      %v2451 = vld [vmem:[%s1403 + $0x18] sm:$0xf]
      %v2452 = vld [vmem:[%s1403 + $0x1c] sm:$0xf]
      %v2453 = vld [vmem:[%s1403 + $0x20] sm:$0xf]
      %v2454 = vld [vmem:[%s1403 + $0x24] sm:$0xf]
      %v2455 = vld [vmem:[%s1403 + $0x28] sm:$0xf]
      %v2456 = vld [vmem:[%s1403 + $0x2c] sm:$0xf]
      %v2457 = vld [vmem:[%s1403 + $0x30] sm:$0xf]
      %v2458 = vld [vmem:[%s1403 + $0x34] sm:$0xf]
      %v2459 = vld [vmem:[%s1403 + $0x38] sm:$0xf]
      %v2460 = vld [vmem:[%s1403 + $0x3c] sm:$0xf]
      %v2461 = vld [vmem:[%s1403 + $0x40] sm:$0xf]
      %v2462 = vld [vmem:[%s1403 + $0x44] sm:$0xf]
      %v2463 = vld [vmem:[%s1403 + $0x48] sm:$0xf]
      %v2464 = vld [vmem:[%s1403 + $0x4c] sm:$0xf]
      %v2465 = vld [vmem:[%s1403 + $0x50] sm:$0xf]
      %v2466 = vld [vmem:[%s1403 + $0x54] sm:$0xf]
      %v2467 = vld [vmem:[%s1403 + $0x58] sm:$0xf]
      %v2468 = vld [vmem:[%s1403 + $0x5c] sm:$0xf]
      %v2493 = vunpack.c.l.b16 %v2445
      %v2494 = vunpack.c.l.b16 %v2446
      %v2495 = vunpack.c.l.b16 %v2447
      %v2496 = vunpack.c.l.b16 %v2448
      %v2497 = vunpack.c.l.b16 %v2449
      %v2498 = vunpack.c.l.b16 %v2450
      %v2499 = vunpack.c.l.b16 %v2451
      %v2500 = vunpack.c.l.b16 %v2452
      %v2501 = vunpack.c.l.b16 %v2453
      %v2502 = vunpack.c.l.b16 %v2454
      %v2503 = vunpack.c.l.b16 %v2455
      %v2504 = vunpack.c.l.b16 %v2456
      %v2505 = vunpack.c.l.b16 %v2457
      %v2506 = vunpack.c.l.b16 %v2458
      %v2507 = vunpack.c.l.b16 %v2459
      %v2508 = vunpack.c.l.b16 %v2460
      %v2509 = vunpack.c.l.b16 %v2461
      %v2510 = vunpack.c.l.b16 %v2462
      %v2511 = vunpack.c.l.b16 %v2463
      %v2512 = vunpack.c.l.b16 %v2464
      %v2513 = vunpack.c.l.b16 %v2465
      %v2514 = vunpack.c.l.b16 %v2466
      %v2515 = vunpack.c.l.b16 %v2467
      %v2516 = vunpack.c.l.b16 %v2468
      %v2517 = vpack.c.b16 %v2494, %v2493
      %v2518 = vpack.c.b16 %v2496, %v2495
      %v2519 = vpack.c.b16 %v2498, %v2497
      %v2520 = vpack.c.b16 %v2500, %v2499
      %v2521 = vpack.c.b16 %v2502, %v2501
      %v2522 = vpack.c.b16 %v2504, %v2503
      %v2523 = vpack.c.b16 %v2506, %v2505
      %v2524 = vpack.c.b16 %v2508, %v2507
      %v2525 = vpack.c.b16 %v2510, %v2509
      %v2526 = vpack.c.b16 %v2512, %v2511
      %v2527 = vpack.c.b16 %v2514, %v2513
      %v2528 = vpack.c.b16 %v2516, %v2515
      %v2542 = vsel %vm226, %v2437, 0
      %2544 = vmatprep.subr.bf16.mxu0 0
      %2545 = vmatpush1.bf16.msra.mxu0 %v2524
      %2546 = vmatprep.subr.bf16.mxu0 0
      %2547 = vmatpush1.bf16.msra.mxu0 %v2523
      %2548 = vmatprep.subr.bf16.mxu0 0
      %2549 = vmatpush1.bf16.msra.mxu0 %v2522
      %2550 = vmatprep.subr.bf16.mxu0 0
      %2551 = vmatpush1.bf16.msra.mxu0 %v2521
      %2552 = vmatprep.subr.bf16.mxu0 0
      %2553 = vmatpush1.bf16.msra.mxu0 %v2520
      %2554 = vmatprep.subr.bf16.mxu0 0
      %2555 = vmatpush1.bf16.msra.mxu0 %v2519
      %2556 = vmatprep.subr.bf16.mxu0 0
      %2557 = vmatpush1.bf16.msra.mxu0 %v2518
      %2558 = vmatprep.subr.bf16.mxu0 0
      %2559 = vmatpush1.bf16.msra.mxu0 %v2517
      %2560 = vmatprep.subr.bf16.mxu0 0
      %2561 = vmatpush2.bf16.msra.mxu0 0
      %2562 = vmatprep.subr.bf16.mxu0 0
      %2563 = vmatpush2.bf16.msra.mxu0 0
      %2564 = vmatprep.subr.bf16.mxu0 0
      %2565 = vmatpush2.bf16.msra.mxu0 0
      %2566 = vmatprep.subr.bf16.mxu0 0
      %2567 = vmatpush2.bf16.msra.mxu0 0
      %2568 = vmatprep.subr.bf16.mxu0 0
      %2569 = vmatpush2.bf16.msra.mxu0 %v2528
      %2570 = vmatprep.subr.bf16.mxu0 0
      %2571 = vmatpush2.bf16.msra.mxu0 %v2527
      %2572 = vmatprep.subr.bf16.mxu0 0
      %2573 = vmatpush2.bf16.msra.mxu0 %v2526
      %2574 = vmatprep.subr.bf16.mxu0 0
      %2575 = vmatpush2.bf16.msra.mxu0 %v2525
      %2576 = vmatprep.mubr.bf16.mxu0 %v2146
      %2577 = vmatmul.mubr.bf16.gmra.mxu0 %v1990
      %v2578 = vpop.f32.mrf.mxu0
      %v2579 = vadd.f32 0.0, %v2578
      %v2580 = vpop.f32.mrf.mxu0
      %v2581 = vpop.f32.mrf.mxu0
      %v2582 = vadd.f32 0.0, %v2581
      %v2583 = vpop.f32.mrf.mxu0
      %2584 = vmatprep.mubr.bf16.mxu0 %v2149
      %2585 = vmatmul.mubr.bf16.gmra.mxu0 %v1994
      %v2586 = vpop.f32.mrf.mxu0
      %v2587 = vadd.f32 0.0, %v2586
      %v2588 = vpop.f32.mrf.mxu0
      %v2589 = vpop.f32.mrf.mxu0
      %v2590 = vadd.f32 0.0, %v2589
      %v2591 = vpop.f32.mrf.mxu0
      %2592 = vmatprep.mubr.bf16.mxu0 %v2152
      %2593 = vmatmul.mubr.bf16.gmra.mxu0 %v1998
      %v2594 = vpop.f32.mrf.mxu0
      %v2595 = vadd.f32 0.0, %v2594
      %v2596 = vpop.f32.mrf.mxu0
      %v2597 = vpop.f32.mrf.mxu0
      %v2598 = vadd.f32 0.0, %v2597
      %v2599 = vpop.f32.mrf.mxu0
      %2600 = vmatprep.mubr.bf16.mxu0 %v2155
      %2601 = vmatmul.mubr.bf16.gmra.mxu0 %v2002
      %v2602 = vpop.f32.mrf.mxu0
      %v2603 = vadd.f32 0.0, %v2602
      %v2604 = vpop.f32.mrf.mxu0
      %v2605 = vpop.f32.mrf.mxu0
      %v2606 = vadd.f32 0.0, %v2605
      %v2607 = vpop.f32.mrf.mxu0
      %2608 = vmatprep.mubr.bf16.mxu0 %v2158
      %2609 = vmatmul.mubr.bf16.gmra.mxu0 %v2006
      %v2610 = vpop.f32.mrf.mxu0
      %v2611 = vadd.f32 0.0, %v2610
      %v2612 = vpop.f32.mrf.mxu0
      %v2613 = vpop.f32.mrf.mxu0
      %v2614 = vadd.f32 0.0, %v2613
      %v2615 = vpop.f32.mrf.mxu0
      %2616 = vmatprep.mubr.bf16.mxu0 %v2161
      %2617 = vmatmul.mubr.bf16.gmra.mxu0 %v2010
      %v2618 = vpop.f32.mrf.mxu0
      %v2619 = vadd.f32 0.0, %v2618
      %v2620 = vpop.f32.mrf.mxu0
      %v2621 = vpop.f32.mrf.mxu0
      %v2622 = vadd.f32 0.0, %v2621
      %v2623 = vpop.f32.mrf.mxu0
      %2624 = vmatprep.mubr.bf16.mxu0 %v2164
      %2625 = vmatmul.mubr.bf16.gmra.mxu0 %v2044
      %v2626 = vpop.f32.mrf.mxu0
      %v2627 = vadd.f32 0.0, %v2626
      %v2628 = vpop.f32.mrf.mxu0
      %v2629 = vpop.f32.mrf.mxu0
      %v2630 = vadd.f32 0.0, %v2629
      %v2631 = vpop.f32.mrf.mxu0
      %2632 = vmatprep.mubr.bf16.mxu0 %v2542
      %2633 = vmatmul.mubr.bf16.gmra.mxu0 %v2443
      %v2634 = vpop.f32.mrf.mxu0
      %v2635 = vadd.f32 0.0, %v2634
      %v2636 = vpop.f32.mrf.mxu0
      %v2637 = vpop.f32.mrf.mxu0
      %v2638 = vadd.f32 0.0, %v2637
      %v2639 = vpop.f32.mrf.mxu0
      %2640 = vdwg.mxu0
      %v2641 = vadd.f32 %v2373, %v2579
      %v2642 = vadd.f32 %v2376, %v2582
      %v2643 = vadd.f32 %v2381, %v2587
      %v2644 = vadd.f32 %v2384, %v2590
      %v2645 = vadd.f32 %v2389, %v2595
      %v2646 = vadd.f32 %v2392, %v2598
      %v2647 = vadd.f32 %v2397, %v2603
      %v2648 = vadd.f32 %v2400, %v2606
      %v2649 = vadd.f32 %v2405, %v2611
      %v2650 = vadd.f32 %v2408, %v2614
      %v2651 = vadd.f32 %v2413, %v2619
      %v2652 = vadd.f32 %v2416, %v2622
      %v2653 = vadd.f32 %v2421, %v2627
      %v2654 = vadd.f32 %v2424, %v2630
      %v2655 = vadd.f32 %v2429, %v2635
      %v2656 = vadd.f32 %v2432, %v2638
      %v2657 = vadd.f32 %v2641, %v1620
      %v2658 = vadd.f32 %v2642, %v1620
      %v2659 = vadd.f32 %v2643, %v1620
      %v2660 = vadd.f32 %v2644, %v1620
      %v2661 = vadd.f32 %v2645, %v1620
      %v2662 = vadd.f32 %v2646, %v1620
      %v2663 = vadd.f32 %v2647, %v1620
      %v2664 = vadd.f32 %v2648, %v1620
      %v2665 = vadd.f32 %v2649, %v1620
      %v2666 = vadd.f32 %v2650, %v1620
      %v2667 = vadd.f32 %v2651, %v1620
      %v2668 = vadd.f32 %v2652, %v1620
      %v2669 = vadd.f32 %v2653, %v1620
      %v2670 = vadd.f32 %v2654, %v1620
      %v2671 = vadd.f32 %v2655, %v1620
      %v2672 = vadd.f32 %v2656, %v1620
      %v2673 = vmul.f32 %v2657, 0.01
      %v2674 = vmul.f32 %v2658, 0.01
      %v2675 = vmul.f32 %v2659, 0.01
      %v2676 = vmul.f32 %v2660, 0.01
      %v2677 = vmul.f32 %v2661, 0.01
      %v2678 = vmul.f32 %v2662, 0.01
      %v2679 = vmul.f32 %v2663, 0.01
      %v2680 = vmul.f32 %v2664, 0.01
      %v2681 = vmul.f32 %v2665, 0.01
      %v2682 = vmul.f32 %v2666, 0.01
      %v2683 = vmul.f32 %v2667, 0.01
      %v2684 = vmul.f32 %v2668, 0.01
      %v2685 = vmul.f32 %v2669, 0.01
      %v2686 = vmul.f32 %v2670, 0.01
      %v2687 = vmul.f32 %v2671, 0.01
      %v2688 = vmul.f32 %v2672, 0.01
      %v2689 = vmax.f32 %v2657, %v2673
      %v2690 = vmax.f32 %v2658, %v2674
      %v2691 = vmax.f32 %v2659, %v2675
      %v2692 = vmax.f32 %v2660, %v2676
      %v2693 = vmax.f32 %v2661, %v2677
      %v2694 = vmax.f32 %v2662, %v2678
      %v2695 = vmax.f32 %v2663, %v2679
      %v2696 = vmax.f32 %v2664, %v2680
      %v2697 = vmax.f32 %v2665, %v2681
      %v2698 = vmax.f32 %v2666, %v2682
      %v2699 = vmax.f32 %v2667, %v2683
      %v2700 = vmax.f32 %v2668, %v2684
      %v2701 = vmax.f32 %v2669, %v2685
      %v2702 = vmax.f32 %v2670, %v2686
      %v2703 = vmax.f32 %v2671, %v2687
      %v2704 = vmax.f32 %v2672, %v2688
      %v2705 = vld [vmem:[%s539] sm:$0xf]
      %v2706 = vld [vmem:[%s539 + $0x4] sm:$0xf]
      %v2707 = vld [vmem:[%s539 + $0x8] sm:$0xf]
      %v2708 = vld [vmem:[%s539 + $0xc] sm:$0xf]
      %v2709 = vld [vmem:[%s539 + $0x10] sm:$0xf]
      %v2710 = vld [vmem:[%s539 + $0x14] sm:$0xf]
      %v2711 = vld [vmem:[%s539 + $0x18] sm:$0xf]
      %v2712 = vld [vmem:[%s539 + $0x1c] sm:$0xf]
      %v2713 = vld [vmem:[%s539 + $0x20] sm:$0xf]
      %v2714 = vld [vmem:[%s539 + $0x24] sm:$0xf]
      %v2715 = vld [vmem:[%s539 + $0x28] sm:$0xf]
      %v2716 = vld [vmem:[%s539 + $0x2c] sm:$0xf]
      %v2717 = vld [vmem:[%s539 + $0x30] sm:$0xf]
      %v2718 = vld [vmem:[%s539 + $0x34] sm:$0xf]
      %v2719 = vld [vmem:[%s539 + $0x38] sm:$0xf]
      %v2720 = vld [vmem:[%s539 + $0x3c] sm:$0xf]
      %v2721 = vunpack.c.l.bf16 %v2705
      %v2722 = vunpack.c.l.bf16 %v2706
      %v2723 = vunpack.c.l.bf16 %v2707
      %v2724 = vunpack.c.l.bf16 %v2708
      %v2725 = vunpack.c.l.bf16 %v2709
      %v2726 = vunpack.c.l.bf16 %v2710
      %v2727 = vunpack.c.l.bf16 %v2711
      %v2728 = vunpack.c.l.bf16 %v2712
      %v2729 = vunpack.c.l.bf16 %v2713
      %v2730 = vunpack.c.l.bf16 %v2714
      %v2731 = vunpack.c.l.bf16 %v2715
      %v2732 = vunpack.c.l.bf16 %v2716
      %v2733 = vunpack.c.l.bf16 %v2717
      %v2734 = vunpack.c.l.bf16 %v2718
      %v2735 = vunpack.c.l.bf16 %v2719
      %v2736 = vunpack.c.l.bf16 %v2720
      %v2737 = vadd.f32 %v2689, %v2721
      %v2738 = vadd.f32 %v2690, %v2722
      %v2739 = vadd.f32 %v2691, %v2723
      %v2740 = vadd.f32 %v2692, %v2724
      %v2741 = vadd.f32 %v2693, %v2725
      %v2742 = vadd.f32 %v2694, %v2726
      %v2743 = vadd.f32 %v2695, %v2727
      %v2744 = vadd.f32 %v2696, %v2728
      %v2745 = vadd.f32 %v2697, %v2729
      %v2746 = vadd.f32 %v2698, %v2730
      %v2747 = vadd.f32 %v2699, %v2731
      %v2748 = vadd.f32 %v2700, %v2732
      %v2749 = vadd.f32 %v2701, %v2733
      %v2750 = vadd.f32 %v2702, %v2734
      %v2751 = vadd.f32 %v2703, %v2735
      %v2752 = vadd.f32 %v2704, %v2736
      %v2753 = vpack.c.bf16 %v2738, %v2737
      %v2754 = vpack.c.bf16 %v2740, %v2739
      %v2755 = vpack.c.bf16 %v2742, %v2741
      %v2756 = vpack.c.bf16 %v2744, %v2743
      %v2757 = vpack.c.bf16 %v2746, %v2745
      %v2758 = vpack.c.bf16 %v2748, %v2747
      %v2759 = vpack.c.bf16 %v2750, %v2749
      %v2760 = vpack.c.bf16 %v2752, %v2751
      %v2769 = vunpack.c.l.b16 %v2753
      %v2770 = vunpack.c.h.b16 %v2753
      %v2771 = vunpack.c.l.b16 %v2754
      %v2772 = vunpack.c.h.b16 %v2754
      %v2773 = vunpack.c.l.b16 %v2755
      %v2774 = vunpack.c.h.b16 %v2755
      %v2775 = vunpack.c.l.b16 %v2756
      %v2776 = vunpack.c.h.b16 %v2756
      %v2777 = vunpack.c.l.b16 %v2757
      %v2778 = vunpack.c.h.b16 %v2757
      %v2779 = vunpack.c.l.b16 %v2758
      %v2780 = vunpack.c.h.b16 %v2758
      %v2781 = vunpack.c.l.b16 %v2759
      %v2782 = vunpack.c.h.b16 %v2759
      %v2783 = vunpack.c.l.b16 %v2760
      %v2784 = vunpack.c.h.b16 %v2760
      %v2785 = vpack.c.b16 %v2769, %v2769
      %v2786 = vpack.c.b16 %v2770, %v2770
      %v2787 = vpack.c.b16 %v2771, %v2771
      %v2788 = vpack.c.b16 %v2772, %v2772
      %v2789 = vpack.c.b16 %v2773, %v2773
      %v2790 = vpack.c.b16 %v2774, %v2774
      %v2791 = vpack.c.b16 %v2775, %v2775
      %v2792 = vpack.c.b16 %v2776, %v2776
      %v2793 = vpack.c.b16 %v2777, %v2777
      %v2794 = vpack.c.b16 %v2778, %v2778
      %v2795 = vpack.c.b16 %v2779, %v2779
      %v2796 = vpack.c.b16 %v2780, %v2780
      %v2797 = vpack.c.b16 %v2781, %v2781
      %v2798 = vpack.c.b16 %v2782, %v2782
      %v2799 = vpack.c.b16 %v2783, %v2783
      %v2800 = vpack.c.b16 %v2784, %v2784
      %s2817 = smul.addr %s537, 4
      %s2818 = scalar_lea.vmem %s224, %s2817
      %2819 = vst [vmem:[%s2818] sm:$0xf] %v2785
      %2820 = vst [vmem:[%s2818 + $0x4] sm:$0xf] %v2786
      %2821 = vst [vmem:[%s2818 + $0x8] sm:$0xf] %v2787
      %2822 = vst [vmem:[%s2818 + $0xc] sm:$0xf] %v2788
      %2823 = vst [vmem:[%s2818 + $0x10] sm:$0xf] %v2789
      %2824 = vst [vmem:[%s2818 + $0x14] sm:$0xf] %v2790
      %2825 = vst [vmem:[%s2818 + $0x18] sm:$0xf] %v2791
      %2826 = vst [vmem:[%s2818 + $0x1c] sm:$0xf] %v2792
      %2827 = vst [vmem:[%s2818 + $0x20] sm:$0xf] %v2793
      %2828 = vst [vmem:[%s2818 + $0x24] sm:$0xf] %v2794
      %2829 = vst [vmem:[%s2818 + $0x28] sm:$0xf] %v2795
      %2830 = vst [vmem:[%s2818 + $0x2c] sm:$0xf] %v2796
      %2831 = vst [vmem:[%s2818 + $0x30] sm:$0xf] %v2797
      %2832 = vst [vmem:[%s2818 + $0x34] sm:$0xf] %v2798
      %2833 = vst [vmem:[%s2818 + $0x38] sm:$0xf] %v2799
      %2834 = vst [vmem:[%s2818 + $0x3c] sm:$0xf] %v2800
      %p2835 = scmp.lt.s32.totalorder %s16, 1
      %s2836 = scalar_select %p2835, %s16, 1
      %s2837 = smul.addr %s2836, 32
      %s2838 = smul.addr %s2837, 4
      %s2839 = scalar_lea.vmem %s5, %s2838
      // Predicated region
      $region41: #{resblock_forward.1} parent=39 // pred_check
        %p2840 = pneg %p144
      $region42: #{resblock_forward.1} parent=39 // pred_check_branch
        %2842 = sbr.rel (%p2840) target = $region44
      $region43: #{resblock_forward.1} parent=39 // pred_region
        _
      $region44: #{resblock_forward.1} parent=39 // pred_fallthru
        _
    $region40: #{resblock_forward.1} parent=5 // pred_fallthru
      _
    %p2843 = scmp.le.s32.totalorder 2, %s11
    // Predicated region
    $region45: #{resblock_forward.1} parent=5 // pred_check
      %p2844 = pneg %p2843
    $region46: #{resblock_forward.1} parent=5 // pred_check_branch
      %2846 = sbr.rel (%p2844) target = $region48
    $region47: #{resblock_forward.1} parent=5 // pred_region
      %s2847 = ssub.s32 %s11, 2
      // Predicated region
      $region49: #{resblock_forward.1} parent=47 // pred_check
        %p2848 = pneg %p150
      $region50: #{resblock_forward.1} parent=47 // pred_check_branch
        %2850 = sbr.rel (%p2848) target = $region52
      $region51: #{resblock_forward.1} parent=47 // pred_region
        %p2851 = scmp.lt.s32.totalorder %s17, 1
        %s2852 = scalar_select %p2851, %s17, 1
        %s2853 = smul.addr %s2852, 32
        %s2854 = smul.addr %s2853, 4
        %s2855 = scalar_lea.vmem %s5, %s2854
      $region52: #{resblock_forward.1} parent=47 // pred_fallthru
        _
    $region48: #{resblock_forward.1} parent=5 // pred_fallthru
      _
  $region6: #{resblock_forward.1} parent=0 // loop_footer
    %s15 = sadd.s32 1, %s11
  $region7: #{resblock_forward.1} parent=0 // loop_footer_branch
    %10 = sbr.rel target = $region3
  $region8: #{resblock_forward.1} parent=0 // loop_exit
    _

</llo_original>
